<compile_context>
chip_gen: v6e
topology: v6e:2x2x1
jax: 0.10.0
libtpu: 0.0.40
codegen_flags: <defaults>
</compile_context>

<pallas_src>
import functools

import jax
import jax.numpy as jnp
from jax.experimental import pallas as pl
from jax.experimental.pallas import tpu as pltpu

_MIB = 1024 * 1024


def _round_up(x, m):
    return (x + m - 1) // m * m


def _divisors_desc(n):
    return [d for d in range(n, 0, -1) if n % d == 0]


def _reorg_kernel(m_ref, x_ref, o_ref, *, ss):
    """One grid step: (batch b, channel group g, output-row block t).

    m_ref: (ss, Kb, Lb) int8  one-hot selection matrices (resident in VMEM)
    x_ref: (Cb, Kb)           input slab; Kb = Pb*s*W contiguous spatial elems
    o_ref: (ss, Cb, Lb)       output slab; Lb = Pb*Q flattened (p, q)
    """
    # Exact upcast: f32 holds f32/bf16/f16 and <=16-bit ints exactly.
    xv = x_ref[...].astype(jnp.float32)                  # (Cb, Kb)
    for a in range(ss):                                  # s*s is tiny: unroll
        m = m_ref[a].astype(jnp.float32)                 # VPU cast of 0/1 int8
        # One-hot gather on the MXU; HIGHEST => operands are not truncated to
        # bf16, so each output is exactly 1.0 * x[k_sel] + zeros.
        y = jnp.dot(xv, m,
                    precision=jax.lax.Precision.HIGHEST,
                    preferred_element_type=jnp.float32)  # (Cb, Lb)
        o_ref[a] = y.astype(o_ref.dtype)                 # lane-dense store


def _vmem_bytes(Cb, Pb, *, Q, W, s, x_isz):
    """Rough per-step VMEM footprint (with (8,128)/int8 tile padding)."""
    ss = s * s
    Kb, Lb = Pb * s * W, Pb * Q
    pad_c = _round_up(Cb, 8)
    pad_k = _round_up(Kb, 128)
    pad_l = _round_up(Lb, 128)
    in_b = 2 * pad_c * pad_k * x_isz               # double-buffered input
    out_b = 2 * ss * pad_c * pad_l * x_isz         # double-buffered output
    m_b = 2 * ss * _round_up(Kb, 32) * pad_l       # int8 selection matrices
    tmp_b = _round_up(Kb, 8) * pad_l * 4           # f32 cast of one M slice
    tmp_b += pad_c * (pad_k + pad_l) * 4           # f32 input cast + dot result
    return in_b + out_b + m_b + tmp_b


def _choose_blocks(C, P, Q, W, s, x_isz, budget_bytes):
    """Pick (Cb, Pb): channel-group and output-row block sizes.

    Blocks must respect the (8, 128) tiling rule on the last two dims of every
    BlockSpec: a channel split needs Cb % sublane_tile == 0, a row split needs
    both Kb = Pb*s*W and Lb = Pb*Q to be multiples of 128 (full-extent blocks
    are always legal).  Prefer no row split (smallest selection matrices and
    fewest grid steps), then the largest channel group that fits the budget.
    """
    sub = 8 * max(1, 4 // x_isz)          # 8 (f32), 16 (bf16/f16), 32 (int8)
    pb_ok = [d for d in _divisors_desc(P)
             if d == P or ((d * Q) % 128 == 0 and (d * s * W) % 128 == 0)]
    cb_ok = [d for d in _divisors_desc(C) if d == C or d % sub == 0]

    for Pb in pb_ok:
        for Cb in cb_ok:
            if _vmem_bytes(Cb, Pb, Q=Q, W=W, s=s, x_isz=x_isz) <= budget_bytes:
                return Cb, Pb
    return cb_ok[-1], pb_ok[-1]           # smallest footprint; caller re-checks


def _vmem_budget_bytes():
    """~1/5 of physical VMEM (64 MiB on v7x, 128 MiB on v5e/v6e), best effort."""
    try:
        cap = int(pltpu.get_tpu_info().vmem_capacity_bytes)
    except Exception:
        cap = 64 * _MIB                   # conservative default (v7x-sized)
    return max(8 * _MIB, min(cap // 5, 24 * _MIB))


def reorg(x, stride=2):
    """Pallas TPU implementation of the PyTorch Reorg module (NCHW)."""
    assert x.ndim == 4
    B, C, H, W = x.shape
    s = int(stride)
    assert H % s == 0, f"stride {s} does not divide height {H}"
    assert W % s == 0, f"stride {s} does not divide width {W}"
    P, Q = H // s, W // s
    ss = s * s
    x_isz = jnp.dtype(x.dtype).itemsize

    if jnp.issubdtype(x.dtype, jnp.floating):
        if x_isz > 4:
            raise NotImplementedError("reorg: 64-bit floats are not supported on TPU")
    elif jnp.issubdtype(x.dtype, jnp.integer) and x_isz <= 2:
        pass                               # <=16-bit ints are exact through f32
    else:
        # TODO(synk): int32/uint32/bool inputs need a non-matmul permutation path.
        raise NotImplementedError(f"reorg: unsupported dtype {x.dtype}")

    budget = _vmem_budget_bytes()
    Cb, Pb = _choose_blocks(C, P, Q, W, s, x_isz, budget)

    # v7x has two TensorCores: make sure there are >= 2 independent grid steps.
    if B * (C // Cb) * (P // Pb) < 2:
        sub = 8 * max(1, 4 // x_isz)
        cb_smaller = [d for d in _divisors_desc(C) if d < Cb and d % sub == 0]
        pb_smaller = [d for d in _divisors_desc(P)
                      if d < Pb and (d * Q) % 128 == 0 and (d * s * W) % 128 == 0]
        if cb_smaller:
            Cb = cb_smaller[0]
        elif pb_smaller:
            Pb = pb_smaller[0]
        # else: shape too small/misaligned to split legally; one core idles.

    G, T = C // Cb, P // Pb
    Kb, Lb = Pb * s * W, Pb * Q

    est = _vmem_bytes(Cb, Pb, Q=Q, W=W, s=s, x_isz=x_isz)
    if est > 48 * _MIB:
        raise ValueError(
            f"reorg: feature map too large for VMEM (~{est >> 20} MiB per step "
            f"even at the smallest legal block split); tile H/W before calling.")
    vmem_limit = int(min(max(32 * _MIB, est * 3 // 2 + 2 * _MIB), 64 * _MIB))

    # One-hot selection matrices (built once per call, int8 0/1 entries):
    #   M[a, k, l] = 1  iff  k == ((l//Q)*s + a//s)*W + (l%Q)*s + a%s
    l_idx = jnp.arange(Lb, dtype=jnp.int32)
    a_idx = jnp.arange(ss, dtype=jnp.int32)
    key = ((l_idx[None, :] // Q) * s + a_idx[:, None] // s) * W \
        + (l_idx[None, :] % Q) * s + a_idx[:, None] % s            # (ss, Lb)
    k_idx = jnp.arange(Kb, dtype=jnp.int32)
    m = (k_idx[None, :, None] == key[:, None, :]).astype(jnp.int8)  # (ss, Kb, Lb)

    xf = x.reshape(B, C, H * W)            # free: contiguous view of NCHW

    kernel = functools.partial(_reorg_kernel, ss=ss)
    out_flat = pl.pallas_call(
        kernel,
        out_shape=jax.ShapeDtypeStruct((B, ss, C, P * Q), x.dtype),
        grid=(B, G, T),
        in_specs=[
            # Constant block index: DMA'd once, stays resident in VMEM.
            pl.BlockSpec((ss, Kb, Lb), lambda b, g, t: (0, 0, 0)),
            # Per-step input slab: batch b, channel group g, output-row block t.
            pl.BlockSpec((None, Cb, Kb), lambda b, g, t: (b, g, t)),
        ],
        # Output kept at the default double-buffering; bump to pl.Buffered(3)
        # only if a profile ever shows exposed output DMA.
        out_specs=pl.BlockSpec((None, ss, Cb, Lb), lambda b, g, t: (b, 0, g, t)),
        compiler_params=pltpu.CompilerParams(
            # Every step touches disjoint input/output blocks, so all axes are
            # safe to shard across v7x's two TensorCores.
            dimension_semantics=("parallel", "parallel", "parallel"),
            vmem_limit_bytes=vmem_limit,
        ),
    )(m, xf)

    # (B, s*s, C, P*Q) and (B, C*s*s, P, Q) are the same contiguous bytes
    # (output channel index = (i*s + j)*C + c), so this reshape is free.
    return out_flat.reshape(B, C * ss, P, Q)


def reorg_reference(x, stride=2):
    """Pure-JAX reference matching the PyTorch forward exactly."""
    B, C, H, W = x.shape
    s = stride
    y = x.reshape(B, C, H // s, s, W // s, s)          # (b, c, p, i, q, j)
    y = jnp.transpose(y, (0, 3, 5, 1, 2, 4))           # (b, i, j, c, p, q)
    return y.reshape(B, C * s * s, H // s, W // s)


if __name__ == "__main__":
    key = jax.random.PRNGKey(0)
    k0, k1 = jax.random.split(key)

    B, C, H, W = 2, 4, 16, 16
    x = jax.random.normal(k0, (B, C, H, W), dtype=jnp.float32)

    ref = reorg_reference(x, stride=2)
    out = jax.block_until_ready(reorg(x, stride=2))
    assert out.shape == (B, C * 4, H // 2, W // 2), out.shape
    assert out.dtype == x.dtype
    assert bool(jnp.array_equal(out, ref)), "reorg mismatch vs reference (f32)"

    # Exercise the channel-group grid axis and the v7x >=2-step split
    # (B * G * T would otherwise collapse to 1 for this shape).
    x2 = jax.random.normal(k1, (1, 16, 16, 16), dtype=jnp.float32)
    out2 = jax.block_until_ready(reorg(x2, stride=2))
    assert bool(jnp.array_equal(out2, reorg_reference(x2, 2))), \
        "reorg mismatch vs reference (C=16, split grid)"

    # bf16 goes through the same f32 one-hot path and stays bit-exact.
    xb = x.astype(jnp.bfloat16)
    outb = jax.block_until_ready(reorg(xb, stride=2))
    assert outb.dtype == jnp.bfloat16
    assert bool(jnp.array_equal(outb, reorg_reference(xb, 2))), \
        "reorg mismatch vs reference (bf16)"

    print("KERNEL_OK")
</pallas_src>

<mosaic_0001>
module attributes {stable_mosaic.version = 11 : i64} {
  func.func @_reorg_kernel(%arg0: i32, %arg1: i32, %arg2: i32, %arg3: memref<4x256x64xi8, #tpu.memory_space<vmem>>, %arg4: memref<1x4x256xf32, #tpu.memory_space<vmem>>, %arg5: memref<1x4x4x64xf32, #tpu.memory_space<vmem>>) attributes {dimension_semantics = [#tpu.dimension_semantics<parallel>, #tpu.dimension_semantics<parallel>, #tpu.dimension_semantics<parallel>], iteration_bounds = array<i64: 2, 1, 1>, scalar_prefetch = 0 : i64, scratch_operands = 0 : i64, tpu.core_type = #tpu.core_type<tc>, window_params = [{pipeline_mode = #tpu.pipeline_mode<synchronous>, transform_indices = @transform_0, window_bounds = array<i64: 4, 256, 64>}, {transform_indices = @transform_1, window_bounds = array<i64: 1, 4, 256>}, {transform_indices = @transform_2, window_bounds = array<i64: 1, 4, 4, 64>}]} {
    %c0 = arith.constant 0 : index
    %c0_0 = arith.constant 0 : index
    %c0_1 = arith.constant 0 : index
    %0 = vector.load %arg4[%c0, %c0_0, %c0_1] : memref<1x4x256xf32, #tpu.memory_space<vmem>>, vector<1x4x256xf32>
    %1 = vector.shape_cast %0 : vector<1x4x256xf32> to vector<4x256xf32>
    %c0_2 = arith.constant 0 : index
    %c0_3 = arith.constant 0 : index
    %c0_4 = arith.constant 0 : index
    %2 = vector.load %arg3[%c0_2, %c0_3, %c0_4] : memref<4x256x64xi8, #tpu.memory_space<vmem>>, vector<1x256x64xi8>
    %3 = vector.shape_cast %2 : vector<1x256x64xi8> to vector<256x64xi8>
    %4 = arith.sitofp %3 : vector<256x64xi8> to vector<256x64xf32>
    %cst = arith.constant dense<0.000000e+00> : vector<4x64xf32>
    %5 = tpu.matmul %1, %4, %cst {dimension_numbers = #tpu.dot_dimension_numbers<[1], [0], [0], [1], [0, 0, 1, 1], [], []>, precision = #tpu.contract_precision<fp32>} : vector<4x256xf32>, vector<256x64xf32>, vector<4x64xf32> -> vector<4x64xf32>
    %c0_5 = arith.constant 0 : index
    %c0_6 = arith.constant 0 : index
    %c0_7 = arith.constant 0 : index
    %c0_8 = arith.constant 0 : index
    %6 = vector.load %arg5[%c0_5, %c0_6, %c0_7, %c0_8] : memref<1x4x4x64xf32, #tpu.memory_space<vmem>>, vector<1x1x4x64xf32>
    %7 = vector.shape_cast %6 : vector<1x1x4x64xf32> to vector<4x64xf32>
    %8 = vector.shape_cast %5 : vector<4x64xf32> to vector<1x1x4x64xf32>
    tpu.vector_store %arg5[%c0_5, %c0_6, %c0_7, %c0_8], %8 {strides = array<i32>} : memref<1x4x4x64xf32, #tpu.memory_space<vmem>>, vector<1x1x4x64xf32>,
    %c1 = arith.constant 1 : index
    %c0_9 = arith.constant 0 : index
    %c0_10 = arith.constant 0 : index
    %9 = vector.load %arg3[%c1, %c0_9, %c0_10] : memref<4x256x64xi8, #tpu.memory_space<vmem>>, vector<1x256x64xi8>
    %10 = vector.shape_cast %9 : vector<1x256x64xi8> to vector<256x64xi8>
    %11 = arith.sitofp %10 : vector<256x64xi8> to vector<256x64xf32>
    %cst_11 = arith.constant dense<0.000000e+00> : vector<4x64xf32>
    %12 = tpu.matmul %1, %11, %cst_11 {dimension_numbers = #tpu.dot_dimension_numbers<[1], [0], [0], [1], [0, 0, 1, 1], [], []>, precision = #tpu.contract_precision<fp32>} : vector<4x256xf32>, vector<256x64xf32>, vector<4x64xf32> -> vector<4x64xf32>
    %c0_12 = arith.constant 0 : index
    %c1_13 = arith.constant 1 : index
    %c0_14 = arith.constant 0 : index
    %c0_15 = arith.constant 0 : index
    %13 = vector.load %arg5[%c0_12, %c1_13, %c0_14, %c0_15] : memref<1x4x4x64xf32, #tpu.memory_space<vmem>>, vector<1x1x4x64xf32>
    %14 = vector.shape_cast %13 : vector<1x1x4x64xf32> to vector<4x64xf32>
    %15 = vector.shape_cast %12 : vector<4x64xf32> to vector<1x1x4x64xf32>
    tpu.vector_store %arg5[%c0_12, %c1_13, %c0_14, %c0_15], %15 {strides = array<i32>} : memref<1x4x4x64xf32, #tpu.memory_space<vmem>>, vector<1x1x4x64xf32>,
    %c2 = arith.constant 2 : index
    %c0_16 = arith.constant 0 : index
    %c0_17 = arith.constant 0 : index
    %16 = vector.load %arg3[%c2, %c0_16, %c0_17] : memref<4x256x64xi8, #tpu.memory_space<vmem>>, vector<1x256x64xi8>
    %17 = vector.shape_cast %16 : vector<1x256x64xi8> to vector<256x64xi8>
    %18 = arith.sitofp %17 : vector<256x64xi8> to vector<256x64xf32>
    %cst_18 = arith.constant dense<0.000000e+00> : vector<4x64xf32>
    %19 = tpu.matmul %1, %18, %cst_18 {dimension_numbers = #tpu.dot_dimension_numbers<[1], [0], [0], [1], [0, 0, 1, 1], [], []>, precision = #tpu.contract_precision<fp32>} : vector<4x256xf32>, vector<256x64xf32>, vector<4x64xf32> -> vector<4x64xf32>
    %c0_19 = arith.constant 0 : index
    %c2_20 = arith.constant 2 : index
    %c0_21 = arith.constant 0 : index
    %c0_22 = arith.constant 0 : index
    %20 = vector.load %arg5[%c0_19, %c2_20, %c0_21, %c0_22] : memref<1x4x4x64xf32, #tpu.memory_space<vmem>>, vector<1x1x4x64xf32>
    %21 = vector.shape_cast %20 : vector<1x1x4x64xf32> to vector<4x64xf32>
    %22 = vector.shape_cast %19 : vector<4x64xf32> to vector<1x1x4x64xf32>
    tpu.vector_store %arg5[%c0_19, %c2_20, %c0_21, %c0_22], %22 {strides = array<i32>} : memref<1x4x4x64xf32, #tpu.memory_space<vmem>>, vector<1x1x4x64xf32>,
    %c3 = arith.constant 3 : index
    %c0_23 = arith.constant 0 : index
    %c0_24 = arith.constant 0 : index
    %23 = vector.load %arg3[%c3, %c0_23, %c0_24] : memref<4x256x64xi8, #tpu.memory_space<vmem>>, vector<1x256x64xi8>
    %24 = vector.shape_cast %23 : vector<1x256x64xi8> to vector<256x64xi8>
    %25 = arith.sitofp %24 : vector<256x64xi8> to vector<256x64xf32>
    %cst_25 = arith.constant dense<0.000000e+00> : vector<4x64xf32>
    %26 = tpu.matmul %1, %25, %cst_25 {dimension_numbers = #tpu.dot_dimension_numbers<[1], [0], [0], [1], [0, 0, 1, 1], [], []>, precision = #tpu.contract_precision<fp32>} : vector<4x256xf32>, vector<256x64xf32>, vector<4x64xf32> -> vector<4x64xf32>
    %c0_26 = arith.constant 0 : index
    %c3_27 = arith.constant 3 : index
    %c0_28 = arith.constant 0 : index
    %c0_29 = arith.constant 0 : index
    %27 = vector.load %arg5[%c0_26, %c3_27, %c0_28, %c0_29] : memref<1x4x4x64xf32, #tpu.memory_space<vmem>>, vector<1x1x4x64xf32>
    %28 = vector.shape_cast %27 : vector<1x1x4x64xf32> to vector<4x64xf32>
    %29 = vector.shape_cast %26 : vector<4x64xf32> to vector<1x1x4x64xf32>
    tpu.vector_store %arg5[%c0_26, %c3_27, %c0_28, %c0_29], %29 {strides = array<i32>} : memref<1x4x4x64xf32, #tpu.memory_space<vmem>>, vector<1x1x4x64xf32>,
    return
  }
  func.func @transform_0(%arg0: i32, %arg1: i32, %arg2: i32) -> (i32, i32, i32) {
    %c0_i32 = arith.constant 0 : i32
    %c0_i32_0 = arith.constant 0 : i32
    %c0_i32_1 = arith.constant 0 : i32
    %c0_i32_2 = arith.constant 0 : i32
    return %c0_i32, %c0_i32_0, %c0_i32_1 : i32, i32, i32
  }
  func.func @transform_1(%arg0: i32, %arg1: i32, %arg2: i32) -> (i32, i32, i32) {
    %c0_i32 = arith.constant 0 : i32
    return %arg0, %arg1, %arg2 : i32, i32, i32
  }
  func.func @transform_2(%arg0: i32, %arg1: i32, %arg2: i32) -> (i32, i32, i32, i32) {
    %c0_i32 = arith.constant 0 : i32
    %c0_i32_0 = arith.constant 0 : i32
    return %arg0, %c0_i32, %arg1, %arg2 : i32, i32, i32, i32
  }
}

</mosaic_0001>

<llo_original>
// kernel: tpu_custom_call.1
$region0: #{tpu_custom_call.1}
  #allocation0 [shape = 'u32[]', space=smem, size = 0x4, offset = 0x4, fixed_abs, tag = 'smem constant byte address 0x4 - core index']
  #allocation1 [shape = 'u32[144,128]{1,0:T(1,128)}', space=vmem, size = 0x12000, scoped, tag = 'internal scratch']
  %s0 = inlined_call_operand.vmem [shape: s8[4,256,64], index: 0, kind: input, shape index: {}]
  %s1 = inlined_call_operand.vmem [shape: f32[2,4,256], index: 1, kind: input, shape index: {}]
  %s2 = inlined_call_operand.hbm [shape: f32[2,4,4,64], index: 2, kind: output, shape index: {}]
  %s3 = sld [smem:[#allocation0]]
  $region41: #{tpu_custom_call.1} parent=0
    _
  %s5 = ssub.s32 1, %s3
  %s6 = scalar_select 0, %s5, %s3
  $region1: #{tpu_custom_call.1} parent=0
    #allocation2 [shape = 'u8[16384]{0}', space=vmem, size = 0x4000, scoped, tag = 'output window, operand 0']
    #allocation3 [shape = 's32[2]{0}', space=sflag, size = 0x8, scoped, tag = 'scoped memory for tpu_custom_call.1']
    %7 = vsyncpa [#allocation3], 0
    %s8 = scalar_lea.sflag [#allocation3], 1
    %9 = vsyncpa %s8, 0
    loop: start=0, step=1, limit=4
    $region2: #{tpu_custom_call.1} parent=1 // loop_pre_header
      _
    $region3: #{tpu_custom_call.1} parent=1 // loop_header
      %s11 = sphi 0, %s15
      %p12 = scmp.ge.s32.totalorder %s11, 4
      %s18 = sphi 0, %s37
      %s19 = sphi 0, %s33
      %s20 = sphi 0, %s29
      %s21 = sphi 0, %s18
      %s22 = sphi 0, %s19
      %s23 = sphi 0, %s20
      %s24 = sphi 0, %s21
      %s25 = sphi 0, %s22
      %s26 = sphi 0, %s23
      %s38 = sphi 0, %s38
      %s40 = sphi 0, %s38
      %s41 = sphi 0, %s40
      %s55 = sphi 0, %s41
      %s65 = sphi 0, %s67
      %s68 = sphi 0, %s65
      %s69 = sphi 0, %s68
      %s85 = sphi 0, %s69
      %s95 = sphi 0, %s97
      %s98 = sphi 0, %s95
      %s99 = sphi 0, %s98
      %s115 = sphi 0, %s99
    $region4: #{tpu_custom_call.1} parent=1 // loop_header_branch
      %14 = sbr.rel (%p12) target = $region8
    $region5: #{tpu_custom_call.1} parent=1 // loop_body
      %s16 = ssub.s32 %s11, 1
      %s17 = ssub.s32 %s11, 2
      %s27 = sadd.s32 1, %s20
      %p28 = scmp.ge.s32.totalorder %s27, 1
      %s29 = scalar_select %p28, 0, %s27
      %s30 = sadd.s32 1, %s19
      %s31 = scalar_select %p28, %s30, %s19
      %p32 = scmp.ge.s32.totalorder %s31, 1
      %s33 = scalar_select %p32, 0, %s31
      %s34 = sadd.s32 1, %s18
      %s35 = scalar_select %p32, %s34, %s18
      %p36 = scmp.ge.s32.totalorder %s35, 2
      %s37 = scalar_select %p36, 0, %s35
      %s39 = sadd.s32 %s38, 1
      %p42 = scmp.eq.s32.totalorder %s11, 1
      %p43 = scmp.ne.s32.totalorder %s38, %s40
      %p44 = scmp.eq.s32.totalorder %s11, 0
      %p45 = por %p43, %p44
      %p46 = scmp.ne.s32.totalorder %s38, %s40
      %p47 = scmp.eq.s32.totalorder %s16, 1
      %p48 = por %p46, %p47
      %p49 = scmp.ne.s32.totalorder %s40, %s41
      %p50 = scmp.eq.s32.totalorder %s16, 0
      %p51 = por %p49, %p50
      %p52 = scmp.ne.s32.totalorder %s40, %s41
      %p53 = scmp.eq.s32.totalorder %s17, 1
      %p54 = por %p52, %p53
      %p56 = scmp.ne.s32.totalorder %s41, %s55
      %p57 = scmp.eq.s32.totalorder %s17, 0
      %p58 = por %p56, %p57
      %s59 = ssub.s32 %s18, %s37
      %s60 = ssub.s32 %s19, %s33
      %s61 = sor.u32 %s59, %s60
      %s62 = ssub.s32 %s20, %s29
      %s63 = sor.u32 %s61, %s62
      %p64 = scmp.eq.s32.totalorder %s63, 0
      %s66 = sadd.s32 %s65, 1
      %s67 = scalar_select %p64, %s65, %s66
      %p70 = pneg %p64
      %p71 = scmp.eq.s32.totalorder %s11, 1
      %p72 = por %p70, %p71
      %p73 = scmp.ne.s32.totalorder %s65, %s68
      %p74 = scmp.eq.s32.totalorder %s11, 0
      %p75 = por %p73, %p74
      %p76 = scmp.ne.s32.totalorder %s65, %s68
      %p77 = scmp.eq.s32.totalorder %s16, 1
      %p78 = por %p76, %p77
      %p79 = scmp.ne.s32.totalorder %s68, %s69
      %p80 = scmp.eq.s32.totalorder %s16, 0
      %p81 = por %p79, %p80
      %p82 = scmp.ne.s32.totalorder %s68, %s69
      %p83 = scmp.eq.s32.totalorder %s17, 1
      %p84 = por %p82, %p83
      %p86 = scmp.ne.s32.totalorder %s69, %s85
      %p87 = scmp.eq.s32.totalorder %s17, 0
      %p88 = por %p86, %p87
      %s89 = ssub.s32 %s18, %s37
      %s90 = ssub.s32 %s19, %s33
      %s91 = sor.u32 %s89, %s90
      %s92 = ssub.s32 %s20, %s29
      %s93 = sor.u32 %s91, %s92
      %p94 = scmp.eq.s32.totalorder %s93, 0
      %s96 = sadd.s32 %s95, 1
      %s97 = scalar_select %p94, %s95, %s96
      %p100 = pneg %p94
      %p101 = scmp.eq.s32.totalorder %s11, 1
      %p102 = por %p100, %p101
      %p103 = scmp.ne.s32.totalorder %s95, %s98
      %p104 = scmp.eq.s32.totalorder %s11, 0
      %p105 = por %p103, %p104
      %p106 = scmp.ne.s32.totalorder %s95, %s98
      %p107 = scmp.eq.s32.totalorder %s16, 1
      %p108 = por %p106, %p107
      %p109 = scmp.ne.s32.totalorder %s98, %s99
      %p110 = scmp.eq.s32.totalorder %s16, 0
      %p111 = por %p109, %p110
      %p112 = scmp.ne.s32.totalorder %s98, %s99
      %p113 = scmp.eq.s32.totalorder %s17, 1
      %p114 = por %p112, %p113
      %p116 = scmp.ne.s32.totalorder %s99, %s115
      %p117 = scmp.eq.s32.totalorder %s17, 0
      %p118 = por %p116, %p117
      %p119 = scmp.le.s32.totalorder 1, %s11
      %p120 = scmp.lt.s32.totalorder %s11, 3
      %p121 = pnand %p119, %p120
      %p122 = pneg %p121
      // Predicated region
      $region9: #{tpu_custom_call.1} parent=5 // pred_check
        _
      $region10: #{tpu_custom_call.1} parent=5 // pred_check_branch
        %124 = sbr.rel (%p121) target = $region12
      $region11: #{tpu_custom_call.1} parent=5 // pred_region
        %s125 = ssub.s32 %s11, 1
        // Predicated region
        $region13: #{tpu_custom_call.1} parent=11 // pred_check
          %p126 = pneg %p51
        $region14: #{tpu_custom_call.1} parent=11 // pred_check_branch
          %128 = sbr.rel (%p126) target = $region16
        $region15: #{tpu_custom_call.1} parent=11 // pred_region
          _
        $region16: #{tpu_custom_call.1} parent=11 // pred_fallthru
          _
      $region12: #{tpu_custom_call.1} parent=5 // pred_fallthru
        _
      %p129 = scmp.lt.s32.totalorder %s11, 2
      // Predicated region
      $region17: #{tpu_custom_call.1} parent=5 // pred_check
        %p130 = pneg %p129
      $region18: #{tpu_custom_call.1} parent=5 // pred_check_branch
        %132 = sbr.rel (%p130) target = $region20
      $region19: #{tpu_custom_call.1} parent=5 // pred_region
        // Predicated region
        $region21: #{tpu_custom_call.1} parent=19 // pred_check
          %p133 = pneg %p75
        $region22: #{tpu_custom_call.1} parent=19 // pred_check_branch
          %135 = sbr.rel (%p133) target = $region24
        $region23: #{tpu_custom_call.1} parent=19 // pred_region
          %s136 = smul.u32 2, %s20
          %p137 = scmp.lt.s32.totalorder %s18, 1
          %s138 = scalar_select %p137, %s18, 1
          %p139 = scmp.lt.s32.totalorder %s19, 0
          %s140 = scalar_select %p139, %s19, 0
          %p141 = scmp.lt.s32.totalorder %s136, 1
          %s142 = scalar_select %p141, %s136, 1
          %s143 = smul.addr %s140, 2
          %s144 = sadd.s32 %s142, %s143
          %s145 = smul.addr %s138, 2
          %s146 = sadd.s32 %s144, %s145
          %s147 = smul.addr %s146, 4
          %s148 = scalar_lea.vmem %s1, %s147
          %s149 = smul.u32 2, %s20
        $region24: #{tpu_custom_call.1} parent=19 // pred_fallthru
          _
      $region20: #{tpu_custom_call.1} parent=5 // pred_fallthru
        _
      %p150 = scmp.le.s32.totalorder 1, %s11
      %p151 = scmp.lt.s32.totalorder %s11, 3
      %p152 = pnand %p150, %p151
      %p153 = pneg %p152
      // Predicated region
      $region25: #{tpu_custom_call.1} parent=5 // pred_check
        _
      $region26: #{tpu_custom_call.1} parent=5 // pred_check_branch
        %155 = sbr.rel (%p152) target = $region28
      $region27: #{tpu_custom_call.1} parent=5 // pred_region
        %s156 = ssub.s32 %s11, 1
        %p157 = pneg %p51
        %p158 = pneg %p48
        %s159 = smul.u32 2, %s23
        %p160 = scmp.lt.s32.totalorder %s21, 1
        %s161 = scalar_select %p160, %s21, 1
        %p162 = scmp.lt.s32.totalorder %s22, 0
        %s163 = scalar_select %p162, %s22, 0
        %p164 = scmp.lt.s32.totalorder %s159, 1
        %s165 = scalar_select %p164, %s159, 1
        %s166 = smul.addr %s163, 2
        %s167 = sadd.s32 %s165, %s166
        %s168 = smul.addr %s161, 2
        %s169 = sadd.s32 %s167, %s168
        %s170 = smul.addr %s169, 4
        %s171 = scalar_lea.vmem %s1, %s170
        %p172 = pneg %p81
        %p173 = pneg %p78
        %p174 = pneg %p111
        %p175 = pneg %p108
        %s176 = sand.u32 %s98, 1
        %s177 = scalar_lea.sflag [#allocation3], %s176
        %s178 = sand.u32 %s98, 1
        %s179 = smul.addr %s178, 16
        %s180 = scalar_lea.vmem [#allocation2], %s179
        %s181 = smul.u32 2, %s23
        %p182 = scmp.lt.s32.totalorder %s21, 1
        %s183 = scalar_select %p182, %s21, 1
        %p184 = scmp.lt.s32.totalorder %s22, 0
        %s185 = scalar_select %p184, %s22, 0
        %p186 = scmp.lt.s32.totalorder %s181, 1
        %s187 = scalar_select %p186, %s181, 1
        %s188 = smul.addr %s185, 2
        %s189 = sadd.s32 %s187, %s188
        %s190 = smul.addr %s183, 2
        %s191 = sadd.s32 %s189, %s190
        %s192 = smul.addr %s191, 4
        %s193 = scalar_lea.vmem %s1, %s192
        %s194 = smul.u32 2, %s23
        %v195 = vld [vmem:[%s193] sm:$0xff]
        %v196 = vld [vmem:[%s0] sm:$0xff]
        %v197 = vld [vmem:[%s0 + $0x8] sm:$0xff]
        %v198 = vld [vmem:[%s0 + $0x10] sm:$0xff]
        %v199 = vld [vmem:[%s0 + $0x18] sm:$0xff]
        %v200 = vld [vmem:[%s0 + $0x20] sm:$0xff]
        %v201 = vld [vmem:[%s0 + $0x28] sm:$0xff]
        %v202 = vld [vmem:[%s0 + $0x30] sm:$0xff]
        %v203 = vld [vmem:[%s0 + $0x38] sm:$0xff]
        %v204 = vunpack.c.0.s8 %v196
        %v205 = vunpack.c.1.s8 %v196
        %v206 = vunpack.c.2.s8 %v196
        %v207 = vunpack.c.3.s8 %v196
        %v208 = vunpack.c.0.s8 %v197
        %v209 = vunpack.c.1.s8 %v197
        %v210 = vunpack.c.2.s8 %v197
        %v211 = vunpack.c.3.s8 %v197
        %v212 = vunpack.c.0.s8 %v198
        %v213 = vunpack.c.1.s8 %v198
        %v214 = vunpack.c.2.s8 %v198
        %v215 = vunpack.c.3.s8 %v198
        %v216 = vunpack.c.0.s8 %v199
        %v217 = vunpack.c.1.s8 %v199
        %v218 = vunpack.c.2.s8 %v199
        %v219 = vunpack.c.3.s8 %v199
        %v220 = vunpack.c.0.s8 %v200
        %v221 = vunpack.c.1.s8 %v200
        %v222 = vunpack.c.2.s8 %v200
        %v223 = vunpack.c.3.s8 %v200
        %v224 = vunpack.c.0.s8 %v201
        %v225 = vunpack.c.1.s8 %v201
        %v226 = vunpack.c.2.s8 %v201
        %v227 = vunpack.c.3.s8 %v201
        %v228 = vunpack.c.0.s8 %v202
        %v229 = vunpack.c.1.s8 %v202
        %v230 = vunpack.c.2.s8 %v202
        %v231 = vunpack.c.3.s8 %v202
        %v232 = vunpack.c.0.s8 %v203
        %v233 = vunpack.c.1.s8 %v203
        %v234 = vunpack.c.2.s8 %v203
        %v235 = vunpack.c.3.s8 %v203
        %v236 = vcvt.s32.f32 %v204
        %v237 = vcvt.s32.f32 %v205
        %v238 = vcvt.s32.f32 %v206
        %v239 = vcvt.s32.f32 %v207
        %v240 = vcvt.s32.f32 %v208
        %v241 = vcvt.s32.f32 %v209
        %v242 = vcvt.s32.f32 %v210
        %v243 = vcvt.s32.f32 %v211
        %v244 = vcvt.s32.f32 %v212
        %v245 = vcvt.s32.f32 %v213
        %v246 = vcvt.s32.f32 %v214
        %v247 = vcvt.s32.f32 %v215
        %v248 = vcvt.s32.f32 %v216
        %v249 = vcvt.s32.f32 %v217
        %v250 = vcvt.s32.f32 %v218
        %v251 = vcvt.s32.f32 %v219
        %v252 = vcvt.s32.f32 %v220
        %v253 = vcvt.s32.f32 %v221
        %v254 = vcvt.s32.f32 %v222
        %v255 = vcvt.s32.f32 %v223
        %v256 = vcvt.s32.f32 %v224
        %v257 = vcvt.s32.f32 %v225
        %v258 = vcvt.s32.f32 %v226
        %v259 = vcvt.s32.f32 %v227
        %v260 = vcvt.s32.f32 %v228
        %v261 = vcvt.s32.f32 %v229
        %v262 = vcvt.s32.f32 %v230
        %v263 = vcvt.s32.f32 %v231
        %v264 = vcvt.s32.f32 %v232
        %v265 = vcvt.s32.f32 %v233
        %v266 = vcvt.s32.f32 %v234
        %v267 = vcvt.s32.f32 %v235
        %v269 = vcombine.high %v195, %v195
        %271 = vmatprep.subr.mxu0 0.0
        %v272 = vand.u32 %v251, 4294901760
        %273 = vmatpush1.msra.mxu0 %v272
        %274 = vmatprep.subr.mxu0 0.0
        %v275 = vand.u32 %v250, 4294901760
        %276 = vmatpush1.msra.mxu0 %v275
        %277 = vmatprep.subr.mxu0 0.0
        %v278 = vand.u32 %v249, 4294901760
        %279 = vmatpush1.msra.mxu0 %v278
        %280 = vmatprep.subr.mxu0 0.0
        %v281 = vand.u32 %v248, 4294901760
        %282 = vmatpush1.msra.mxu0 %v281
        %283 = vmatprep.subr.mxu0 0.0
        %v284 = vand.u32 %v247, 4294901760
        %285 = vmatpush1.msra.mxu0 %v284
        %286 = vmatprep.subr.mxu0 0.0
        %v287 = vand.u32 %v246, 4294901760
        %288 = vmatpush1.msra.mxu0 %v287
        %289 = vmatprep.subr.mxu0 0.0
        %v290 = vand.u32 %v245, 4294901760
        %291 = vmatpush1.msra.mxu0 %v290
        %292 = vmatprep.subr.mxu0 0.0
        %v293 = vand.u32 %v244, 4294901760
        %294 = vmatpush1.msra.mxu0 %v293
        %295 = vmatprep.subr.mxu0 0.0
        %v296 = vand.u32 %v243, 4294901760
        %297 = vmatpush1.msra.mxu0 %v296
        %298 = vmatprep.subr.mxu0 0.0
        %v299 = vand.u32 %v242, 4294901760
        %300 = vmatpush1.msra.mxu0 %v299
        %301 = vmatprep.subr.mxu0 0.0
        %v302 = vand.u32 %v241, 4294901760
        %303 = vmatpush1.msra.mxu0 %v302
        %304 = vmatprep.subr.mxu0 0.0
        %v305 = vand.u32 %v240, 4294901760
        %306 = vmatpush1.msra.mxu0 %v305
        %307 = vmatprep.subr.mxu0 0.0
        %v308 = vand.u32 %v239, 4294901760
        %309 = vmatpush1.msra.mxu0 %v308
        %310 = vmatprep.subr.mxu0 0.0
        %v311 = vand.u32 %v238, 4294901760
        %312 = vmatpush1.msra.mxu0 %v311
        %313 = vmatprep.subr.mxu0 0.0
        %v314 = vand.u32 %v237, 4294901760
        %315 = vmatpush1.msra.mxu0 %v314
        %316 = vmatprep.subr.mxu0 0.0
        %v317 = vand.u32 %v236, 4294901760
        %318 = vmatpush1.msra.mxu0 %v317
        %319 = vmatprep.subr.mxu0 0.0
        %v320 = vand.u32 %v267, 4294901760
        %321 = vmatpush2.msra.mxu0 %v320
        %322 = vmatprep.subr.mxu0 0.0
        %v323 = vand.u32 %v266, 4294901760
        %324 = vmatpush2.msra.mxu0 %v323
        %325 = vmatprep.subr.mxu0 0.0
        %v326 = vand.u32 %v265, 4294901760
        %327 = vmatpush2.msra.mxu0 %v326
        %328 = vmatprep.subr.mxu0 0.0
        %v329 = vand.u32 %v264, 4294901760
        %330 = vmatpush2.msra.mxu0 %v329
        %331 = vmatprep.subr.mxu0 0.0
        %v332 = vand.u32 %v263, 4294901760
        %333 = vmatpush2.msra.mxu0 %v332
        %334 = vmatprep.subr.mxu0 0.0
        %v335 = vand.u32 %v262, 4294901760
        %336 = vmatpush2.msra.mxu0 %v335
        %337 = vmatprep.subr.mxu0 0.0
        %v338 = vand.u32 %v261, 4294901760
        %339 = vmatpush2.msra.mxu0 %v338
        %340 = vmatprep.subr.mxu0 0.0
        %v341 = vand.u32 %v260, 4294901760
        %342 = vmatpush2.msra.mxu0 %v341
        %343 = vmatprep.subr.mxu0 0.0
        %v344 = vand.u32 %v259, 4294901760
        %345 = vmatpush2.msra.mxu0 %v344
        %346 = vmatprep.subr.mxu0 0.0
        %v347 = vand.u32 %v258, 4294901760
        %348 = vmatpush2.msra.mxu0 %v347
        %349 = vmatprep.subr.mxu0 0.0
        %v350 = vand.u32 %v257, 4294901760
        %351 = vmatpush2.msra.mxu0 %v350
        %352 = vmatprep.subr.mxu0 0.0
        %v353 = vand.u32 %v256, 4294901760
        %354 = vmatpush2.msra.mxu0 %v353
        %355 = vmatprep.subr.mxu0 0.0
        %v356 = vand.u32 %v255, 4294901760
        %357 = vmatpush2.msra.mxu0 %v356
        %358 = vmatprep.subr.mxu0 0.0
        %v359 = vand.u32 %v254, 4294901760
        %360 = vmatpush2.msra.mxu0 %v359
        %361 = vmatprep.subr.mxu0 0.0
        %v362 = vand.u32 %v253, 4294901760
        %363 = vmatpush2.msra.mxu0 %v362
        %364 = vmatprep.subr.mxu0 0.0
        %v365 = vand.u32 %v252, 4294901760
        %366 = vmatpush2.msra.mxu0 %v365
        %v367 = vand.u32 %v269, 4294901760
        %v368 = vsub.f32 %v269, %v367
        %v369 = vand.u32 %v368, 4294901760
        %v370 = vsub.f32 %v368, %v369
        %v371 = vand.u32 %v370, 4294901760
        %372 = vmatprep.mubr.f32.mxu0 %v371
        %v373 = vand.u32 %v195, 4294901760
        %v374 = vsub.f32 %v195, %v373
        %v375 = vand.u32 %v374, 4294901760
        %v376 = vsub.f32 %v374, %v375
        %v377 = vand.u32 %v376, 4294901760
        %378 = vmatmul.mubr.f32.gmra.mxu0 %v377
        %v379 = vpop.f32.mrf.mxu0
        %v380 = vadd.f32 0.0, %v379
        %v381 = vpop.f32.mrf.mxu0
        %382 = vdwg.mxu0
        %383 = vmatprep.subr.mxu0 0.0
        %v384 = vand.u32 %v251, 4294901760
        %v385 = vsub.f32 %v251, %v384
        %v386 = vand.u32 %v385, 4294901760
        %v387 = vsub.f32 %v385, %v386
        %v388 = vand.u32 %v387, 4294901760
        %389 = vmatpush1.msra.mxu0 %v388
        %390 = vmatprep.subr.mxu0 0.0
        %v391 = vand.u32 %v250, 4294901760
        %v392 = vsub.f32 %v250, %v391
        %v393 = vand.u32 %v392, 4294901760
        %v394 = vsub.f32 %v392, %v393
        %v395 = vand.u32 %v394, 4294901760
        %396 = vmatpush1.msra.mxu0 %v395
        %397 = vmatprep.subr.mxu0 0.0
        %v398 = vand.u32 %v249, 4294901760
        %v399 = vsub.f32 %v249, %v398
        %v400 = vand.u32 %v399, 4294901760
        %v401 = vsub.f32 %v399, %v400
        %v402 = vand.u32 %v401, 4294901760
        %403 = vmatpush1.msra.mxu0 %v402
        %404 = vmatprep.subr.mxu0 0.0
        %v405 = vand.u32 %v248, 4294901760
        %v406 = vsub.f32 %v248, %v405
        %v407 = vand.u32 %v406, 4294901760
        %v408 = vsub.f32 %v406, %v407
        %v409 = vand.u32 %v408, 4294901760
        %410 = vmatpush1.msra.mxu0 %v409
        %411 = vmatprep.subr.mxu0 0.0
        %v412 = vand.u32 %v247, 4294901760
        %v413 = vsub.f32 %v247, %v412
        %v414 = vand.u32 %v413, 4294901760
        %v415 = vsub.f32 %v413, %v414
        %v416 = vand.u32 %v415, 4294901760
        %417 = vmatpush1.msra.mxu0 %v416
        %418 = vmatprep.subr.mxu0 0.0
        %v419 = vand.u32 %v246, 4294901760
        %v420 = vsub.f32 %v246, %v419
        %v421 = vand.u32 %v420, 4294901760
        %v422 = vsub.f32 %v420, %v421
        %v423 = vand.u32 %v422, 4294901760
        %424 = vmatpush1.msra.mxu0 %v423
        %425 = vmatprep.subr.mxu0 0.0
        %v426 = vand.u32 %v245, 4294901760
        %v427 = vsub.f32 %v245, %v426
        %v428 = vand.u32 %v427, 4294901760
        %v429 = vsub.f32 %v427, %v428
        %v430 = vand.u32 %v429, 4294901760
        %431 = vmatpush1.msra.mxu0 %v430
        %432 = vmatprep.subr.mxu0 0.0
        %v433 = vand.u32 %v244, 4294901760
        %v434 = vsub.f32 %v244, %v433
        %v435 = vand.u32 %v434, 4294901760
        %v436 = vsub.f32 %v434, %v435
        %v437 = vand.u32 %v436, 4294901760
        %438 = vmatpush1.msra.mxu0 %v437
        %439 = vmatprep.subr.mxu0 0.0
        %v440 = vand.u32 %v243, 4294901760
        %v441 = vsub.f32 %v243, %v440
        %v442 = vand.u32 %v441, 4294901760
        %v443 = vsub.f32 %v441, %v442
        %v444 = vand.u32 %v443, 4294901760
        %445 = vmatpush1.msra.mxu0 %v444
        %446 = vmatprep.subr.mxu0 0.0
        %v447 = vand.u32 %v242, 4294901760
        %v448 = vsub.f32 %v242, %v447
        %v449 = vand.u32 %v448, 4294901760
        %v450 = vsub.f32 %v448, %v449
        %v451 = vand.u32 %v450, 4294901760
        %452 = vmatpush1.msra.mxu0 %v451
        %453 = vmatprep.subr.mxu0 0.0
        %v454 = vand.u32 %v241, 4294901760
        %v455 = vsub.f32 %v241, %v454
        %v456 = vand.u32 %v455, 4294901760
        %v457 = vsub.f32 %v455, %v456
        %v458 = vand.u32 %v457, 4294901760
        %459 = vmatpush1.msra.mxu0 %v458
        %460 = vmatprep.subr.mxu0 0.0
        %v461 = vand.u32 %v240, 4294901760
        %v462 = vsub.f32 %v240, %v461
        %v463 = vand.u32 %v462, 4294901760
        %v464 = vsub.f32 %v462, %v463
        %v465 = vand.u32 %v464, 4294901760
        %466 = vmatpush1.msra.mxu0 %v465
        %467 = vmatprep.subr.mxu0 0.0
        %v468 = vand.u32 %v239, 4294901760
        %v469 = vsub.f32 %v239, %v468
        %v470 = vand.u32 %v469, 4294901760
        %v471 = vsub.f32 %v469, %v470
        %v472 = vand.u32 %v471, 4294901760
        %473 = vmatpush1.msra.mxu0 %v472
        %474 = vmatprep.subr.mxu0 0.0
        %v475 = vand.u32 %v238, 4294901760
        %v476 = vsub.f32 %v238, %v475
        %v477 = vand.u32 %v476, 4294901760
        %v478 = vsub.f32 %v476, %v477
        %v479 = vand.u32 %v478, 4294901760
        %480 = vmatpush1.msra.mxu0 %v479
        %481 = vmatprep.subr.mxu0 0.0
        %v482 = vand.u32 %v237, 4294901760
        %v483 = vsub.f32 %v237, %v482
        %v484 = vand.u32 %v483, 4294901760
        %v485 = vsub.f32 %v483, %v484
        %v486 = vand.u32 %v485, 4294901760
        %487 = vmatpush1.msra.mxu0 %v486
        %488 = vmatprep.subr.mxu0 0.0
        %v489 = vand.u32 %v236, 4294901760
        %v490 = vsub.f32 %v236, %v489
        %v491 = vand.u32 %v490, 4294901760
        %v492 = vsub.f32 %v490, %v491
        %v493 = vand.u32 %v492, 4294901760
        %494 = vmatpush1.msra.mxu0 %v493
        %495 = vmatprep.subr.mxu0 0.0
        %v496 = vand.u32 %v267, 4294901760
        %v497 = vsub.f32 %v267, %v496
        %v498 = vand.u32 %v497, 4294901760
        %v499 = vsub.f32 %v497, %v498
        %v500 = vand.u32 %v499, 4294901760
        %501 = vmatpush2.msra.mxu0 %v500
        %502 = vmatprep.subr.mxu0 0.0
        %v503 = vand.u32 %v266, 4294901760
        %v504 = vsub.f32 %v266, %v503
        %v505 = vand.u32 %v504, 4294901760
        %v506 = vsub.f32 %v504, %v505
        %v507 = vand.u32 %v506, 4294901760
        %508 = vmatpush2.msra.mxu0 %v507
        %509 = vmatprep.subr.mxu0 0.0
        %v510 = vand.u32 %v265, 4294901760
        %v511 = vsub.f32 %v265, %v510
        %v512 = vand.u32 %v511, 4294901760
        %v513 = vsub.f32 %v511, %v512
        %v514 = vand.u32 %v513, 4294901760
        %515 = vmatpush2.msra.mxu0 %v514
        %516 = vmatprep.subr.mxu0 0.0
        %v517 = vand.u32 %v264, 4294901760
        %v518 = vsub.f32 %v264, %v517
        %v519 = vand.u32 %v518, 4294901760
        %v520 = vsub.f32 %v518, %v519
        %v521 = vand.u32 %v520, 4294901760
        %522 = vmatpush2.msra.mxu0 %v521
        %523 = vmatprep.subr.mxu0 0.0
        %v524 = vand.u32 %v263, 4294901760
        %v525 = vsub.f32 %v263, %v524
        %v526 = vand.u32 %v525, 4294901760
        %v527 = vsub.f32 %v525, %v526
        %v528 = vand.u32 %v527, 4294901760
        %529 = vmatpush2.msra.mxu0 %v528
        %530 = vmatprep.subr.mxu0 0.0
        %v531 = vand.u32 %v262, 4294901760
        %v532 = vsub.f32 %v262, %v531
        %v533 = vand.u32 %v532, 4294901760
        %v534 = vsub.f32 %v532, %v533
        %v535 = vand.u32 %v534, 4294901760
        %536 = vmatpush2.msra.mxu0 %v535
        %537 = vmatprep.subr.mxu0 0.0
        %v538 = vand.u32 %v261, 4294901760
        %v539 = vsub.f32 %v261, %v538
        %v540 = vand.u32 %v539, 4294901760
        %v541 = vsub.f32 %v539, %v540
        %v542 = vand.u32 %v541, 4294901760
        %543 = vmatpush2.msra.mxu0 %v542
        %544 = vmatprep.subr.mxu0 0.0
        %v545 = vand.u32 %v260, 4294901760
        %v546 = vsub.f32 %v260, %v545
        %v547 = vand.u32 %v546, 4294901760
        %v548 = vsub.f32 %v546, %v547
        %v549 = vand.u32 %v548, 4294901760
        %550 = vmatpush2.msra.mxu0 %v549
        %551 = vmatprep.subr.mxu0 0.0
        %v552 = vand.u32 %v259, 4294901760
        %v553 = vsub.f32 %v259, %v552
        %v554 = vand.u32 %v553, 4294901760
        %v555 = vsub.f32 %v553, %v554
        %v556 = vand.u32 %v555, 4294901760
        %557 = vmatpush2.msra.mxu0 %v556
        %558 = vmatprep.subr.mxu0 0.0
        %v559 = vand.u32 %v258, 4294901760
        %v560 = vsub.f32 %v258, %v559
        %v561 = vand.u32 %v560, 4294901760
        %v562 = vsub.f32 %v560, %v561
        %v563 = vand.u32 %v562, 4294901760
        %564 = vmatpush2.msra.mxu0 %v563
        %565 = vmatprep.subr.mxu0 0.0
        %v566 = vand.u32 %v257, 4294901760
        %v567 = vsub.f32 %v257, %v566
        %v568 = vand.u32 %v567, 4294901760
        %v569 = vsub.f32 %v567, %v568
        %v570 = vand.u32 %v569, 4294901760
        %571 = vmatpush2.msra.mxu0 %v570
        %572 = vmatprep.subr.mxu0 0.0
        %v573 = vand.u32 %v256, 4294901760
        %v574 = vsub.f32 %v256, %v573
        %v575 = vand.u32 %v574, 4294901760
        %v576 = vsub.f32 %v574, %v575
        %v577 = vand.u32 %v576, 4294901760
        %578 = vmatpush2.msra.mxu0 %v577
        %579 = vmatprep.subr.mxu0 0.0
        %v580 = vand.u32 %v255, 4294901760
        %v581 = vsub.f32 %v255, %v580
        %v582 = vand.u32 %v581, 4294901760
        %v583 = vsub.f32 %v581, %v582
        %v584 = vand.u32 %v583, 4294901760
        %585 = vmatpush2.msra.mxu0 %v584
        %586 = vmatprep.subr.mxu0 0.0
        %v587 = vand.u32 %v254, 4294901760
        %v588 = vsub.f32 %v254, %v587
        %v589 = vand.u32 %v588, 4294901760
        %v590 = vsub.f32 %v588, %v589
        %v591 = vand.u32 %v590, 4294901760
        %592 = vmatpush2.msra.mxu0 %v591
        %593 = vmatprep.subr.mxu0 0.0
        %v594 = vand.u32 %v253, 4294901760
        %v595 = vsub.f32 %v253, %v594
        %v596 = vand.u32 %v595, 4294901760
        %v597 = vsub.f32 %v595, %v596
        %v598 = vand.u32 %v597, 4294901760
        %599 = vmatpush2.msra.mxu0 %v598
        %600 = vmatprep.subr.mxu0 0.0
        %v601 = vand.u32 %v252, 4294901760
        %v602 = vsub.f32 %v252, %v601
        %v603 = vand.u32 %v602, 4294901760
        %v604 = vsub.f32 %v602, %v603
        %v605 = vand.u32 %v604, 4294901760
        %606 = vmatpush2.msra.mxu0 %v605
        %v607 = vand.u32 %v269, 4294901760
        %608 = vmatprep.mubr.f32.mxu0 %v607
        %v609 = vand.u32 %v195, 4294901760
        %610 = vmatmul.mubr.f32.gmra.mxu0 %v609
        %v611 = vpop.f32.mrf.mxu0
        %v612 = vadd.f32 %v380, %v611
        %v613 = vpop.f32.mrf.mxu0
        %614 = vdwg.mxu0
        %615 = vmatprep.subr.mxu0 0.0
        %v616 = vand.u32 %v251, 4294901760
        %v617 = vsub.f32 %v251, %v616
        %618 = vmatpush1.msra.mxu0 %v617
        %619 = vmatprep.subr.mxu0 0.0
        %v620 = vand.u32 %v250, 4294901760
        %v621 = vsub.f32 %v250, %v620
        %622 = vmatpush1.msra.mxu0 %v621
        %623 = vmatprep.subr.mxu0 0.0
        %v624 = vand.u32 %v249, 4294901760
        %v625 = vsub.f32 %v249, %v624
        %626 = vmatpush1.msra.mxu0 %v625
        %627 = vmatprep.subr.mxu0 0.0
        %v628 = vand.u32 %v248, 4294901760
        %v629 = vsub.f32 %v248, %v628
        %630 = vmatpush1.msra.mxu0 %v629
        %631 = vmatprep.subr.mxu0 0.0
        %v632 = vand.u32 %v247, 4294901760
        %v633 = vsub.f32 %v247, %v632
        %634 = vmatpush1.msra.mxu0 %v633
        %635 = vmatprep.subr.mxu0 0.0
        %v636 = vand.u32 %v246, 4294901760
        %v637 = vsub.f32 %v246, %v636
        %638 = vmatpush1.msra.mxu0 %v637
        %639 = vmatprep.subr.mxu0 0.0
        %v640 = vand.u32 %v245, 4294901760
        %v641 = vsub.f32 %v245, %v640
        %642 = vmatpush1.msra.mxu0 %v641
        %643 = vmatprep.subr.mxu0 0.0
        %v644 = vand.u32 %v244, 4294901760
        %v645 = vsub.f32 %v244, %v644
        %646 = vmatpush1.msra.mxu0 %v645
        %647 = vmatprep.subr.mxu0 0.0
        %v648 = vand.u32 %v243, 4294901760
        %v649 = vsub.f32 %v243, %v648
        %650 = vmatpush1.msra.mxu0 %v649
        %651 = vmatprep.subr.mxu0 0.0
        %v652 = vand.u32 %v242, 4294901760
        %v653 = vsub.f32 %v242, %v652
        %654 = vmatpush1.msra.mxu0 %v653
        %655 = vmatprep.subr.mxu0 0.0
        %v656 = vand.u32 %v241, 4294901760
        %v657 = vsub.f32 %v241, %v656
        %658 = vmatpush1.msra.mxu0 %v657
        %659 = vmatprep.subr.mxu0 0.0
        %v660 = vand.u32 %v240, 4294901760
        %v661 = vsub.f32 %v240, %v660
        %662 = vmatpush1.msra.mxu0 %v661
        %663 = vmatprep.subr.mxu0 0.0
        %v664 = vand.u32 %v239, 4294901760
        %v665 = vsub.f32 %v239, %v664
        %666 = vmatpush1.msra.mxu0 %v665
        %667 = vmatprep.subr.mxu0 0.0
        %v668 = vand.u32 %v238, 4294901760
        %v669 = vsub.f32 %v238, %v668
        %670 = vmatpush1.msra.mxu0 %v669
        %671 = vmatprep.subr.mxu0 0.0
        %v672 = vand.u32 %v237, 4294901760
        %v673 = vsub.f32 %v237, %v672
        %674 = vmatpush1.msra.mxu0 %v673
        %675 = vmatprep.subr.mxu0 0.0
        %v676 = vand.u32 %v236, 4294901760
        %v677 = vsub.f32 %v236, %v676
        %678 = vmatpush1.msra.mxu0 %v677
        %679 = vmatprep.subr.mxu0 0.0
        %v680 = vand.u32 %v267, 4294901760
        %v681 = vsub.f32 %v267, %v680
        %682 = vmatpush2.msra.mxu0 %v681
        %683 = vmatprep.subr.mxu0 0.0
        %v684 = vand.u32 %v266, 4294901760
        %v685 = vsub.f32 %v266, %v684
        %686 = vmatpush2.msra.mxu0 %v685
        %687 = vmatprep.subr.mxu0 0.0
        %v688 = vand.u32 %v265, 4294901760
        %v689 = vsub.f32 %v265, %v688
        %690 = vmatpush2.msra.mxu0 %v689
        %691 = vmatprep.subr.mxu0 0.0
        %v692 = vand.u32 %v264, 4294901760
        %v693 = vsub.f32 %v264, %v692
        %694 = vmatpush2.msra.mxu0 %v693
        %695 = vmatprep.subr.mxu0 0.0
        %v696 = vand.u32 %v263, 4294901760
        %v697 = vsub.f32 %v263, %v696
        %698 = vmatpush2.msra.mxu0 %v697
        %699 = vmatprep.subr.mxu0 0.0
        %v700 = vand.u32 %v262, 4294901760
        %v701 = vsub.f32 %v262, %v700
        %702 = vmatpush2.msra.mxu0 %v701
        %703 = vmatprep.subr.mxu0 0.0
        %v704 = vand.u32 %v261, 4294901760
        %v705 = vsub.f32 %v261, %v704
        %706 = vmatpush2.msra.mxu0 %v705
        %707 = vmatprep.subr.mxu0 0.0
        %v708 = vand.u32 %v260, 4294901760
        %v709 = vsub.f32 %v260, %v708
        %710 = vmatpush2.msra.mxu0 %v709
        %711 = vmatprep.subr.mxu0 0.0
        %v712 = vand.u32 %v259, 4294901760
        %v713 = vsub.f32 %v259, %v712
        %714 = vmatpush2.msra.mxu0 %v713
        %715 = vmatprep.subr.mxu0 0.0
        %v716 = vand.u32 %v258, 4294901760
        %v717 = vsub.f32 %v258, %v716
        %718 = vmatpush2.msra.mxu0 %v717
        %719 = vmatprep.subr.mxu0 0.0
        %v720 = vand.u32 %v257, 4294901760
        %v721 = vsub.f32 %v257, %v720
        %722 = vmatpush2.msra.mxu0 %v721
        %723 = vmatprep.subr.mxu0 0.0
        %v724 = vand.u32 %v256, 4294901760
        %v725 = vsub.f32 %v256, %v724
        %726 = vmatpush2.msra.mxu0 %v725
        %727 = vmatprep.subr.mxu0 0.0
        %v728 = vand.u32 %v255, 4294901760
        %v729 = vsub.f32 %v255, %v728
        %730 = vmatpush2.msra.mxu0 %v729
        %731 = vmatprep.subr.mxu0 0.0
        %v732 = vand.u32 %v254, 4294901760
        %v733 = vsub.f32 %v254, %v732
        %734 = vmatpush2.msra.mxu0 %v733
        %735 = vmatprep.subr.mxu0 0.0
        %v736 = vand.u32 %v253, 4294901760
        %v737 = vsub.f32 %v253, %v736
        %738 = vmatpush2.msra.mxu0 %v737
        %739 = vmatprep.subr.mxu0 0.0
        %v740 = vand.u32 %v252, 4294901760
        %v741 = vsub.f32 %v252, %v740
        %742 = vmatpush2.msra.mxu0 %v741
        %v743 = vand.u32 %v269, 4294901760
        %v744 = vsub.f32 %v269, %v743
        %745 = vmatprep.mubr.f32.mxu0 %v744
        %v746 = vand.u32 %v195, 4294901760
        %v747 = vsub.f32 %v195, %v746
        %748 = vmatmul.mubr.f32.gmra.mxu0 %v747
        %v749 = vpop.f32.mrf.mxu0
        %v750 = vadd.f32 %v612, %v749
        %v751 = vpop.f32.mrf.mxu0
        %752 = vdwg.mxu0
        %753 = vmatprep.subr.mxu0 0.0
        %v754 = vand.u32 %v251, 4294901760
        %755 = vmatpush1.msra.mxu0 %v754
        %756 = vmatprep.subr.mxu0 0.0
        %v757 = vand.u32 %v250, 4294901760
        %758 = vmatpush1.msra.mxu0 %v757
        %759 = vmatprep.subr.mxu0 0.0
        %v760 = vand.u32 %v249, 4294901760
        %761 = vmatpush1.msra.mxu0 %v760
        %762 = vmatprep.subr.mxu0 0.0
        %v763 = vand.u32 %v248, 4294901760
        %764 = vmatpush1.msra.mxu0 %v763
        %765 = vmatprep.subr.mxu0 0.0
        %v766 = vand.u32 %v247, 4294901760
        %767 = vmatpush1.msra.mxu0 %v766
        %768 = vmatprep.subr.mxu0 0.0
        %v769 = vand.u32 %v246, 4294901760
        %770 = vmatpush1.msra.mxu0 %v769
        %771 = vmatprep.subr.mxu0 0.0
        %v772 = vand.u32 %v245, 4294901760
        %773 = vmatpush1.msra.mxu0 %v772
        %774 = vmatprep.subr.mxu0 0.0
        %v775 = vand.u32 %v244, 4294901760
        %776 = vmatpush1.msra.mxu0 %v775
        %777 = vmatprep.subr.mxu0 0.0
        %v778 = vand.u32 %v243, 4294901760
        %779 = vmatpush1.msra.mxu0 %v778
        %780 = vmatprep.subr.mxu0 0.0
        %v781 = vand.u32 %v242, 4294901760
        %782 = vmatpush1.msra.mxu0 %v781
        %783 = vmatprep.subr.mxu0 0.0
        %v784 = vand.u32 %v241, 4294901760
        %785 = vmatpush1.msra.mxu0 %v784
        %786 = vmatprep.subr.mxu0 0.0
        %v787 = vand.u32 %v240, 4294901760
        %788 = vmatpush1.msra.mxu0 %v787
        %789 = vmatprep.subr.mxu0 0.0
        %v790 = vand.u32 %v239, 4294901760
        %791 = vmatpush1.msra.mxu0 %v790
        %792 = vmatprep.subr.mxu0 0.0
        %v793 = vand.u32 %v238, 4294901760
        %794 = vmatpush1.msra.mxu0 %v793
        %795 = vmatprep.subr.mxu0 0.0
        %v796 = vand.u32 %v237, 4294901760
        %797 = vmatpush1.msra.mxu0 %v796
        %798 = vmatprep.subr.mxu0 0.0
        %v799 = vand.u32 %v236, 4294901760
        %800 = vmatpush1.msra.mxu0 %v799
        %801 = vmatprep.subr.mxu0 0.0
        %v802 = vand.u32 %v267, 4294901760
        %803 = vmatpush2.msra.mxu0 %v802
        %804 = vmatprep.subr.mxu0 0.0
        %v805 = vand.u32 %v266, 4294901760
        %806 = vmatpush2.msra.mxu0 %v805
        %807 = vmatprep.subr.mxu0 0.0
        %v808 = vand.u32 %v265, 4294901760
        %809 = vmatpush2.msra.mxu0 %v808
        %810 = vmatprep.subr.mxu0 0.0
        %v811 = vand.u32 %v264, 4294901760
        %812 = vmatpush2.msra.mxu0 %v811
        %813 = vmatprep.subr.mxu0 0.0
        %v814 = vand.u32 %v263, 4294901760
        %815 = vmatpush2.msra.mxu0 %v814
        %816 = vmatprep.subr.mxu0 0.0
        %v817 = vand.u32 %v262, 4294901760
        %818 = vmatpush2.msra.mxu0 %v817
        %819 = vmatprep.subr.mxu0 0.0
        %v820 = vand.u32 %v261, 4294901760
        %821 = vmatpush2.msra.mxu0 %v820
        %822 = vmatprep.subr.mxu0 0.0
        %v823 = vand.u32 %v260, 4294901760
        %824 = vmatpush2.msra.mxu0 %v823
        %825 = vmatprep.subr.mxu0 0.0
        %v826 = vand.u32 %v259, 4294901760
        %827 = vmatpush2.msra.mxu0 %v826
        %828 = vmatprep.subr.mxu0 0.0
        %v829 = vand.u32 %v258, 4294901760
        %830 = vmatpush2.msra.mxu0 %v829
        %831 = vmatprep.subr.mxu0 0.0
        %v832 = vand.u32 %v257, 4294901760
        %833 = vmatpush2.msra.mxu0 %v832
        %834 = vmatprep.subr.mxu0 0.0
        %v835 = vand.u32 %v256, 4294901760
        %836 = vmatpush2.msra.mxu0 %v835
        %837 = vmatprep.subr.mxu0 0.0
        %v838 = vand.u32 %v255, 4294901760
        %839 = vmatpush2.msra.mxu0 %v838
        %840 = vmatprep.subr.mxu0 0.0
        %v841 = vand.u32 %v254, 4294901760
        %842 = vmatpush2.msra.mxu0 %v841
        %843 = vmatprep.subr.mxu0 0.0
        %v844 = vand.u32 %v253, 4294901760
        %845 = vmatpush2.msra.mxu0 %v844
        %846 = vmatprep.subr.mxu0 0.0
        %v847 = vand.u32 %v252, 4294901760
        %848 = vmatpush2.msra.mxu0 %v847
        %v849 = vand.u32 %v269, 4294901760
        %v850 = vsub.f32 %v269, %v849
        %v851 = vand.u32 %v850, 4294901760
        %852 = vmatprep.mubr.f32.mxu0 %v851
        %v853 = vand.u32 %v195, 4294901760
        %v854 = vsub.f32 %v195, %v853
        %v855 = vand.u32 %v854, 4294901760
        %856 = vmatmul.mubr.f32.gmra.mxu0 %v855
        %v857 = vpop.f32.mrf.mxu0
        %v858 = vadd.f32 %v750, %v857
        %v859 = vpop.f32.mrf.mxu0
        %860 = vdwg.mxu0
        %861 = vmatprep.subr.mxu0 0.0
        %v862 = vand.u32 %v251, 4294901760
        %v863 = vsub.f32 %v251, %v862
        %v864 = vand.u32 %v863, 4294901760
        %865 = vmatpush1.msra.mxu0 %v864
        %866 = vmatprep.subr.mxu0 0.0
        %v867 = vand.u32 %v250, 4294901760
        %v868 = vsub.f32 %v250, %v867
        %v869 = vand.u32 %v868, 4294901760
        %870 = vmatpush1.msra.mxu0 %v869
        %871 = vmatprep.subr.mxu0 0.0
        %v872 = vand.u32 %v249, 4294901760
        %v873 = vsub.f32 %v249, %v872
        %v874 = vand.u32 %v873, 4294901760
        %875 = vmatpush1.msra.mxu0 %v874
        %876 = vmatprep.subr.mxu0 0.0
        %v877 = vand.u32 %v248, 4294901760
        %v878 = vsub.f32 %v248, %v877
        %v879 = vand.u32 %v878, 4294901760
        %880 = vmatpush1.msra.mxu0 %v879
        %881 = vmatprep.subr.mxu0 0.0
        %v882 = vand.u32 %v247, 4294901760
        %v883 = vsub.f32 %v247, %v882
        %v884 = vand.u32 %v883, 4294901760
        %885 = vmatpush1.msra.mxu0 %v884
        %886 = vmatprep.subr.mxu0 0.0
        %v887 = vand.u32 %v246, 4294901760
        %v888 = vsub.f32 %v246, %v887
        %v889 = vand.u32 %v888, 4294901760
        %890 = vmatpush1.msra.mxu0 %v889
        %891 = vmatprep.subr.mxu0 0.0
        %v892 = vand.u32 %v245, 4294901760
        %v893 = vsub.f32 %v245, %v892
        %v894 = vand.u32 %v893, 4294901760
        %895 = vmatpush1.msra.mxu0 %v894
        %896 = vmatprep.subr.mxu0 0.0
        %v897 = vand.u32 %v244, 4294901760
        %v898 = vsub.f32 %v244, %v897
        %v899 = vand.u32 %v898, 4294901760
        %900 = vmatpush1.msra.mxu0 %v899
        %901 = vmatprep.subr.mxu0 0.0
        %v902 = vand.u32 %v243, 4294901760
        %v903 = vsub.f32 %v243, %v902
        %v904 = vand.u32 %v903, 4294901760
        %905 = vmatpush1.msra.mxu0 %v904
        %906 = vmatprep.subr.mxu0 0.0
        %v907 = vand.u32 %v242, 4294901760
        %v908 = vsub.f32 %v242, %v907
        %v909 = vand.u32 %v908, 4294901760
        %910 = vmatpush1.msra.mxu0 %v909
        %911 = vmatprep.subr.mxu0 0.0
        %v912 = vand.u32 %v241, 4294901760
        %v913 = vsub.f32 %v241, %v912
        %v914 = vand.u32 %v913, 4294901760
        %915 = vmatpush1.msra.mxu0 %v914
        %916 = vmatprep.subr.mxu0 0.0
        %v917 = vand.u32 %v240, 4294901760
        %v918 = vsub.f32 %v240, %v917
        %v919 = vand.u32 %v918, 4294901760
        %920 = vmatpush1.msra.mxu0 %v919
        %921 = vmatprep.subr.mxu0 0.0
        %v922 = vand.u32 %v239, 4294901760
        %v923 = vsub.f32 %v239, %v922
        %v924 = vand.u32 %v923, 4294901760
        %925 = vmatpush1.msra.mxu0 %v924
        %926 = vmatprep.subr.mxu0 0.0
        %v927 = vand.u32 %v238, 4294901760
        %v928 = vsub.f32 %v238, %v927
        %v929 = vand.u32 %v928, 4294901760
        %930 = vmatpush1.msra.mxu0 %v929
        %931 = vmatprep.subr.mxu0 0.0
        %v932 = vand.u32 %v237, 4294901760
        %v933 = vsub.f32 %v237, %v932
        %v934 = vand.u32 %v933, 4294901760
        %935 = vmatpush1.msra.mxu0 %v934
        %936 = vmatprep.subr.mxu0 0.0
        %v937 = vand.u32 %v236, 4294901760
        %v938 = vsub.f32 %v236, %v937
        %v939 = vand.u32 %v938, 4294901760
        %940 = vmatpush1.msra.mxu0 %v939
        %941 = vmatprep.subr.mxu0 0.0
        %v942 = vand.u32 %v267, 4294901760
        %v943 = vsub.f32 %v267, %v942
        %v944 = vand.u32 %v943, 4294901760
        %945 = vmatpush2.msra.mxu0 %v944
        %946 = vmatprep.subr.mxu0 0.0
        %v947 = vand.u32 %v266, 4294901760
        %v948 = vsub.f32 %v266, %v947
        %v949 = vand.u32 %v948, 4294901760
        %950 = vmatpush2.msra.mxu0 %v949
        %951 = vmatprep.subr.mxu0 0.0
        %v952 = vand.u32 %v265, 4294901760
        %v953 = vsub.f32 %v265, %v952
        %v954 = vand.u32 %v953, 4294901760
        %955 = vmatpush2.msra.mxu0 %v954
        %956 = vmatprep.subr.mxu0 0.0
        %v957 = vand.u32 %v264, 4294901760
        %v958 = vsub.f32 %v264, %v957
        %v959 = vand.u32 %v958, 4294901760
        %960 = vmatpush2.msra.mxu0 %v959
        %961 = vmatprep.subr.mxu0 0.0
        %v962 = vand.u32 %v263, 4294901760
        %v963 = vsub.f32 %v263, %v962
        %v964 = vand.u32 %v963, 4294901760
        %965 = vmatpush2.msra.mxu0 %v964
        %966 = vmatprep.subr.mxu0 0.0
        %v967 = vand.u32 %v262, 4294901760
        %v968 = vsub.f32 %v262, %v967
        %v969 = vand.u32 %v968, 4294901760
        %970 = vmatpush2.msra.mxu0 %v969
        %971 = vmatprep.subr.mxu0 0.0
        %v972 = vand.u32 %v261, 4294901760
        %v973 = vsub.f32 %v261, %v972
        %v974 = vand.u32 %v973, 4294901760
        %975 = vmatpush2.msra.mxu0 %v974
        %976 = vmatprep.subr.mxu0 0.0
        %v977 = vand.u32 %v260, 4294901760
        %v978 = vsub.f32 %v260, %v977
        %v979 = vand.u32 %v978, 4294901760
        %980 = vmatpush2.msra.mxu0 %v979
        %981 = vmatprep.subr.mxu0 0.0
        %v982 = vand.u32 %v259, 4294901760
        %v983 = vsub.f32 %v259, %v982
        %v984 = vand.u32 %v983, 4294901760
        %985 = vmatpush2.msra.mxu0 %v984
        %986 = vmatprep.subr.mxu0 0.0
        %v987 = vand.u32 %v258, 4294901760
        %v988 = vsub.f32 %v258, %v987
        %v989 = vand.u32 %v988, 4294901760
        %990 = vmatpush2.msra.mxu0 %v989
        %991 = vmatprep.subr.mxu0 0.0
        %v992 = vand.u32 %v257, 4294901760
        %v993 = vsub.f32 %v257, %v992
        %v994 = vand.u32 %v993, 4294901760
        %995 = vmatpush2.msra.mxu0 %v994
        %996 = vmatprep.subr.mxu0 0.0
        %v997 = vand.u32 %v256, 4294901760
        %v998 = vsub.f32 %v256, %v997
        %v999 = vand.u32 %v998, 4294901760
        %1000 = vmatpush2.msra.mxu0 %v999
        %1001 = vmatprep.subr.mxu0 0.0
        %v1002 = vand.u32 %v255, 4294901760
        %v1003 = vsub.f32 %v255, %v1002
        %v1004 = vand.u32 %v1003, 4294901760
        %1005 = vmatpush2.msra.mxu0 %v1004
        %1006 = vmatprep.subr.mxu0 0.0
        %v1007 = vand.u32 %v254, 4294901760
        %v1008 = vsub.f32 %v254, %v1007
        %v1009 = vand.u32 %v1008, 4294901760
        %1010 = vmatpush2.msra.mxu0 %v1009
        %1011 = vmatprep.subr.mxu0 0.0
        %v1012 = vand.u32 %v253, 4294901760
        %v1013 = vsub.f32 %v253, %v1012
        %v1014 = vand.u32 %v1013, 4294901760
        %1015 = vmatpush2.msra.mxu0 %v1014
        %1016 = vmatprep.subr.mxu0 0.0
        %v1017 = vand.u32 %v252, 4294901760
        %v1018 = vsub.f32 %v252, %v1017
        %v1019 = vand.u32 %v1018, 4294901760
        %1020 = vmatpush2.msra.mxu0 %v1019
        %v1021 = vand.u32 %v269, 4294901760
        %1022 = vmatprep.mubr.f32.mxu0 %v1021
        %v1023 = vand.u32 %v195, 4294901760
        %1024 = vmatmul.mubr.f32.gmra.mxu0 %v1023
        %v1025 = vpop.f32.mrf.mxu0
        %v1026 = vadd.f32 %v858, %v1025
        %v1027 = vpop.f32.mrf.mxu0
        %1028 = vdwg.mxu0
        %1029 = vmatprep.subr.mxu0 0.0
        %v1030 = vand.u32 %v251, 4294901760
        %1031 = vmatpush1.msra.mxu0 %v1030
        %1032 = vmatprep.subr.mxu0 0.0
        %v1033 = vand.u32 %v250, 4294901760
        %1034 = vmatpush1.msra.mxu0 %v1033
        %1035 = vmatprep.subr.mxu0 0.0
        %v1036 = vand.u32 %v249, 4294901760
        %1037 = vmatpush1.msra.mxu0 %v1036
        %1038 = vmatprep.subr.mxu0 0.0
        %v1039 = vand.u32 %v248, 4294901760
        %1040 = vmatpush1.msra.mxu0 %v1039
        %1041 = vmatprep.subr.mxu0 0.0
        %v1042 = vand.u32 %v247, 4294901760
        %1043 = vmatpush1.msra.mxu0 %v1042
        %1044 = vmatprep.subr.mxu0 0.0
        %v1045 = vand.u32 %v246, 4294901760
        %1046 = vmatpush1.msra.mxu0 %v1045
        %1047 = vmatprep.subr.mxu0 0.0
        %v1048 = vand.u32 %v245, 4294901760
        %1049 = vmatpush1.msra.mxu0 %v1048
        %1050 = vmatprep.subr.mxu0 0.0
        %v1051 = vand.u32 %v244, 4294901760
        %1052 = vmatpush1.msra.mxu0 %v1051
        %1053 = vmatprep.subr.mxu0 0.0
        %v1054 = vand.u32 %v243, 4294901760
        %1055 = vmatpush1.msra.mxu0 %v1054
        %1056 = vmatprep.subr.mxu0 0.0
        %v1057 = vand.u32 %v242, 4294901760
        %1058 = vmatpush1.msra.mxu0 %v1057
        %1059 = vmatprep.subr.mxu0 0.0
        %v1060 = vand.u32 %v241, 4294901760
        %1061 = vmatpush1.msra.mxu0 %v1060
        %1062 = vmatprep.subr.mxu0 0.0
        %v1063 = vand.u32 %v240, 4294901760
        %1064 = vmatpush1.msra.mxu0 %v1063
        %1065 = vmatprep.subr.mxu0 0.0
        %v1066 = vand.u32 %v239, 4294901760
        %1067 = vmatpush1.msra.mxu0 %v1066
        %1068 = vmatprep.subr.mxu0 0.0
        %v1069 = vand.u32 %v238, 4294901760
        %1070 = vmatpush1.msra.mxu0 %v1069
        %1071 = vmatprep.subr.mxu0 0.0
        %v1072 = vand.u32 %v237, 4294901760
        %1073 = vmatpush1.msra.mxu0 %v1072
        %1074 = vmatprep.subr.mxu0 0.0
        %v1075 = vand.u32 %v236, 4294901760
        %1076 = vmatpush1.msra.mxu0 %v1075
        %1077 = vmatprep.subr.mxu0 0.0
        %v1078 = vand.u32 %v267, 4294901760
        %1079 = vmatpush2.msra.mxu0 %v1078
        %1080 = vmatprep.subr.mxu0 0.0
        %v1081 = vand.u32 %v266, 4294901760
        %1082 = vmatpush2.msra.mxu0 %v1081
        %1083 = vmatprep.subr.mxu0 0.0
        %v1084 = vand.u32 %v265, 4294901760
        %1085 = vmatpush2.msra.mxu0 %v1084
        %1086 = vmatprep.subr.mxu0 0.0
        %v1087 = vand.u32 %v264, 4294901760
        %1088 = vmatpush2.msra.mxu0 %v1087
        %1089 = vmatprep.subr.mxu0 0.0
        %v1090 = vand.u32 %v263, 4294901760
        %1091 = vmatpush2.msra.mxu0 %v1090
        %1092 = vmatprep.subr.mxu0 0.0
        %v1093 = vand.u32 %v262, 4294901760
        %1094 = vmatpush2.msra.mxu0 %v1093
        %1095 = vmatprep.subr.mxu0 0.0
        %v1096 = vand.u32 %v261, 4294901760
        %1097 = vmatpush2.msra.mxu0 %v1096
        %1098 = vmatprep.subr.mxu0 0.0
        %v1099 = vand.u32 %v260, 4294901760
        %1100 = vmatpush2.msra.mxu0 %v1099
        %1101 = vmatprep.subr.mxu0 0.0
        %v1102 = vand.u32 %v259, 4294901760
        %1103 = vmatpush2.msra.mxu0 %v1102
        %1104 = vmatprep.subr.mxu0 0.0
        %v1105 = vand.u32 %v258, 4294901760
        %1106 = vmatpush2.msra.mxu0 %v1105
        %1107 = vmatprep.subr.mxu0 0.0
        %v1108 = vand.u32 %v257, 4294901760
        %1109 = vmatpush2.msra.mxu0 %v1108
        %1110 = vmatprep.subr.mxu0 0.0
        %v1111 = vand.u32 %v256, 4294901760
        %1112 = vmatpush2.msra.mxu0 %v1111
        %1113 = vmatprep.subr.mxu0 0.0
        %v1114 = vand.u32 %v255, 4294901760
        %1115 = vmatpush2.msra.mxu0 %v1114
        %1116 = vmatprep.subr.mxu0 0.0
        %v1117 = vand.u32 %v254, 4294901760
        %1118 = vmatpush2.msra.mxu0 %v1117
        %1119 = vmatprep.subr.mxu0 0.0
        %v1120 = vand.u32 %v253, 4294901760
        %1121 = vmatpush2.msra.mxu0 %v1120
        %1122 = vmatprep.subr.mxu0 0.0
        %v1123 = vand.u32 %v252, 4294901760
        %1124 = vmatpush2.msra.mxu0 %v1123
        %v1125 = vand.u32 %v269, 4294901760
        %1126 = vmatprep.mubr.f32.mxu0 %v1125
        %v1127 = vand.u32 %v195, 4294901760
        %1128 = vmatmul.mubr.f32.gmra.mxu0 %v1127
        %v1129 = vpop.f32.mrf.mxu0
        %v1130 = vadd.f32 %v1026, %v1129
        %v1131 = vpop.f32.mrf.mxu0
        %1132 = vdwg.mxu0
        %vm1133 = vcmask 519168
        %1134 = vst.msk [vmem:[%s180] sm:$0xf] %vm1133, %v1130
        %s1135 = scalar_lea.vmem %s0, 64
        %v1136 = vld [vmem:[%s1135] sm:$0xff]
        %v1137 = vld [vmem:[%s1135 + $0x8] sm:$0xff]
        %v1138 = vld [vmem:[%s1135 + $0x10] sm:$0xff]
        %v1139 = vld [vmem:[%s1135 + $0x18] sm:$0xff]
        %v1140 = vld [vmem:[%s1135 + $0x20] sm:$0xff]
        %v1141 = vld [vmem:[%s1135 + $0x28] sm:$0xff]
        %v1142 = vld [vmem:[%s1135 + $0x30] sm:$0xff]
        %v1143 = vld [vmem:[%s1135 + $0x38] sm:$0xff]
        %v1144 = vunpack.c.0.s8 %v1136
        %v1145 = vunpack.c.1.s8 %v1136
        %v1146 = vunpack.c.2.s8 %v1136
        %v1147 = vunpack.c.3.s8 %v1136
        %v1148 = vunpack.c.0.s8 %v1137
        %v1149 = vunpack.c.1.s8 %v1137
        %v1150 = vunpack.c.2.s8 %v1137
        %v1151 = vunpack.c.3.s8 %v1137
        %v1152 = vunpack.c.0.s8 %v1138
        %v1153 = vunpack.c.1.s8 %v1138
        %v1154 = vunpack.c.2.s8 %v1138
        %v1155 = vunpack.c.3.s8 %v1138
        %v1156 = vunpack.c.0.s8 %v1139
        %v1157 = vunpack.c.1.s8 %v1139
        %v1158 = vunpack.c.2.s8 %v1139
        %v1159 = vunpack.c.3.s8 %v1139
        %v1160 = vunpack.c.0.s8 %v1140
        %v1161 = vunpack.c.1.s8 %v1140
        %v1162 = vunpack.c.2.s8 %v1140
        %v1163 = vunpack.c.3.s8 %v1140
        %v1164 = vunpack.c.0.s8 %v1141
        %v1165 = vunpack.c.1.s8 %v1141
        %v1166 = vunpack.c.2.s8 %v1141
        %v1167 = vunpack.c.3.s8 %v1141
        %v1168 = vunpack.c.0.s8 %v1142
        %v1169 = vunpack.c.1.s8 %v1142
        %v1170 = vunpack.c.2.s8 %v1142
        %v1171 = vunpack.c.3.s8 %v1142
        %v1172 = vunpack.c.0.s8 %v1143
        %v1173 = vunpack.c.1.s8 %v1143
        %v1174 = vunpack.c.2.s8 %v1143
        %v1175 = vunpack.c.3.s8 %v1143
        %v1176 = vcvt.s32.f32 %v1144
        %v1177 = vcvt.s32.f32 %v1145
        %v1178 = vcvt.s32.f32 %v1146
        %v1179 = vcvt.s32.f32 %v1147
        %v1180 = vcvt.s32.f32 %v1148
        %v1181 = vcvt.s32.f32 %v1149
        %v1182 = vcvt.s32.f32 %v1150
        %v1183 = vcvt.s32.f32 %v1151
        %v1184 = vcvt.s32.f32 %v1152
        %v1185 = vcvt.s32.f32 %v1153
        %v1186 = vcvt.s32.f32 %v1154
        %v1187 = vcvt.s32.f32 %v1155
        %v1188 = vcvt.s32.f32 %v1156
        %v1189 = vcvt.s32.f32 %v1157
        %v1190 = vcvt.s32.f32 %v1158
        %v1191 = vcvt.s32.f32 %v1159
        %v1192 = vcvt.s32.f32 %v1160
        %v1193 = vcvt.s32.f32 %v1161
        %v1194 = vcvt.s32.f32 %v1162
        %v1195 = vcvt.s32.f32 %v1163
        %v1196 = vcvt.s32.f32 %v1164
        %v1197 = vcvt.s32.f32 %v1165
        %v1198 = vcvt.s32.f32 %v1166
        %v1199 = vcvt.s32.f32 %v1167
        %v1200 = vcvt.s32.f32 %v1168
        %v1201 = vcvt.s32.f32 %v1169
        %v1202 = vcvt.s32.f32 %v1170
        %v1203 = vcvt.s32.f32 %v1171
        %v1204 = vcvt.s32.f32 %v1172
        %v1205 = vcvt.s32.f32 %v1173
        %v1206 = vcvt.s32.f32 %v1174
        %v1207 = vcvt.s32.f32 %v1175
        %1208 = vmatprep.subr.mxu0 0.0
        %v1209 = vand.u32 %v1191, 4294901760
        %1210 = vmatpush1.msra.mxu0 %v1209
        %1211 = vmatprep.subr.mxu0 0.0
        %v1212 = vand.u32 %v1190, 4294901760
        %1213 = vmatpush1.msra.mxu0 %v1212
        %1214 = vmatprep.subr.mxu0 0.0
        %v1215 = vand.u32 %v1189, 4294901760
        %1216 = vmatpush1.msra.mxu0 %v1215
        %1217 = vmatprep.subr.mxu0 0.0
        %v1218 = vand.u32 %v1188, 4294901760
        %1219 = vmatpush1.msra.mxu0 %v1218
        %1220 = vmatprep.subr.mxu0 0.0
        %v1221 = vand.u32 %v1187, 4294901760
        %1222 = vmatpush1.msra.mxu0 %v1221
        %1223 = vmatprep.subr.mxu0 0.0
        %v1224 = vand.u32 %v1186, 4294901760
        %1225 = vmatpush1.msra.mxu0 %v1224
        %1226 = vmatprep.subr.mxu0 0.0
        %v1227 = vand.u32 %v1185, 4294901760
        %1228 = vmatpush1.msra.mxu0 %v1227
        %1229 = vmatprep.subr.mxu0 0.0
        %v1230 = vand.u32 %v1184, 4294901760
        %1231 = vmatpush1.msra.mxu0 %v1230
        %1232 = vmatprep.subr.mxu0 0.0
        %v1233 = vand.u32 %v1183, 4294901760
        %1234 = vmatpush1.msra.mxu0 %v1233
        %1235 = vmatprep.subr.mxu0 0.0
        %v1236 = vand.u32 %v1182, 4294901760
        %1237 = vmatpush1.msra.mxu0 %v1236
        %1238 = vmatprep.subr.mxu0 0.0
        %v1239 = vand.u32 %v1181, 4294901760
        %1240 = vmatpush1.msra.mxu0 %v1239
        %1241 = vmatprep.subr.mxu0 0.0
        %v1242 = vand.u32 %v1180, 4294901760
        %1243 = vmatpush1.msra.mxu0 %v1242
        %1244 = vmatprep.subr.mxu0 0.0
        %v1245 = vand.u32 %v1179, 4294901760
        %1246 = vmatpush1.msra.mxu0 %v1245
        %1247 = vmatprep.subr.mxu0 0.0
        %v1248 = vand.u32 %v1178, 4294901760
        %1249 = vmatpush1.msra.mxu0 %v1248
        %1250 = vmatprep.subr.mxu0 0.0
        %v1251 = vand.u32 %v1177, 4294901760
        %1252 = vmatpush1.msra.mxu0 %v1251
        %1253 = vmatprep.subr.mxu0 0.0
        %v1254 = vand.u32 %v1176, 4294901760
        %1255 = vmatpush1.msra.mxu0 %v1254
        %1256 = vmatprep.subr.mxu0 0.0
        %v1257 = vand.u32 %v1207, 4294901760
        %1258 = vmatpush2.msra.mxu0 %v1257
        %1259 = vmatprep.subr.mxu0 0.0
        %v1260 = vand.u32 %v1206, 4294901760
        %1261 = vmatpush2.msra.mxu0 %v1260
        %1262 = vmatprep.subr.mxu0 0.0
        %v1263 = vand.u32 %v1205, 4294901760
        %1264 = vmatpush2.msra.mxu0 %v1263
        %1265 = vmatprep.subr.mxu0 0.0
        %v1266 = vand.u32 %v1204, 4294901760
        %1267 = vmatpush2.msra.mxu0 %v1266
        %1268 = vmatprep.subr.mxu0 0.0
        %v1269 = vand.u32 %v1203, 4294901760
        %1270 = vmatpush2.msra.mxu0 %v1269
        %1271 = vmatprep.subr.mxu0 0.0
        %v1272 = vand.u32 %v1202, 4294901760
        %1273 = vmatpush2.msra.mxu0 %v1272
        %1274 = vmatprep.subr.mxu0 0.0
        %v1275 = vand.u32 %v1201, 4294901760
        %1276 = vmatpush2.msra.mxu0 %v1275
        %1277 = vmatprep.subr.mxu0 0.0
        %v1278 = vand.u32 %v1200, 4294901760
        %1279 = vmatpush2.msra.mxu0 %v1278
        %1280 = vmatprep.subr.mxu0 0.0
        %v1281 = vand.u32 %v1199, 4294901760
        %1282 = vmatpush2.msra.mxu0 %v1281
        %1283 = vmatprep.subr.mxu0 0.0
        %v1284 = vand.u32 %v1198, 4294901760
        %1285 = vmatpush2.msra.mxu0 %v1284
        %1286 = vmatprep.subr.mxu0 0.0
        %v1287 = vand.u32 %v1197, 4294901760
        %1288 = vmatpush2.msra.mxu0 %v1287
        %1289 = vmatprep.subr.mxu0 0.0
        %v1290 = vand.u32 %v1196, 4294901760
        %1291 = vmatpush2.msra.mxu0 %v1290
        %1292 = vmatprep.subr.mxu0 0.0
        %v1293 = vand.u32 %v1195, 4294901760
        %1294 = vmatpush2.msra.mxu0 %v1293
        %1295 = vmatprep.subr.mxu0 0.0
        %v1296 = vand.u32 %v1194, 4294901760
        %1297 = vmatpush2.msra.mxu0 %v1296
        %1298 = vmatprep.subr.mxu0 0.0
        %v1299 = vand.u32 %v1193, 4294901760
        %1300 = vmatpush2.msra.mxu0 %v1299
        %1301 = vmatprep.subr.mxu0 0.0
        %v1302 = vand.u32 %v1192, 4294901760
        %1303 = vmatpush2.msra.mxu0 %v1302
        %v1304 = vand.u32 %v269, 4294901760
        %v1305 = vsub.f32 %v269, %v1304
        %v1306 = vand.u32 %v1305, 4294901760
        %v1307 = vsub.f32 %v1305, %v1306
        %v1308 = vand.u32 %v1307, 4294901760
        %1309 = vmatprep.mubr.f32.mxu0 %v1308
        %v1310 = vand.u32 %v195, 4294901760
        %v1311 = vsub.f32 %v195, %v1310
        %v1312 = vand.u32 %v1311, 4294901760
        %v1313 = vsub.f32 %v1311, %v1312
        %v1314 = vand.u32 %v1313, 4294901760
        %1315 = vmatmul.mubr.f32.gmra.mxu0 %v1314
        %v1316 = vpop.f32.mrf.mxu0
        %v1317 = vadd.f32 0.0, %v1316
        %v1318 = vpop.f32.mrf.mxu0
        %1319 = vdwg.mxu0
        %1320 = vmatprep.subr.mxu0 0.0
        %v1321 = vand.u32 %v1191, 4294901760
        %v1322 = vsub.f32 %v1191, %v1321
        %v1323 = vand.u32 %v1322, 4294901760
        %v1324 = vsub.f32 %v1322, %v1323
        %v1325 = vand.u32 %v1324, 4294901760
        %1326 = vmatpush1.msra.mxu0 %v1325
        %1327 = vmatprep.subr.mxu0 0.0
        %v1328 = vand.u32 %v1190, 4294901760
        %v1329 = vsub.f32 %v1190, %v1328
        %v1330 = vand.u32 %v1329, 4294901760
        %v1331 = vsub.f32 %v1329, %v1330
        %v1332 = vand.u32 %v1331, 4294901760
        %1333 = vmatpush1.msra.mxu0 %v1332
        %1334 = vmatprep.subr.mxu0 0.0
        %v1335 = vand.u32 %v1189, 4294901760
        %v1336 = vsub.f32 %v1189, %v1335
        %v1337 = vand.u32 %v1336, 4294901760
        %v1338 = vsub.f32 %v1336, %v1337
        %v1339 = vand.u32 %v1338, 4294901760
        %1340 = vmatpush1.msra.mxu0 %v1339
        %1341 = vmatprep.subr.mxu0 0.0
        %v1342 = vand.u32 %v1188, 4294901760
        %v1343 = vsub.f32 %v1188, %v1342
        %v1344 = vand.u32 %v1343, 4294901760
        %v1345 = vsub.f32 %v1343, %v1344
        %v1346 = vand.u32 %v1345, 4294901760
        %1347 = vmatpush1.msra.mxu0 %v1346
        %1348 = vmatprep.subr.mxu0 0.0
        %v1349 = vand.u32 %v1187, 4294901760
        %v1350 = vsub.f32 %v1187, %v1349
        %v1351 = vand.u32 %v1350, 4294901760
        %v1352 = vsub.f32 %v1350, %v1351
        %v1353 = vand.u32 %v1352, 4294901760
        %1354 = vmatpush1.msra.mxu0 %v1353
        %1355 = vmatprep.subr.mxu0 0.0
        %v1356 = vand.u32 %v1186, 4294901760
        %v1357 = vsub.f32 %v1186, %v1356
        %v1358 = vand.u32 %v1357, 4294901760
        %v1359 = vsub.f32 %v1357, %v1358
        %v1360 = vand.u32 %v1359, 4294901760
        %1361 = vmatpush1.msra.mxu0 %v1360
        %1362 = vmatprep.subr.mxu0 0.0
        %v1363 = vand.u32 %v1185, 4294901760
        %v1364 = vsub.f32 %v1185, %v1363
        %v1365 = vand.u32 %v1364, 4294901760
        %v1366 = vsub.f32 %v1364, %v1365
        %v1367 = vand.u32 %v1366, 4294901760
        %1368 = vmatpush1.msra.mxu0 %v1367
        %1369 = vmatprep.subr.mxu0 0.0
        %v1370 = vand.u32 %v1184, 4294901760
        %v1371 = vsub.f32 %v1184, %v1370
        %v1372 = vand.u32 %v1371, 4294901760
        %v1373 = vsub.f32 %v1371, %v1372
        %v1374 = vand.u32 %v1373, 4294901760
        %1375 = vmatpush1.msra.mxu0 %v1374
        %1376 = vmatprep.subr.mxu0 0.0
        %v1377 = vand.u32 %v1183, 4294901760
        %v1378 = vsub.f32 %v1183, %v1377
        %v1379 = vand.u32 %v1378, 4294901760
        %v1380 = vsub.f32 %v1378, %v1379
        %v1381 = vand.u32 %v1380, 4294901760
        %1382 = vmatpush1.msra.mxu0 %v1381
        %1383 = vmatprep.subr.mxu0 0.0
        %v1384 = vand.u32 %v1182, 4294901760
        %v1385 = vsub.f32 %v1182, %v1384
        %v1386 = vand.u32 %v1385, 4294901760
        %v1387 = vsub.f32 %v1385, %v1386
        %v1388 = vand.u32 %v1387, 4294901760
        %1389 = vmatpush1.msra.mxu0 %v1388
        %1390 = vmatprep.subr.mxu0 0.0
        %v1391 = vand.u32 %v1181, 4294901760
        %v1392 = vsub.f32 %v1181, %v1391
        %v1393 = vand.u32 %v1392, 4294901760
        %v1394 = vsub.f32 %v1392, %v1393
        %v1395 = vand.u32 %v1394, 4294901760
        %1396 = vmatpush1.msra.mxu0 %v1395
        %1397 = vmatprep.subr.mxu0 0.0
        %v1398 = vand.u32 %v1180, 4294901760
        %v1399 = vsub.f32 %v1180, %v1398
        %v1400 = vand.u32 %v1399, 4294901760
        %v1401 = vsub.f32 %v1399, %v1400
        %v1402 = vand.u32 %v1401, 4294901760
        %1403 = vmatpush1.msra.mxu0 %v1402
        %1404 = vmatprep.subr.mxu0 0.0
        %v1405 = vand.u32 %v1179, 4294901760
        %v1406 = vsub.f32 %v1179, %v1405
        %v1407 = vand.u32 %v1406, 4294901760
        %v1408 = vsub.f32 %v1406, %v1407
        %v1409 = vand.u32 %v1408, 4294901760
        %1410 = vmatpush1.msra.mxu0 %v1409
        %1411 = vmatprep.subr.mxu0 0.0
        %v1412 = vand.u32 %v1178, 4294901760
        %v1413 = vsub.f32 %v1178, %v1412
        %v1414 = vand.u32 %v1413, 4294901760
        %v1415 = vsub.f32 %v1413, %v1414
        %v1416 = vand.u32 %v1415, 4294901760
        %1417 = vmatpush1.msra.mxu0 %v1416
        %1418 = vmatprep.subr.mxu0 0.0
        %v1419 = vand.u32 %v1177, 4294901760
        %v1420 = vsub.f32 %v1177, %v1419
        %v1421 = vand.u32 %v1420, 4294901760
        %v1422 = vsub.f32 %v1420, %v1421
        %v1423 = vand.u32 %v1422, 4294901760
        %1424 = vmatpush1.msra.mxu0 %v1423
        %1425 = vmatprep.subr.mxu0 0.0
        %v1426 = vand.u32 %v1176, 4294901760
        %v1427 = vsub.f32 %v1176, %v1426
        %v1428 = vand.u32 %v1427, 4294901760
        %v1429 = vsub.f32 %v1427, %v1428
        %v1430 = vand.u32 %v1429, 4294901760
        %1431 = vmatpush1.msra.mxu0 %v1430
        %1432 = vmatprep.subr.mxu0 0.0
        %v1433 = vand.u32 %v1207, 4294901760
        %v1434 = vsub.f32 %v1207, %v1433
        %v1435 = vand.u32 %v1434, 4294901760
        %v1436 = vsub.f32 %v1434, %v1435
        %v1437 = vand.u32 %v1436, 4294901760
        %1438 = vmatpush2.msra.mxu0 %v1437
        %1439 = vmatprep.subr.mxu0 0.0
        %v1440 = vand.u32 %v1206, 4294901760
        %v1441 = vsub.f32 %v1206, %v1440
        %v1442 = vand.u32 %v1441, 4294901760
        %v1443 = vsub.f32 %v1441, %v1442
        %v1444 = vand.u32 %v1443, 4294901760
        %1445 = vmatpush2.msra.mxu0 %v1444
        %1446 = vmatprep.subr.mxu0 0.0
        %v1447 = vand.u32 %v1205, 4294901760
        %v1448 = vsub.f32 %v1205, %v1447
        %v1449 = vand.u32 %v1448, 4294901760
        %v1450 = vsub.f32 %v1448, %v1449
        %v1451 = vand.u32 %v1450, 4294901760
        %1452 = vmatpush2.msra.mxu0 %v1451
        %1453 = vmatprep.subr.mxu0 0.0
        %v1454 = vand.u32 %v1204, 4294901760
        %v1455 = vsub.f32 %v1204, %v1454
        %v1456 = vand.u32 %v1455, 4294901760
        %v1457 = vsub.f32 %v1455, %v1456
        %v1458 = vand.u32 %v1457, 4294901760
        %1459 = vmatpush2.msra.mxu0 %v1458
        %1460 = vmatprep.subr.mxu0 0.0
        %v1461 = vand.u32 %v1203, 4294901760
        %v1462 = vsub.f32 %v1203, %v1461
        %v1463 = vand.u32 %v1462, 4294901760
        %v1464 = vsub.f32 %v1462, %v1463
        %v1465 = vand.u32 %v1464, 4294901760
        %1466 = vmatpush2.msra.mxu0 %v1465
        %1467 = vmatprep.subr.mxu0 0.0
        %v1468 = vand.u32 %v1202, 4294901760
        %v1469 = vsub.f32 %v1202, %v1468
        %v1470 = vand.u32 %v1469, 4294901760
        %v1471 = vsub.f32 %v1469, %v1470
        %v1472 = vand.u32 %v1471, 4294901760
        %1473 = vmatpush2.msra.mxu0 %v1472
        %1474 = vmatprep.subr.mxu0 0.0
        %v1475 = vand.u32 %v1201, 4294901760
        %v1476 = vsub.f32 %v1201, %v1475
        %v1477 = vand.u32 %v1476, 4294901760
        %v1478 = vsub.f32 %v1476, %v1477
        %v1479 = vand.u32 %v1478, 4294901760
        %1480 = vmatpush2.msra.mxu0 %v1479
        %1481 = vmatprep.subr.mxu0 0.0
        %v1482 = vand.u32 %v1200, 4294901760
        %v1483 = vsub.f32 %v1200, %v1482
        %v1484 = vand.u32 %v1483, 4294901760
        %v1485 = vsub.f32 %v1483, %v1484
        %v1486 = vand.u32 %v1485, 4294901760
        %1487 = vmatpush2.msra.mxu0 %v1486
        %1488 = vmatprep.subr.mxu0 0.0
        %v1489 = vand.u32 %v1199, 4294901760
        %v1490 = vsub.f32 %v1199, %v1489
        %v1491 = vand.u32 %v1490, 4294901760
        %v1492 = vsub.f32 %v1490, %v1491
        %v1493 = vand.u32 %v1492, 4294901760
        %1494 = vmatpush2.msra.mxu0 %v1493
        %1495 = vmatprep.subr.mxu0 0.0
        %v1496 = vand.u32 %v1198, 4294901760
        %v1497 = vsub.f32 %v1198, %v1496
        %v1498 = vand.u32 %v1497, 4294901760
        %v1499 = vsub.f32 %v1497, %v1498
        %v1500 = vand.u32 %v1499, 4294901760
        %1501 = vmatpush2.msra.mxu0 %v1500
        %1502 = vmatprep.subr.mxu0 0.0
        %v1503 = vand.u32 %v1197, 4294901760
        %v1504 = vsub.f32 %v1197, %v1503
        %v1505 = vand.u32 %v1504, 4294901760
        %v1506 = vsub.f32 %v1504, %v1505
        %v1507 = vand.u32 %v1506, 4294901760
        %1508 = vmatpush2.msra.mxu0 %v1507
        %1509 = vmatprep.subr.mxu0 0.0
        %v1510 = vand.u32 %v1196, 4294901760
        %v1511 = vsub.f32 %v1196, %v1510
        %v1512 = vand.u32 %v1511, 4294901760
        %v1513 = vsub.f32 %v1511, %v1512
        %v1514 = vand.u32 %v1513, 4294901760
        %1515 = vmatpush2.msra.mxu0 %v1514
        %1516 = vmatprep.subr.mxu0 0.0
        %v1517 = vand.u32 %v1195, 4294901760
        %v1518 = vsub.f32 %v1195, %v1517
        %v1519 = vand.u32 %v1518, 4294901760
        %v1520 = vsub.f32 %v1518, %v1519
        %v1521 = vand.u32 %v1520, 4294901760
        %1522 = vmatpush2.msra.mxu0 %v1521
        %1523 = vmatprep.subr.mxu0 0.0
        %v1524 = vand.u32 %v1194, 4294901760
        %v1525 = vsub.f32 %v1194, %v1524
        %v1526 = vand.u32 %v1525, 4294901760
        %v1527 = vsub.f32 %v1525, %v1526
        %v1528 = vand.u32 %v1527, 4294901760
        %1529 = vmatpush2.msra.mxu0 %v1528
        %1530 = vmatprep.subr.mxu0 0.0
        %v1531 = vand.u32 %v1193, 4294901760
        %v1532 = vsub.f32 %v1193, %v1531
        %v1533 = vand.u32 %v1532, 4294901760
        %v1534 = vsub.f32 %v1532, %v1533
        %v1535 = vand.u32 %v1534, 4294901760
        %1536 = vmatpush2.msra.mxu0 %v1535
        %1537 = vmatprep.subr.mxu0 0.0
        %v1538 = vand.u32 %v1192, 4294901760
        %v1539 = vsub.f32 %v1192, %v1538
        %v1540 = vand.u32 %v1539, 4294901760
        %v1541 = vsub.f32 %v1539, %v1540
        %v1542 = vand.u32 %v1541, 4294901760
        %1543 = vmatpush2.msra.mxu0 %v1542
        %v1544 = vand.u32 %v269, 4294901760
        %1545 = vmatprep.mubr.f32.mxu0 %v1544
        %v1546 = vand.u32 %v195, 4294901760
        %1547 = vmatmul.mubr.f32.gmra.mxu0 %v1546
        %v1548 = vpop.f32.mrf.mxu0
        %v1549 = vadd.f32 %v1317, %v1548
        %v1550 = vpop.f32.mrf.mxu0
        %1551 = vdwg.mxu0
        %1552 = vmatprep.subr.mxu0 0.0
        %v1553 = vand.u32 %v1191, 4294901760
        %v1554 = vsub.f32 %v1191, %v1553
        %1555 = vmatpush1.msra.mxu0 %v1554
        %1556 = vmatprep.subr.mxu0 0.0
        %v1557 = vand.u32 %v1190, 4294901760
        %v1558 = vsub.f32 %v1190, %v1557
        %1559 = vmatpush1.msra.mxu0 %v1558
        %1560 = vmatprep.subr.mxu0 0.0
        %v1561 = vand.u32 %v1189, 4294901760
        %v1562 = vsub.f32 %v1189, %v1561
        %1563 = vmatpush1.msra.mxu0 %v1562
        %1564 = vmatprep.subr.mxu0 0.0
        %v1565 = vand.u32 %v1188, 4294901760
        %v1566 = vsub.f32 %v1188, %v1565
        %1567 = vmatpush1.msra.mxu0 %v1566
        %1568 = vmatprep.subr.mxu0 0.0
        %v1569 = vand.u32 %v1187, 4294901760
        %v1570 = vsub.f32 %v1187, %v1569
        %1571 = vmatpush1.msra.mxu0 %v1570
        %1572 = vmatprep.subr.mxu0 0.0
        %v1573 = vand.u32 %v1186, 4294901760
        %v1574 = vsub.f32 %v1186, %v1573
        %1575 = vmatpush1.msra.mxu0 %v1574
        %1576 = vmatprep.subr.mxu0 0.0
        %v1577 = vand.u32 %v1185, 4294901760
        %v1578 = vsub.f32 %v1185, %v1577
        %1579 = vmatpush1.msra.mxu0 %v1578
        %1580 = vmatprep.subr.mxu0 0.0
        %v1581 = vand.u32 %v1184, 4294901760
        %v1582 = vsub.f32 %v1184, %v1581
        %1583 = vmatpush1.msra.mxu0 %v1582
        %1584 = vmatprep.subr.mxu0 0.0
        %v1585 = vand.u32 %v1183, 4294901760
        %v1586 = vsub.f32 %v1183, %v1585
        %1587 = vmatpush1.msra.mxu0 %v1586
        %1588 = vmatprep.subr.mxu0 0.0
        %v1589 = vand.u32 %v1182, 4294901760
        %v1590 = vsub.f32 %v1182, %v1589
        %1591 = vmatpush1.msra.mxu0 %v1590
        %1592 = vmatprep.subr.mxu0 0.0
        %v1593 = vand.u32 %v1181, 4294901760
        %v1594 = vsub.f32 %v1181, %v1593
        %1595 = vmatpush1.msra.mxu0 %v1594
        %1596 = vmatprep.subr.mxu0 0.0
        %v1597 = vand.u32 %v1180, 4294901760
        %v1598 = vsub.f32 %v1180, %v1597
        %1599 = vmatpush1.msra.mxu0 %v1598
        %1600 = vmatprep.subr.mxu0 0.0
        %v1601 = vand.u32 %v1179, 4294901760
        %v1602 = vsub.f32 %v1179, %v1601
        %1603 = vmatpush1.msra.mxu0 %v1602
        %1604 = vmatprep.subr.mxu0 0.0
        %v1605 = vand.u32 %v1178, 4294901760
        %v1606 = vsub.f32 %v1178, %v1605
        %1607 = vmatpush1.msra.mxu0 %v1606
        %1608 = vmatprep.subr.mxu0 0.0
        %v1609 = vand.u32 %v1177, 4294901760
        %v1610 = vsub.f32 %v1177, %v1609
        %1611 = vmatpush1.msra.mxu0 %v1610
        %1612 = vmatprep.subr.mxu0 0.0
        %v1613 = vand.u32 %v1176, 4294901760
        %v1614 = vsub.f32 %v1176, %v1613
        %1615 = vmatpush1.msra.mxu0 %v1614
        %1616 = vmatprep.subr.mxu0 0.0
        %v1617 = vand.u32 %v1207, 4294901760
        %v1618 = vsub.f32 %v1207, %v1617
        %1619 = vmatpush2.msra.mxu0 %v1618
        %1620 = vmatprep.subr.mxu0 0.0
        %v1621 = vand.u32 %v1206, 4294901760
        %v1622 = vsub.f32 %v1206, %v1621
        %1623 = vmatpush2.msra.mxu0 %v1622
        %1624 = vmatprep.subr.mxu0 0.0
        %v1625 = vand.u32 %v1205, 4294901760
        %v1626 = vsub.f32 %v1205, %v1625
        %1627 = vmatpush2.msra.mxu0 %v1626
        %1628 = vmatprep.subr.mxu0 0.0
        %v1629 = vand.u32 %v1204, 4294901760
        %v1630 = vsub.f32 %v1204, %v1629
        %1631 = vmatpush2.msra.mxu0 %v1630
        %1632 = vmatprep.subr.mxu0 0.0
        %v1633 = vand.u32 %v1203, 4294901760
        %v1634 = vsub.f32 %v1203, %v1633
        %1635 = vmatpush2.msra.mxu0 %v1634
        %1636 = vmatprep.subr.mxu0 0.0
        %v1637 = vand.u32 %v1202, 4294901760
        %v1638 = vsub.f32 %v1202, %v1637
        %1639 = vmatpush2.msra.mxu0 %v1638
        %1640 = vmatprep.subr.mxu0 0.0
        %v1641 = vand.u32 %v1201, 4294901760
        %v1642 = vsub.f32 %v1201, %v1641
        %1643 = vmatpush2.msra.mxu0 %v1642
        %1644 = vmatprep.subr.mxu0 0.0
        %v1645 = vand.u32 %v1200, 4294901760
        %v1646 = vsub.f32 %v1200, %v1645
        %1647 = vmatpush2.msra.mxu0 %v1646
        %1648 = vmatprep.subr.mxu0 0.0
        %v1649 = vand.u32 %v1199, 4294901760
        %v1650 = vsub.f32 %v1199, %v1649
        %1651 = vmatpush2.msra.mxu0 %v1650
        %1652 = vmatprep.subr.mxu0 0.0
        %v1653 = vand.u32 %v1198, 4294901760
        %v1654 = vsub.f32 %v1198, %v1653
        %1655 = vmatpush2.msra.mxu0 %v1654
        %1656 = vmatprep.subr.mxu0 0.0
        %v1657 = vand.u32 %v1197, 4294901760
        %v1658 = vsub.f32 %v1197, %v1657
        %1659 = vmatpush2.msra.mxu0 %v1658
        %1660 = vmatprep.subr.mxu0 0.0
        %v1661 = vand.u32 %v1196, 4294901760
        %v1662 = vsub.f32 %v1196, %v1661
        %1663 = vmatpush2.msra.mxu0 %v1662
        %1664 = vmatprep.subr.mxu0 0.0
        %v1665 = vand.u32 %v1195, 4294901760
        %v1666 = vsub.f32 %v1195, %v1665
        %1667 = vmatpush2.msra.mxu0 %v1666
        %1668 = vmatprep.subr.mxu0 0.0
        %v1669 = vand.u32 %v1194, 4294901760
        %v1670 = vsub.f32 %v1194, %v1669
        %1671 = vmatpush2.msra.mxu0 %v1670
        %1672 = vmatprep.subr.mxu0 0.0
        %v1673 = vand.u32 %v1193, 4294901760
        %v1674 = vsub.f32 %v1193, %v1673
        %1675 = vmatpush2.msra.mxu0 %v1674
        %1676 = vmatprep.subr.mxu0 0.0
        %v1677 = vand.u32 %v1192, 4294901760
        %v1678 = vsub.f32 %v1192, %v1677
        %1679 = vmatpush2.msra.mxu0 %v1678
        %v1680 = vand.u32 %v269, 4294901760
        %v1681 = vsub.f32 %v269, %v1680
        %1682 = vmatprep.mubr.f32.mxu0 %v1681
        %v1683 = vand.u32 %v195, 4294901760
        %v1684 = vsub.f32 %v195, %v1683
        %1685 = vmatmul.mubr.f32.gmra.mxu0 %v1684
        %v1686 = vpop.f32.mrf.mxu0
        %v1687 = vadd.f32 %v1549, %v1686
        %v1688 = vpop.f32.mrf.mxu0
        %1689 = vdwg.mxu0
        %1690 = vmatprep.subr.mxu0 0.0
        %v1691 = vand.u32 %v1191, 4294901760
        %1692 = vmatpush1.msra.mxu0 %v1691
        %1693 = vmatprep.subr.mxu0 0.0
        %v1694 = vand.u32 %v1190, 4294901760
        %1695 = vmatpush1.msra.mxu0 %v1694
        %1696 = vmatprep.subr.mxu0 0.0
        %v1697 = vand.u32 %v1189, 4294901760
        %1698 = vmatpush1.msra.mxu0 %v1697
        %1699 = vmatprep.subr.mxu0 0.0
        %v1700 = vand.u32 %v1188, 4294901760
        %1701 = vmatpush1.msra.mxu0 %v1700
        %1702 = vmatprep.subr.mxu0 0.0
        %v1703 = vand.u32 %v1187, 4294901760
        %1704 = vmatpush1.msra.mxu0 %v1703
        %1705 = vmatprep.subr.mxu0 0.0
        %v1706 = vand.u32 %v1186, 4294901760
        %1707 = vmatpush1.msra.mxu0 %v1706
        %1708 = vmatprep.subr.mxu0 0.0
        %v1709 = vand.u32 %v1185, 4294901760
        %1710 = vmatpush1.msra.mxu0 %v1709
        %1711 = vmatprep.subr.mxu0 0.0
        %v1712 = vand.u32 %v1184, 4294901760
        %1713 = vmatpush1.msra.mxu0 %v1712
        %1714 = vmatprep.subr.mxu0 0.0
        %v1715 = vand.u32 %v1183, 4294901760
        %1716 = vmatpush1.msra.mxu0 %v1715
        %1717 = vmatprep.subr.mxu0 0.0
        %v1718 = vand.u32 %v1182, 4294901760
        %1719 = vmatpush1.msra.mxu0 %v1718
        %1720 = vmatprep.subr.mxu0 0.0
        %v1721 = vand.u32 %v1181, 4294901760
        %1722 = vmatpush1.msra.mxu0 %v1721
        %1723 = vmatprep.subr.mxu0 0.0
        %v1724 = vand.u32 %v1180, 4294901760
        %1725 = vmatpush1.msra.mxu0 %v1724
        %1726 = vmatprep.subr.mxu0 0.0
        %v1727 = vand.u32 %v1179, 4294901760
        %1728 = vmatpush1.msra.mxu0 %v1727
        %1729 = vmatprep.subr.mxu0 0.0
        %v1730 = vand.u32 %v1178, 4294901760
        %1731 = vmatpush1.msra.mxu0 %v1730
        %1732 = vmatprep.subr.mxu0 0.0
        %v1733 = vand.u32 %v1177, 4294901760
        %1734 = vmatpush1.msra.mxu0 %v1733
        %1735 = vmatprep.subr.mxu0 0.0
        %v1736 = vand.u32 %v1176, 4294901760
        %1737 = vmatpush1.msra.mxu0 %v1736
        %1738 = vmatprep.subr.mxu0 0.0
        %v1739 = vand.u32 %v1207, 4294901760
        %1740 = vmatpush2.msra.mxu0 %v1739
        %1741 = vmatprep.subr.mxu0 0.0
        %v1742 = vand.u32 %v1206, 4294901760
        %1743 = vmatpush2.msra.mxu0 %v1742
        %1744 = vmatprep.subr.mxu0 0.0
        %v1745 = vand.u32 %v1205, 4294901760
        %1746 = vmatpush2.msra.mxu0 %v1745
        %1747 = vmatprep.subr.mxu0 0.0
        %v1748 = vand.u32 %v1204, 4294901760
        %1749 = vmatpush2.msra.mxu0 %v1748
        %1750 = vmatprep.subr.mxu0 0.0
        %v1751 = vand.u32 %v1203, 4294901760
        %1752 = vmatpush2.msra.mxu0 %v1751
        %1753 = vmatprep.subr.mxu0 0.0
        %v1754 = vand.u32 %v1202, 4294901760
        %1755 = vmatpush2.msra.mxu0 %v1754
        %1756 = vmatprep.subr.mxu0 0.0
        %v1757 = vand.u32 %v1201, 4294901760
        %1758 = vmatpush2.msra.mxu0 %v1757
        %1759 = vmatprep.subr.mxu0 0.0
        %v1760 = vand.u32 %v1200, 4294901760
        %1761 = vmatpush2.msra.mxu0 %v1760
        %1762 = vmatprep.subr.mxu0 0.0
        %v1763 = vand.u32 %v1199, 4294901760
        %1764 = vmatpush2.msra.mxu0 %v1763
        %1765 = vmatprep.subr.mxu0 0.0
        %v1766 = vand.u32 %v1198, 4294901760
        %1767 = vmatpush2.msra.mxu0 %v1766
        %1768 = vmatprep.subr.mxu0 0.0
        %v1769 = vand.u32 %v1197, 4294901760
        %1770 = vmatpush2.msra.mxu0 %v1769
        %1771 = vmatprep.subr.mxu0 0.0
        %v1772 = vand.u32 %v1196, 4294901760
        %1773 = vmatpush2.msra.mxu0 %v1772
        %1774 = vmatprep.subr.mxu0 0.0
        %v1775 = vand.u32 %v1195, 4294901760
        %1776 = vmatpush2.msra.mxu0 %v1775
        %1777 = vmatprep.subr.mxu0 0.0
        %v1778 = vand.u32 %v1194, 4294901760
        %1779 = vmatpush2.msra.mxu0 %v1778
        %1780 = vmatprep.subr.mxu0 0.0
        %v1781 = vand.u32 %v1193, 4294901760
        %1782 = vmatpush2.msra.mxu0 %v1781
        %1783 = vmatprep.subr.mxu0 0.0
        %v1784 = vand.u32 %v1192, 4294901760
        %1785 = vmatpush2.msra.mxu0 %v1784
        %v1786 = vand.u32 %v269, 4294901760
        %v1787 = vsub.f32 %v269, %v1786
        %v1788 = vand.u32 %v1787, 4294901760
        %1789 = vmatprep.mubr.f32.mxu0 %v1788
        %v1790 = vand.u32 %v195, 4294901760
        %v1791 = vsub.f32 %v195, %v1790
        %v1792 = vand.u32 %v1791, 4294901760
        %1793 = vmatmul.mubr.f32.gmra.mxu0 %v1792
        %v1794 = vpop.f32.mrf.mxu0
        %v1795 = vadd.f32 %v1687, %v1794
        %v1796 = vpop.f32.mrf.mxu0
        %1797 = vdwg.mxu0
        %1798 = vmatprep.subr.mxu0 0.0
        %v1799 = vand.u32 %v1191, 4294901760
        %v1800 = vsub.f32 %v1191, %v1799
        %v1801 = vand.u32 %v1800, 4294901760
        %1802 = vmatpush1.msra.mxu0 %v1801
        %1803 = vmatprep.subr.mxu0 0.0
        %v1804 = vand.u32 %v1190, 4294901760
        %v1805 = vsub.f32 %v1190, %v1804
        %v1806 = vand.u32 %v1805, 4294901760
        %1807 = vmatpush1.msra.mxu0 %v1806
        %1808 = vmatprep.subr.mxu0 0.0
        %v1809 = vand.u32 %v1189, 4294901760
        %v1810 = vsub.f32 %v1189, %v1809
        %v1811 = vand.u32 %v1810, 4294901760
        %1812 = vmatpush1.msra.mxu0 %v1811
        %1813 = vmatprep.subr.mxu0 0.0
        %v1814 = vand.u32 %v1188, 4294901760
        %v1815 = vsub.f32 %v1188, %v1814
        %v1816 = vand.u32 %v1815, 4294901760
        %1817 = vmatpush1.msra.mxu0 %v1816
        %1818 = vmatprep.subr.mxu0 0.0
        %v1819 = vand.u32 %v1187, 4294901760
        %v1820 = vsub.f32 %v1187, %v1819
        %v1821 = vand.u32 %v1820, 4294901760
        %1822 = vmatpush1.msra.mxu0 %v1821
        %1823 = vmatprep.subr.mxu0 0.0
        %v1824 = vand.u32 %v1186, 4294901760
        %v1825 = vsub.f32 %v1186, %v1824
        %v1826 = vand.u32 %v1825, 4294901760
        %1827 = vmatpush1.msra.mxu0 %v1826
        %1828 = vmatprep.subr.mxu0 0.0
        %v1829 = vand.u32 %v1185, 4294901760
        %v1830 = vsub.f32 %v1185, %v1829
        %v1831 = vand.u32 %v1830, 4294901760
        %1832 = vmatpush1.msra.mxu0 %v1831
        %1833 = vmatprep.subr.mxu0 0.0
        %v1834 = vand.u32 %v1184, 4294901760
        %v1835 = vsub.f32 %v1184, %v1834
        %v1836 = vand.u32 %v1835, 4294901760
        %1837 = vmatpush1.msra.mxu0 %v1836
        %1838 = vmatprep.subr.mxu0 0.0
        %v1839 = vand.u32 %v1183, 4294901760
        %v1840 = vsub.f32 %v1183, %v1839
        %v1841 = vand.u32 %v1840, 4294901760
        %1842 = vmatpush1.msra.mxu0 %v1841
        %1843 = vmatprep.subr.mxu0 0.0
        %v1844 = vand.u32 %v1182, 4294901760
        %v1845 = vsub.f32 %v1182, %v1844
        %v1846 = vand.u32 %v1845, 4294901760
        %1847 = vmatpush1.msra.mxu0 %v1846
        %1848 = vmatprep.subr.mxu0 0.0
        %v1849 = vand.u32 %v1181, 4294901760
        %v1850 = vsub.f32 %v1181, %v1849
        %v1851 = vand.u32 %v1850, 4294901760
        %1852 = vmatpush1.msra.mxu0 %v1851
        %1853 = vmatprep.subr.mxu0 0.0
        %v1854 = vand.u32 %v1180, 4294901760
        %v1855 = vsub.f32 %v1180, %v1854
        %v1856 = vand.u32 %v1855, 4294901760
        %1857 = vmatpush1.msra.mxu0 %v1856
        %1858 = vmatprep.subr.mxu0 0.0
        %v1859 = vand.u32 %v1179, 4294901760
        %v1860 = vsub.f32 %v1179, %v1859
        %v1861 = vand.u32 %v1860, 4294901760
        %1862 = vmatpush1.msra.mxu0 %v1861
        %1863 = vmatprep.subr.mxu0 0.0
        %v1864 = vand.u32 %v1178, 4294901760
        %v1865 = vsub.f32 %v1178, %v1864
        %v1866 = vand.u32 %v1865, 4294901760
        %1867 = vmatpush1.msra.mxu0 %v1866
        %1868 = vmatprep.subr.mxu0 0.0
        %v1869 = vand.u32 %v1177, 4294901760
        %v1870 = vsub.f32 %v1177, %v1869
        %v1871 = vand.u32 %v1870, 4294901760
        %1872 = vmatpush1.msra.mxu0 %v1871
        %1873 = vmatprep.subr.mxu0 0.0
        %v1874 = vand.u32 %v1176, 4294901760
        %v1875 = vsub.f32 %v1176, %v1874
        %v1876 = vand.u32 %v1875, 4294901760
        %1877 = vmatpush1.msra.mxu0 %v1876
        %1878 = vmatprep.subr.mxu0 0.0
        %v1879 = vand.u32 %v1207, 4294901760
        %v1880 = vsub.f32 %v1207, %v1879
        %v1881 = vand.u32 %v1880, 4294901760
        %1882 = vmatpush2.msra.mxu0 %v1881
        %1883 = vmatprep.subr.mxu0 0.0
        %v1884 = vand.u32 %v1206, 4294901760
        %v1885 = vsub.f32 %v1206, %v1884
        %v1886 = vand.u32 %v1885, 4294901760
        %1887 = vmatpush2.msra.mxu0 %v1886
        %1888 = vmatprep.subr.mxu0 0.0
        %v1889 = vand.u32 %v1205, 4294901760
        %v1890 = vsub.f32 %v1205, %v1889
        %v1891 = vand.u32 %v1890, 4294901760
        %1892 = vmatpush2.msra.mxu0 %v1891
        %1893 = vmatprep.subr.mxu0 0.0
        %v1894 = vand.u32 %v1204, 4294901760
        %v1895 = vsub.f32 %v1204, %v1894
        %v1896 = vand.u32 %v1895, 4294901760
        %1897 = vmatpush2.msra.mxu0 %v1896
        %1898 = vmatprep.subr.mxu0 0.0
        %v1899 = vand.u32 %v1203, 4294901760
        %v1900 = vsub.f32 %v1203, %v1899
        %v1901 = vand.u32 %v1900, 4294901760
        %1902 = vmatpush2.msra.mxu0 %v1901
        %1903 = vmatprep.subr.mxu0 0.0
        %v1904 = vand.u32 %v1202, 4294901760
        %v1905 = vsub.f32 %v1202, %v1904
        %v1906 = vand.u32 %v1905, 4294901760
        %1907 = vmatpush2.msra.mxu0 %v1906
        %1908 = vmatprep.subr.mxu0 0.0
        %v1909 = vand.u32 %v1201, 4294901760
        %v1910 = vsub.f32 %v1201, %v1909
        %v1911 = vand.u32 %v1910, 4294901760
        %1912 = vmatpush2.msra.mxu0 %v1911
        %1913 = vmatprep.subr.mxu0 0.0
        %v1914 = vand.u32 %v1200, 4294901760
        %v1915 = vsub.f32 %v1200, %v1914
        %v1916 = vand.u32 %v1915, 4294901760
        %1917 = vmatpush2.msra.mxu0 %v1916
        %1918 = vmatprep.subr.mxu0 0.0
        %v1919 = vand.u32 %v1199, 4294901760
        %v1920 = vsub.f32 %v1199, %v1919
        %v1921 = vand.u32 %v1920, 4294901760
        %1922 = vmatpush2.msra.mxu0 %v1921
        %1923 = vmatprep.subr.mxu0 0.0
        %v1924 = vand.u32 %v1198, 4294901760
        %v1925 = vsub.f32 %v1198, %v1924
        %v1926 = vand.u32 %v1925, 4294901760
        %1927 = vmatpush2.msra.mxu0 %v1926
        %1928 = vmatprep.subr.mxu0 0.0
        %v1929 = vand.u32 %v1197, 4294901760
        %v1930 = vsub.f32 %v1197, %v1929
        %v1931 = vand.u32 %v1930, 4294901760
        %1932 = vmatpush2.msra.mxu0 %v1931
        %1933 = vmatprep.subr.mxu0 0.0
        %v1934 = vand.u32 %v1196, 4294901760
        %v1935 = vsub.f32 %v1196, %v1934
        %v1936 = vand.u32 %v1935, 4294901760
        %1937 = vmatpush2.msra.mxu0 %v1936
        %1938 = vmatprep.subr.mxu0 0.0
        %v1939 = vand.u32 %v1195, 4294901760
        %v1940 = vsub.f32 %v1195, %v1939
        %v1941 = vand.u32 %v1940, 4294901760
        %1942 = vmatpush2.msra.mxu0 %v1941
        %1943 = vmatprep.subr.mxu0 0.0
        %v1944 = vand.u32 %v1194, 4294901760
        %v1945 = vsub.f32 %v1194, %v1944
        %v1946 = vand.u32 %v1945, 4294901760
        %1947 = vmatpush2.msra.mxu0 %v1946
        %1948 = vmatprep.subr.mxu0 0.0
        %v1949 = vand.u32 %v1193, 4294901760
        %v1950 = vsub.f32 %v1193, %v1949
        %v1951 = vand.u32 %v1950, 4294901760
        %1952 = vmatpush2.msra.mxu0 %v1951
        %1953 = vmatprep.subr.mxu0 0.0
        %v1954 = vand.u32 %v1192, 4294901760
        %v1955 = vsub.f32 %v1192, %v1954
        %v1956 = vand.u32 %v1955, 4294901760
        %1957 = vmatpush2.msra.mxu0 %v1956
        %v1958 = vand.u32 %v269, 4294901760
        %1959 = vmatprep.mubr.f32.mxu0 %v1958
        %v1960 = vand.u32 %v195, 4294901760
        %1961 = vmatmul.mubr.f32.gmra.mxu0 %v1960
        %v1962 = vpop.f32.mrf.mxu0
        %v1963 = vadd.f32 %v1795, %v1962
        %v1964 = vpop.f32.mrf.mxu0
        %1965 = vdwg.mxu0
        %1966 = vmatprep.subr.mxu0 0.0
        %v1967 = vand.u32 %v1191, 4294901760
        %1968 = vmatpush1.msra.mxu0 %v1967
        %1969 = vmatprep.subr.mxu0 0.0
        %v1970 = vand.u32 %v1190, 4294901760
        %1971 = vmatpush1.msra.mxu0 %v1970
        %1972 = vmatprep.subr.mxu0 0.0
        %v1973 = vand.u32 %v1189, 4294901760
        %1974 = vmatpush1.msra.mxu0 %v1973
        %1975 = vmatprep.subr.mxu0 0.0
        %v1976 = vand.u32 %v1188, 4294901760
        %1977 = vmatpush1.msra.mxu0 %v1976
        %1978 = vmatprep.subr.mxu0 0.0
        %v1979 = vand.u32 %v1187, 4294901760
        %1980 = vmatpush1.msra.mxu0 %v1979
        %1981 = vmatprep.subr.mxu0 0.0
        %v1982 = vand.u32 %v1186, 4294901760
        %1983 = vmatpush1.msra.mxu0 %v1982
        %1984 = vmatprep.subr.mxu0 0.0
        %v1985 = vand.u32 %v1185, 4294901760
        %1986 = vmatpush1.msra.mxu0 %v1985
        %1987 = vmatprep.subr.mxu0 0.0
        %v1988 = vand.u32 %v1184, 4294901760
        %1989 = vmatpush1.msra.mxu0 %v1988
        %1990 = vmatprep.subr.mxu0 0.0
        %v1991 = vand.u32 %v1183, 4294901760
        %1992 = vmatpush1.msra.mxu0 %v1991
        %1993 = vmatprep.subr.mxu0 0.0
        %v1994 = vand.u32 %v1182, 4294901760
        %1995 = vmatpush1.msra.mxu0 %v1994
        %1996 = vmatprep.subr.mxu0 0.0
        %v1997 = vand.u32 %v1181, 4294901760
        %1998 = vmatpush1.msra.mxu0 %v1997
        %1999 = vmatprep.subr.mxu0 0.0
        %v2000 = vand.u32 %v1180, 4294901760
        %2001 = vmatpush1.msra.mxu0 %v2000
        %2002 = vmatprep.subr.mxu0 0.0
        %v2003 = vand.u32 %v1179, 4294901760
        %2004 = vmatpush1.msra.mxu0 %v2003
        %2005 = vmatprep.subr.mxu0 0.0
        %v2006 = vand.u32 %v1178, 4294901760
        %2007 = vmatpush1.msra.mxu0 %v2006
        %2008 = vmatprep.subr.mxu0 0.0
        %v2009 = vand.u32 %v1177, 4294901760
        %2010 = vmatpush1.msra.mxu0 %v2009
        %2011 = vmatprep.subr.mxu0 0.0
        %v2012 = vand.u32 %v1176, 4294901760
        %2013 = vmatpush1.msra.mxu0 %v2012
        %2014 = vmatprep.subr.mxu0 0.0
        %v2015 = vand.u32 %v1207, 4294901760
        %2016 = vmatpush2.msra.mxu0 %v2015
        %2017 = vmatprep.subr.mxu0 0.0
        %v2018 = vand.u32 %v1206, 4294901760
        %2019 = vmatpush2.msra.mxu0 %v2018
        %2020 = vmatprep.subr.mxu0 0.0
        %v2021 = vand.u32 %v1205, 4294901760
        %2022 = vmatpush2.msra.mxu0 %v2021
        %2023 = vmatprep.subr.mxu0 0.0
        %v2024 = vand.u32 %v1204, 4294901760
        %2025 = vmatpush2.msra.mxu0 %v2024
        %2026 = vmatprep.subr.mxu0 0.0
        %v2027 = vand.u32 %v1203, 4294901760
        %2028 = vmatpush2.msra.mxu0 %v2027
        %2029 = vmatprep.subr.mxu0 0.0
        %v2030 = vand.u32 %v1202, 4294901760
        %2031 = vmatpush2.msra.mxu0 %v2030
        %2032 = vmatprep.subr.mxu0 0.0
        %v2033 = vand.u32 %v1201, 4294901760
        %2034 = vmatpush2.msra.mxu0 %v2033
        %2035 = vmatprep.subr.mxu0 0.0
        %v2036 = vand.u32 %v1200, 4294901760
        %2037 = vmatpush2.msra.mxu0 %v2036
        %2038 = vmatprep.subr.mxu0 0.0
        %v2039 = vand.u32 %v1199, 4294901760
        %2040 = vmatpush2.msra.mxu0 %v2039
        %2041 = vmatprep.subr.mxu0 0.0
        %v2042 = vand.u32 %v1198, 4294901760
        %2043 = vmatpush2.msra.mxu0 %v2042
        %2044 = vmatprep.subr.mxu0 0.0
        %v2045 = vand.u32 %v1197, 4294901760
        %2046 = vmatpush2.msra.mxu0 %v2045
        %2047 = vmatprep.subr.mxu0 0.0
        %v2048 = vand.u32 %v1196, 4294901760
        %2049 = vmatpush2.msra.mxu0 %v2048
        %2050 = vmatprep.subr.mxu0 0.0
        %v2051 = vand.u32 %v1195, 4294901760
        %2052 = vmatpush2.msra.mxu0 %v2051
        %2053 = vmatprep.subr.mxu0 0.0
        %v2054 = vand.u32 %v1194, 4294901760
        %2055 = vmatpush2.msra.mxu0 %v2054
        %2056 = vmatprep.subr.mxu0 0.0
        %v2057 = vand.u32 %v1193, 4294901760
        %2058 = vmatpush2.msra.mxu0 %v2057
        %2059 = vmatprep.subr.mxu0 0.0
        %v2060 = vand.u32 %v1192, 4294901760
        %2061 = vmatpush2.msra.mxu0 %v2060
        %v2062 = vand.u32 %v269, 4294901760
        %2063 = vmatprep.mubr.f32.mxu0 %v2062
        %v2064 = vand.u32 %v195, 4294901760
        %2065 = vmatmul.mubr.f32.gmra.mxu0 %v2064
        %v2066 = vpop.f32.mrf.mxu0
        %v2067 = vadd.f32 %v1963, %v2066
        %v2068 = vpop.f32.mrf.mxu0
        %2069 = vdwg.mxu0
        %s2070 = scalar_lea.vmem %s180, 4 [#allocation2]
        %2071 = vst.msk [vmem:[%s2070] sm:$0xf] %vm1133, %v2067
        %s2072 = scalar_lea.vmem %s0, 128
        %v2073 = vld [vmem:[%s2072] sm:$0xff]
        %v2074 = vld [vmem:[%s2072 + $0x8] sm:$0xff]
        %v2075 = vld [vmem:[%s2072 + $0x10] sm:$0xff]
        %v2076 = vld [vmem:[%s2072 + $0x18] sm:$0xff]
        %v2077 = vld [vmem:[%s2072 + $0x20] sm:$0xff]
        %v2078 = vld [vmem:[%s2072 + $0x28] sm:$0xff]
        %v2079 = vld [vmem:[%s2072 + $0x30] sm:$0xff]
        %v2080 = vld [vmem:[%s2072 + $0x38] sm:$0xff]
        %v2081 = vunpack.c.0.s8 %v2073
        %v2082 = vunpack.c.1.s8 %v2073
        %v2083 = vunpack.c.2.s8 %v2073
        %v2084 = vunpack.c.3.s8 %v2073
        %v2085 = vunpack.c.0.s8 %v2074
        %v2086 = vunpack.c.1.s8 %v2074
        %v2087 = vunpack.c.2.s8 %v2074
        %v2088 = vunpack.c.3.s8 %v2074
        %v2089 = vunpack.c.0.s8 %v2075
        %v2090 = vunpack.c.1.s8 %v2075
        %v2091 = vunpack.c.2.s8 %v2075
        %v2092 = vunpack.c.3.s8 %v2075
        %v2093 = vunpack.c.0.s8 %v2076
        %v2094 = vunpack.c.1.s8 %v2076
        %v2095 = vunpack.c.2.s8 %v2076
        %v2096 = vunpack.c.3.s8 %v2076
        %v2097 = vunpack.c.0.s8 %v2077
        %v2098 = vunpack.c.1.s8 %v2077
        %v2099 = vunpack.c.2.s8 %v2077
        %v2100 = vunpack.c.3.s8 %v2077
        %v2101 = vunpack.c.0.s8 %v2078
        %v2102 = vunpack.c.1.s8 %v2078
        %v2103 = vunpack.c.2.s8 %v2078
        %v2104 = vunpack.c.3.s8 %v2078
        %v2105 = vunpack.c.0.s8 %v2079
        %v2106 = vunpack.c.1.s8 %v2079
        %v2107 = vunpack.c.2.s8 %v2079
        %v2108 = vunpack.c.3.s8 %v2079
        %v2109 = vunpack.c.0.s8 %v2080
        %v2110 = vunpack.c.1.s8 %v2080
        %v2111 = vunpack.c.2.s8 %v2080
        %v2112 = vunpack.c.3.s8 %v2080
        %v2113 = vcvt.s32.f32 %v2081
        %v2114 = vcvt.s32.f32 %v2082
        %v2115 = vcvt.s32.f32 %v2083
        %v2116 = vcvt.s32.f32 %v2084
        %v2117 = vcvt.s32.f32 %v2085
        %v2118 = vcvt.s32.f32 %v2086
        %v2119 = vcvt.s32.f32 %v2087
        %v2120 = vcvt.s32.f32 %v2088
        %v2121 = vcvt.s32.f32 %v2089
        %v2122 = vcvt.s32.f32 %v2090
        %v2123 = vcvt.s32.f32 %v2091
        %v2124 = vcvt.s32.f32 %v2092
        %v2125 = vcvt.s32.f32 %v2093
        %v2126 = vcvt.s32.f32 %v2094
        %v2127 = vcvt.s32.f32 %v2095
        %v2128 = vcvt.s32.f32 %v2096
        %v2129 = vcvt.s32.f32 %v2097
        %v2130 = vcvt.s32.f32 %v2098
        %v2131 = vcvt.s32.f32 %v2099
        %v2132 = vcvt.s32.f32 %v2100
        %v2133 = vcvt.s32.f32 %v2101
        %v2134 = vcvt.s32.f32 %v2102
        %v2135 = vcvt.s32.f32 %v2103
        %v2136 = vcvt.s32.f32 %v2104
        %v2137 = vcvt.s32.f32 %v2105
        %v2138 = vcvt.s32.f32 %v2106
        %v2139 = vcvt.s32.f32 %v2107
        %v2140 = vcvt.s32.f32 %v2108
        %v2141 = vcvt.s32.f32 %v2109
        %v2142 = vcvt.s32.f32 %v2110
        %v2143 = vcvt.s32.f32 %v2111
        %v2144 = vcvt.s32.f32 %v2112
        %2145 = vmatprep.subr.mxu0 0.0
        %v2146 = vand.u32 %v2128, 4294901760
        %2147 = vmatpush1.msra.mxu0 %v2146
        %2148 = vmatprep.subr.mxu0 0.0
        %v2149 = vand.u32 %v2127, 4294901760
        %2150 = vmatpush1.msra.mxu0 %v2149
        %2151 = vmatprep.subr.mxu0 0.0
        %v2152 = vand.u32 %v2126, 4294901760
        %2153 = vmatpush1.msra.mxu0 %v2152
        %2154 = vmatprep.subr.mxu0 0.0
        %v2155 = vand.u32 %v2125, 4294901760
        %2156 = vmatpush1.msra.mxu0 %v2155
        %2157 = vmatprep.subr.mxu0 0.0
        %v2158 = vand.u32 %v2124, 4294901760
        %2159 = vmatpush1.msra.mxu0 %v2158
        %2160 = vmatprep.subr.mxu0 0.0
        %v2161 = vand.u32 %v2123, 4294901760
        %2162 = vmatpush1.msra.mxu0 %v2161
        %2163 = vmatprep.subr.mxu0 0.0
        %v2164 = vand.u32 %v2122, 4294901760
        %2165 = vmatpush1.msra.mxu0 %v2164
        %2166 = vmatprep.subr.mxu0 0.0
        %v2167 = vand.u32 %v2121, 4294901760
        %2168 = vmatpush1.msra.mxu0 %v2167
        %2169 = vmatprep.subr.mxu0 0.0
        %v2170 = vand.u32 %v2120, 4294901760
        %2171 = vmatpush1.msra.mxu0 %v2170
        %2172 = vmatprep.subr.mxu0 0.0
        %v2173 = vand.u32 %v2119, 4294901760
        %2174 = vmatpush1.msra.mxu0 %v2173
        %2175 = vmatprep.subr.mxu0 0.0
        %v2176 = vand.u32 %v2118, 4294901760
        %2177 = vmatpush1.msra.mxu0 %v2176
        %2178 = vmatprep.subr.mxu0 0.0
        %v2179 = vand.u32 %v2117, 4294901760
        %2180 = vmatpush1.msra.mxu0 %v2179
        %2181 = vmatprep.subr.mxu0 0.0
        %v2182 = vand.u32 %v2116, 4294901760
        %2183 = vmatpush1.msra.mxu0 %v2182
        %2184 = vmatprep.subr.mxu0 0.0
        %v2185 = vand.u32 %v2115, 4294901760
        %2186 = vmatpush1.msra.mxu0 %v2185
        %2187 = vmatprep.subr.mxu0 0.0
        %v2188 = vand.u32 %v2114, 4294901760
        %2189 = vmatpush1.msra.mxu0 %v2188
        %2190 = vmatprep.subr.mxu0 0.0
        %v2191 = vand.u32 %v2113, 4294901760
        %2192 = vmatpush1.msra.mxu0 %v2191
        %2193 = vmatprep.subr.mxu0 0.0
        %v2194 = vand.u32 %v2144, 4294901760
        %2195 = vmatpush2.msra.mxu0 %v2194
        %2196 = vmatprep.subr.mxu0 0.0
        %v2197 = vand.u32 %v2143, 4294901760
        %2198 = vmatpush2.msra.mxu0 %v2197
        %2199 = vmatprep.subr.mxu0 0.0
        %v2200 = vand.u32 %v2142, 4294901760
        %2201 = vmatpush2.msra.mxu0 %v2200
        %2202 = vmatprep.subr.mxu0 0.0
        %v2203 = vand.u32 %v2141, 4294901760
        %2204 = vmatpush2.msra.mxu0 %v2203
        %2205 = vmatprep.subr.mxu0 0.0
        %v2206 = vand.u32 %v2140, 4294901760
        %2207 = vmatpush2.msra.mxu0 %v2206
        %2208 = vmatprep.subr.mxu0 0.0
        %v2209 = vand.u32 %v2139, 4294901760
        %2210 = vmatpush2.msra.mxu0 %v2209
        %2211 = vmatprep.subr.mxu0 0.0
        %v2212 = vand.u32 %v2138, 4294901760
        %2213 = vmatpush2.msra.mxu0 %v2212
        %2214 = vmatprep.subr.mxu0 0.0
        %v2215 = vand.u32 %v2137, 4294901760
        %2216 = vmatpush2.msra.mxu0 %v2215
        %2217 = vmatprep.subr.mxu0 0.0
        %v2218 = vand.u32 %v2136, 4294901760
        %2219 = vmatpush2.msra.mxu0 %v2218
        %2220 = vmatprep.subr.mxu0 0.0
        %v2221 = vand.u32 %v2135, 4294901760
        %2222 = vmatpush2.msra.mxu0 %v2221
        %2223 = vmatprep.subr.mxu0 0.0
        %v2224 = vand.u32 %v2134, 4294901760
        %2225 = vmatpush2.msra.mxu0 %v2224
        %2226 = vmatprep.subr.mxu0 0.0
        %v2227 = vand.u32 %v2133, 4294901760
        %2228 = vmatpush2.msra.mxu0 %v2227
        %2229 = vmatprep.subr.mxu0 0.0
        %v2230 = vand.u32 %v2132, 4294901760
        %2231 = vmatpush2.msra.mxu0 %v2230
        %2232 = vmatprep.subr.mxu0 0.0
        %v2233 = vand.u32 %v2131, 4294901760
        %2234 = vmatpush2.msra.mxu0 %v2233
        %2235 = vmatprep.subr.mxu0 0.0
        %v2236 = vand.u32 %v2130, 4294901760
        %2237 = vmatpush2.msra.mxu0 %v2236
        %2238 = vmatprep.subr.mxu0 0.0
        %v2239 = vand.u32 %v2129, 4294901760
        %2240 = vmatpush2.msra.mxu0 %v2239
        %v2241 = vand.u32 %v269, 4294901760
        %v2242 = vsub.f32 %v269, %v2241
        %v2243 = vand.u32 %v2242, 4294901760
        %v2244 = vsub.f32 %v2242, %v2243
        %v2245 = vand.u32 %v2244, 4294901760
        %2246 = vmatprep.mubr.f32.mxu0 %v2245
        %v2247 = vand.u32 %v195, 4294901760
        %v2248 = vsub.f32 %v195, %v2247
        %v2249 = vand.u32 %v2248, 4294901760
        %v2250 = vsub.f32 %v2248, %v2249
        %v2251 = vand.u32 %v2250, 4294901760
        %2252 = vmatmul.mubr.f32.gmra.mxu0 %v2251
        %v2253 = vpop.f32.mrf.mxu0
        %v2254 = vadd.f32 0.0, %v2253
        %v2255 = vpop.f32.mrf.mxu0
        %2256 = vdwg.mxu0
        %2257 = vmatprep.subr.mxu0 0.0
        %v2258 = vand.u32 %v2128, 4294901760
        %v2259 = vsub.f32 %v2128, %v2258
        %v2260 = vand.u32 %v2259, 4294901760
        %v2261 = vsub.f32 %v2259, %v2260
        %v2262 = vand.u32 %v2261, 4294901760
        %2263 = vmatpush1.msra.mxu0 %v2262
        %2264 = vmatprep.subr.mxu0 0.0
        %v2265 = vand.u32 %v2127, 4294901760
        %v2266 = vsub.f32 %v2127, %v2265
        %v2267 = vand.u32 %v2266, 4294901760
        %v2268 = vsub.f32 %v2266, %v2267
        %v2269 = vand.u32 %v2268, 4294901760
        %2270 = vmatpush1.msra.mxu0 %v2269
        %2271 = vmatprep.subr.mxu0 0.0
        %v2272 = vand.u32 %v2126, 4294901760
        %v2273 = vsub.f32 %v2126, %v2272
        %v2274 = vand.u32 %v2273, 4294901760
        %v2275 = vsub.f32 %v2273, %v2274
        %v2276 = vand.u32 %v2275, 4294901760
        %2277 = vmatpush1.msra.mxu0 %v2276
        %2278 = vmatprep.subr.mxu0 0.0
        %v2279 = vand.u32 %v2125, 4294901760
        %v2280 = vsub.f32 %v2125, %v2279
        %v2281 = vand.u32 %v2280, 4294901760
        %v2282 = vsub.f32 %v2280, %v2281
        %v2283 = vand.u32 %v2282, 4294901760
        %2284 = vmatpush1.msra.mxu0 %v2283
        %2285 = vmatprep.subr.mxu0 0.0
        %v2286 = vand.u32 %v2124, 4294901760
        %v2287 = vsub.f32 %v2124, %v2286
        %v2288 = vand.u32 %v2287, 4294901760
        %v2289 = vsub.f32 %v2287, %v2288
        %v2290 = vand.u32 %v2289, 4294901760
        %2291 = vmatpush1.msra.mxu0 %v2290
        %2292 = vmatprep.subr.mxu0 0.0
        %v2293 = vand.u32 %v2123, 4294901760
        %v2294 = vsub.f32 %v2123, %v2293
        %v2295 = vand.u32 %v2294, 4294901760
        %v2296 = vsub.f32 %v2294, %v2295
        %v2297 = vand.u32 %v2296, 4294901760
        %2298 = vmatpush1.msra.mxu0 %v2297
        %2299 = vmatprep.subr.mxu0 0.0
        %v2300 = vand.u32 %v2122, 4294901760
        %v2301 = vsub.f32 %v2122, %v2300
        %v2302 = vand.u32 %v2301, 4294901760
        %v2303 = vsub.f32 %v2301, %v2302
        %v2304 = vand.u32 %v2303, 4294901760
        %2305 = vmatpush1.msra.mxu0 %v2304
        %2306 = vmatprep.subr.mxu0 0.0
        %v2307 = vand.u32 %v2121, 4294901760
        %v2308 = vsub.f32 %v2121, %v2307
        %v2309 = vand.u32 %v2308, 4294901760
        %v2310 = vsub.f32 %v2308, %v2309
        %v2311 = vand.u32 %v2310, 4294901760
        %2312 = vmatpush1.msra.mxu0 %v2311
        %2313 = vmatprep.subr.mxu0 0.0
        %v2314 = vand.u32 %v2120, 4294901760
        %v2315 = vsub.f32 %v2120, %v2314
        %v2316 = vand.u32 %v2315, 4294901760
        %v2317 = vsub.f32 %v2315, %v2316
        %v2318 = vand.u32 %v2317, 4294901760
        %2319 = vmatpush1.msra.mxu0 %v2318
        %2320 = vmatprep.subr.mxu0 0.0
        %v2321 = vand.u32 %v2119, 4294901760
        %v2322 = vsub.f32 %v2119, %v2321
        %v2323 = vand.u32 %v2322, 4294901760
        %v2324 = vsub.f32 %v2322, %v2323
        %v2325 = vand.u32 %v2324, 4294901760
        %2326 = vmatpush1.msra.mxu0 %v2325
        %2327 = vmatprep.subr.mxu0 0.0
        %v2328 = vand.u32 %v2118, 4294901760
        %v2329 = vsub.f32 %v2118, %v2328
        %v2330 = vand.u32 %v2329, 4294901760
        %v2331 = vsub.f32 %v2329, %v2330
        %v2332 = vand.u32 %v2331, 4294901760
        %2333 = vmatpush1.msra.mxu0 %v2332
        %2334 = vmatprep.subr.mxu0 0.0
        %v2335 = vand.u32 %v2117, 4294901760
        %v2336 = vsub.f32 %v2117, %v2335
        %v2337 = vand.u32 %v2336, 4294901760
        %v2338 = vsub.f32 %v2336, %v2337
        %v2339 = vand.u32 %v2338, 4294901760
        %2340 = vmatpush1.msra.mxu0 %v2339
        %2341 = vmatprep.subr.mxu0 0.0
        %v2342 = vand.u32 %v2116, 4294901760
        %v2343 = vsub.f32 %v2116, %v2342
        %v2344 = vand.u32 %v2343, 4294901760
        %v2345 = vsub.f32 %v2343, %v2344
        %v2346 = vand.u32 %v2345, 4294901760
        %2347 = vmatpush1.msra.mxu0 %v2346
        %2348 = vmatprep.subr.mxu0 0.0
        %v2349 = vand.u32 %v2115, 4294901760
        %v2350 = vsub.f32 %v2115, %v2349
        %v2351 = vand.u32 %v2350, 4294901760
        %v2352 = vsub.f32 %v2350, %v2351
        %v2353 = vand.u32 %v2352, 4294901760
        %2354 = vmatpush1.msra.mxu0 %v2353
        %2355 = vmatprep.subr.mxu0 0.0
        %v2356 = vand.u32 %v2114, 4294901760
        %v2357 = vsub.f32 %v2114, %v2356
        %v2358 = vand.u32 %v2357, 4294901760
        %v2359 = vsub.f32 %v2357, %v2358
        %v2360 = vand.u32 %v2359, 4294901760
        %2361 = vmatpush1.msra.mxu0 %v2360
        %2362 = vmatprep.subr.mxu0 0.0
        %v2363 = vand.u32 %v2113, 4294901760
        %v2364 = vsub.f32 %v2113, %v2363
        %v2365 = vand.u32 %v2364, 4294901760
        %v2366 = vsub.f32 %v2364, %v2365
        %v2367 = vand.u32 %v2366, 4294901760
        %2368 = vmatpush1.msra.mxu0 %v2367
        %2369 = vmatprep.subr.mxu0 0.0
        %v2370 = vand.u32 %v2144, 4294901760
        %v2371 = vsub.f32 %v2144, %v2370
        %v2372 = vand.u32 %v2371, 4294901760
        %v2373 = vsub.f32 %v2371, %v2372
        %v2374 = vand.u32 %v2373, 4294901760
        %2375 = vmatpush2.msra.mxu0 %v2374
        %2376 = vmatprep.subr.mxu0 0.0
        %v2377 = vand.u32 %v2143, 4294901760
        %v2378 = vsub.f32 %v2143, %v2377
        %v2379 = vand.u32 %v2378, 4294901760
        %v2380 = vsub.f32 %v2378, %v2379
        %v2381 = vand.u32 %v2380, 4294901760
        %2382 = vmatpush2.msra.mxu0 %v2381
        %2383 = vmatprep.subr.mxu0 0.0
        %v2384 = vand.u32 %v2142, 4294901760
        %v2385 = vsub.f32 %v2142, %v2384
        %v2386 = vand.u32 %v2385, 4294901760
        %v2387 = vsub.f32 %v2385, %v2386
        %v2388 = vand.u32 %v2387, 4294901760
        %2389 = vmatpush2.msra.mxu0 %v2388
        %2390 = vmatprep.subr.mxu0 0.0
        %v2391 = vand.u32 %v2141, 4294901760
        %v2392 = vsub.f32 %v2141, %v2391
        %v2393 = vand.u32 %v2392, 4294901760
        %v2394 = vsub.f32 %v2392, %v2393
        %v2395 = vand.u32 %v2394, 4294901760
        %2396 = vmatpush2.msra.mxu0 %v2395
        %2397 = vmatprep.subr.mxu0 0.0
        %v2398 = vand.u32 %v2140, 4294901760
        %v2399 = vsub.f32 %v2140, %v2398
        %v2400 = vand.u32 %v2399, 4294901760
        %v2401 = vsub.f32 %v2399, %v2400
        %v2402 = vand.u32 %v2401, 4294901760
        %2403 = vmatpush2.msra.mxu0 %v2402
        %2404 = vmatprep.subr.mxu0 0.0
        %v2405 = vand.u32 %v2139, 4294901760
        %v2406 = vsub.f32 %v2139, %v2405
        %v2407 = vand.u32 %v2406, 4294901760
        %v2408 = vsub.f32 %v2406, %v2407
        %v2409 = vand.u32 %v2408, 4294901760
        %2410 = vmatpush2.msra.mxu0 %v2409
        %2411 = vmatprep.subr.mxu0 0.0
        %v2412 = vand.u32 %v2138, 4294901760
        %v2413 = vsub.f32 %v2138, %v2412
        %v2414 = vand.u32 %v2413, 4294901760
        %v2415 = vsub.f32 %v2413, %v2414
        %v2416 = vand.u32 %v2415, 4294901760
        %2417 = vmatpush2.msra.mxu0 %v2416
        %2418 = vmatprep.subr.mxu0 0.0
        %v2419 = vand.u32 %v2137, 4294901760
        %v2420 = vsub.f32 %v2137, %v2419
        %v2421 = vand.u32 %v2420, 4294901760
        %v2422 = vsub.f32 %v2420, %v2421
        %v2423 = vand.u32 %v2422, 4294901760
        %2424 = vmatpush2.msra.mxu0 %v2423
        %2425 = vmatprep.subr.mxu0 0.0
        %v2426 = vand.u32 %v2136, 4294901760
        %v2427 = vsub.f32 %v2136, %v2426
        %v2428 = vand.u32 %v2427, 4294901760
        %v2429 = vsub.f32 %v2427, %v2428
        %v2430 = vand.u32 %v2429, 4294901760
        %2431 = vmatpush2.msra.mxu0 %v2430
        %2432 = vmatprep.subr.mxu0 0.0
        %v2433 = vand.u32 %v2135, 4294901760
        %v2434 = vsub.f32 %v2135, %v2433
        %v2435 = vand.u32 %v2434, 4294901760
        %v2436 = vsub.f32 %v2434, %v2435
        %v2437 = vand.u32 %v2436, 4294901760
        %2438 = vmatpush2.msra.mxu0 %v2437
        %2439 = vmatprep.subr.mxu0 0.0
        %v2440 = vand.u32 %v2134, 4294901760
        %v2441 = vsub.f32 %v2134, %v2440
        %v2442 = vand.u32 %v2441, 4294901760
        %v2443 = vsub.f32 %v2441, %v2442
        %v2444 = vand.u32 %v2443, 4294901760
        %2445 = vmatpush2.msra.mxu0 %v2444
        %2446 = vmatprep.subr.mxu0 0.0
        %v2447 = vand.u32 %v2133, 4294901760
        %v2448 = vsub.f32 %v2133, %v2447
        %v2449 = vand.u32 %v2448, 4294901760
        %v2450 = vsub.f32 %v2448, %v2449
        %v2451 = vand.u32 %v2450, 4294901760
        %2452 = vmatpush2.msra.mxu0 %v2451
        %2453 = vmatprep.subr.mxu0 0.0
        %v2454 = vand.u32 %v2132, 4294901760
        %v2455 = vsub.f32 %v2132, %v2454
        %v2456 = vand.u32 %v2455, 4294901760
        %v2457 = vsub.f32 %v2455, %v2456
        %v2458 = vand.u32 %v2457, 4294901760
        %2459 = vmatpush2.msra.mxu0 %v2458
        %2460 = vmatprep.subr.mxu0 0.0
        %v2461 = vand.u32 %v2131, 4294901760
        %v2462 = vsub.f32 %v2131, %v2461
        %v2463 = vand.u32 %v2462, 4294901760
        %v2464 = vsub.f32 %v2462, %v2463
        %v2465 = vand.u32 %v2464, 4294901760
        %2466 = vmatpush2.msra.mxu0 %v2465
        %2467 = vmatprep.subr.mxu0 0.0
        %v2468 = vand.u32 %v2130, 4294901760
        %v2469 = vsub.f32 %v2130, %v2468
        %v2470 = vand.u32 %v2469, 4294901760
        %v2471 = vsub.f32 %v2469, %v2470
        %v2472 = vand.u32 %v2471, 4294901760
        %2473 = vmatpush2.msra.mxu0 %v2472
        %2474 = vmatprep.subr.mxu0 0.0
        %v2475 = vand.u32 %v2129, 4294901760
        %v2476 = vsub.f32 %v2129, %v2475
        %v2477 = vand.u32 %v2476, 4294901760
        %v2478 = vsub.f32 %v2476, %v2477
        %v2479 = vand.u32 %v2478, 4294901760
        %2480 = vmatpush2.msra.mxu0 %v2479
        %v2481 = vand.u32 %v269, 4294901760
        %2482 = vmatprep.mubr.f32.mxu0 %v2481
        %v2483 = vand.u32 %v195, 4294901760
        %2484 = vmatmul.mubr.f32.gmra.mxu0 %v2483
        %v2485 = vpop.f32.mrf.mxu0
        %v2486 = vadd.f32 %v2254, %v2485
        %v2487 = vpop.f32.mrf.mxu0
        %2488 = vdwg.mxu0
        %2489 = vmatprep.subr.mxu0 0.0
        %v2490 = vand.u32 %v2128, 4294901760
        %v2491 = vsub.f32 %v2128, %v2490
        %2492 = vmatpush1.msra.mxu0 %v2491
        %2493 = vmatprep.subr.mxu0 0.0
        %v2494 = vand.u32 %v2127, 4294901760
        %v2495 = vsub.f32 %v2127, %v2494
        %2496 = vmatpush1.msra.mxu0 %v2495
        %2497 = vmatprep.subr.mxu0 0.0
        %v2498 = vand.u32 %v2126, 4294901760
        %v2499 = vsub.f32 %v2126, %v2498
        %2500 = vmatpush1.msra.mxu0 %v2499
        %2501 = vmatprep.subr.mxu0 0.0
        %v2502 = vand.u32 %v2125, 4294901760
        %v2503 = vsub.f32 %v2125, %v2502
        %2504 = vmatpush1.msra.mxu0 %v2503
        %2505 = vmatprep.subr.mxu0 0.0
        %v2506 = vand.u32 %v2124, 4294901760
        %v2507 = vsub.f32 %v2124, %v2506
        %2508 = vmatpush1.msra.mxu0 %v2507
        %2509 = vmatprep.subr.mxu0 0.0
        %v2510 = vand.u32 %v2123, 4294901760
        %v2511 = vsub.f32 %v2123, %v2510
        %2512 = vmatpush1.msra.mxu0 %v2511
        %2513 = vmatprep.subr.mxu0 0.0
        %v2514 = vand.u32 %v2122, 4294901760
        %v2515 = vsub.f32 %v2122, %v2514
        %2516 = vmatpush1.msra.mxu0 %v2515
        %2517 = vmatprep.subr.mxu0 0.0
        %v2518 = vand.u32 %v2121, 4294901760
        %v2519 = vsub.f32 %v2121, %v2518
        %2520 = vmatpush1.msra.mxu0 %v2519
        %2521 = vmatprep.subr.mxu0 0.0
        %v2522 = vand.u32 %v2120, 4294901760
        %v2523 = vsub.f32 %v2120, %v2522
        %2524 = vmatpush1.msra.mxu0 %v2523
        %2525 = vmatprep.subr.mxu0 0.0
        %v2526 = vand.u32 %v2119, 4294901760
        %v2527 = vsub.f32 %v2119, %v2526
        %2528 = vmatpush1.msra.mxu0 %v2527
        %2529 = vmatprep.subr.mxu0 0.0
        %v2530 = vand.u32 %v2118, 4294901760
        %v2531 = vsub.f32 %v2118, %v2530
        %2532 = vmatpush1.msra.mxu0 %v2531
        %2533 = vmatprep.subr.mxu0 0.0
        %v2534 = vand.u32 %v2117, 4294901760
        %v2535 = vsub.f32 %v2117, %v2534
        %2536 = vmatpush1.msra.mxu0 %v2535
        %2537 = vmatprep.subr.mxu0 0.0
        %v2538 = vand.u32 %v2116, 4294901760
        %v2539 = vsub.f32 %v2116, %v2538
        %2540 = vmatpush1.msra.mxu0 %v2539
        %2541 = vmatprep.subr.mxu0 0.0
        %v2542 = vand.u32 %v2115, 4294901760
        %v2543 = vsub.f32 %v2115, %v2542
        %2544 = vmatpush1.msra.mxu0 %v2543
        %2545 = vmatprep.subr.mxu0 0.0
        %v2546 = vand.u32 %v2114, 4294901760
        %v2547 = vsub.f32 %v2114, %v2546
        %2548 = vmatpush1.msra.mxu0 %v2547
        %2549 = vmatprep.subr.mxu0 0.0
        %v2550 = vand.u32 %v2113, 4294901760
        %v2551 = vsub.f32 %v2113, %v2550
        %2552 = vmatpush1.msra.mxu0 %v2551
        %2553 = vmatprep.subr.mxu0 0.0
        %v2554 = vand.u32 %v2144, 4294901760
        %v2555 = vsub.f32 %v2144, %v2554
        %2556 = vmatpush2.msra.mxu0 %v2555
        %2557 = vmatprep.subr.mxu0 0.0
        %v2558 = vand.u32 %v2143, 4294901760
        %v2559 = vsub.f32 %v2143, %v2558
        %2560 = vmatpush2.msra.mxu0 %v2559
        %2561 = vmatprep.subr.mxu0 0.0
        %v2562 = vand.u32 %v2142, 4294901760
        %v2563 = vsub.f32 %v2142, %v2562
        %2564 = vmatpush2.msra.mxu0 %v2563
        %2565 = vmatprep.subr.mxu0 0.0
        %v2566 = vand.u32 %v2141, 4294901760
        %v2567 = vsub.f32 %v2141, %v2566
        %2568 = vmatpush2.msra.mxu0 %v2567
        %2569 = vmatprep.subr.mxu0 0.0
        %v2570 = vand.u32 %v2140, 4294901760
        %v2571 = vsub.f32 %v2140, %v2570
        %2572 = vmatpush2.msra.mxu0 %v2571
        %2573 = vmatprep.subr.mxu0 0.0
        %v2574 = vand.u32 %v2139, 4294901760
        %v2575 = vsub.f32 %v2139, %v2574
        %2576 = vmatpush2.msra.mxu0 %v2575
        %2577 = vmatprep.subr.mxu0 0.0
        %v2578 = vand.u32 %v2138, 4294901760
        %v2579 = vsub.f32 %v2138, %v2578
        %2580 = vmatpush2.msra.mxu0 %v2579
        %2581 = vmatprep.subr.mxu0 0.0
        %v2582 = vand.u32 %v2137, 4294901760
        %v2583 = vsub.f32 %v2137, %v2582
        %2584 = vmatpush2.msra.mxu0 %v2583
        %2585 = vmatprep.subr.mxu0 0.0
        %v2586 = vand.u32 %v2136, 4294901760
        %v2587 = vsub.f32 %v2136, %v2586
        %2588 = vmatpush2.msra.mxu0 %v2587
        %2589 = vmatprep.subr.mxu0 0.0
        %v2590 = vand.u32 %v2135, 4294901760
        %v2591 = vsub.f32 %v2135, %v2590
        %2592 = vmatpush2.msra.mxu0 %v2591
        %2593 = vmatprep.subr.mxu0 0.0
        %v2594 = vand.u32 %v2134, 4294901760
        %v2595 = vsub.f32 %v2134, %v2594
        %2596 = vmatpush2.msra.mxu0 %v2595
        %2597 = vmatprep.subr.mxu0 0.0
        %v2598 = vand.u32 %v2133, 4294901760
        %v2599 = vsub.f32 %v2133, %v2598
        %2600 = vmatpush2.msra.mxu0 %v2599
        %2601 = vmatprep.subr.mxu0 0.0
        %v2602 = vand.u32 %v2132, 4294901760
        %v2603 = vsub.f32 %v2132, %v2602
        %2604 = vmatpush2.msra.mxu0 %v2603
        %2605 = vmatprep.subr.mxu0 0.0
        %v2606 = vand.u32 %v2131, 4294901760
        %v2607 = vsub.f32 %v2131, %v2606
        %2608 = vmatpush2.msra.mxu0 %v2607
        %2609 = vmatprep.subr.mxu0 0.0
        %v2610 = vand.u32 %v2130, 4294901760
        %v2611 = vsub.f32 %v2130, %v2610
        %2612 = vmatpush2.msra.mxu0 %v2611
        %2613 = vmatprep.subr.mxu0 0.0
        %v2614 = vand.u32 %v2129, 4294901760
        %v2615 = vsub.f32 %v2129, %v2614
        %2616 = vmatpush2.msra.mxu0 %v2615
        %v2617 = vand.u32 %v269, 4294901760
        %v2618 = vsub.f32 %v269, %v2617
        %2619 = vmatprep.mubr.f32.mxu0 %v2618
        %v2620 = vand.u32 %v195, 4294901760
        %v2621 = vsub.f32 %v195, %v2620
        %2622 = vmatmul.mubr.f32.gmra.mxu0 %v2621
        %v2623 = vpop.f32.mrf.mxu0
        %v2624 = vadd.f32 %v2486, %v2623
        %v2625 = vpop.f32.mrf.mxu0
        %2626 = vdwg.mxu0
        %2627 = vmatprep.subr.mxu0 0.0
        %v2628 = vand.u32 %v2128, 4294901760
        %2629 = vmatpush1.msra.mxu0 %v2628
        %2630 = vmatprep.subr.mxu0 0.0
        %v2631 = vand.u32 %v2127, 4294901760
        %2632 = vmatpush1.msra.mxu0 %v2631
        %2633 = vmatprep.subr.mxu0 0.0
        %v2634 = vand.u32 %v2126, 4294901760
        %2635 = vmatpush1.msra.mxu0 %v2634
        %2636 = vmatprep.subr.mxu0 0.0
        %v2637 = vand.u32 %v2125, 4294901760
        %2638 = vmatpush1.msra.mxu0 %v2637
        %2639 = vmatprep.subr.mxu0 0.0
        %v2640 = vand.u32 %v2124, 4294901760
        %2641 = vmatpush1.msra.mxu0 %v2640
        %2642 = vmatprep.subr.mxu0 0.0
        %v2643 = vand.u32 %v2123, 4294901760
        %2644 = vmatpush1.msra.mxu0 %v2643
        %2645 = vmatprep.subr.mxu0 0.0
        %v2646 = vand.u32 %v2122, 4294901760
        %2647 = vmatpush1.msra.mxu0 %v2646
        %2648 = vmatprep.subr.mxu0 0.0
        %v2649 = vand.u32 %v2121, 4294901760
        %2650 = vmatpush1.msra.mxu0 %v2649
        %2651 = vmatprep.subr.mxu0 0.0
        %v2652 = vand.u32 %v2120, 4294901760
        %2653 = vmatpush1.msra.mxu0 %v2652
        %2654 = vmatprep.subr.mxu0 0.0
        %v2655 = vand.u32 %v2119, 4294901760
        %2656 = vmatpush1.msra.mxu0 %v2655
        %2657 = vmatprep.subr.mxu0 0.0
        %v2658 = vand.u32 %v2118, 4294901760
        %2659 = vmatpush1.msra.mxu0 %v2658
        %2660 = vmatprep.subr.mxu0 0.0
        %v2661 = vand.u32 %v2117, 4294901760
        %2662 = vmatpush1.msra.mxu0 %v2661
        %2663 = vmatprep.subr.mxu0 0.0
        %v2664 = vand.u32 %v2116, 4294901760
        %2665 = vmatpush1.msra.mxu0 %v2664
        %2666 = vmatprep.subr.mxu0 0.0
        %v2667 = vand.u32 %v2115, 4294901760
        %2668 = vmatpush1.msra.mxu0 %v2667
        %2669 = vmatprep.subr.mxu0 0.0
        %v2670 = vand.u32 %v2114, 4294901760
        %2671 = vmatpush1.msra.mxu0 %v2670
        %2672 = vmatprep.subr.mxu0 0.0
        %v2673 = vand.u32 %v2113, 4294901760
        %2674 = vmatpush1.msra.mxu0 %v2673
        %2675 = vmatprep.subr.mxu0 0.0
        %v2676 = vand.u32 %v2144, 4294901760
        %2677 = vmatpush2.msra.mxu0 %v2676
        %2678 = vmatprep.subr.mxu0 0.0
        %v2679 = vand.u32 %v2143, 4294901760
        %2680 = vmatpush2.msra.mxu0 %v2679
        %2681 = vmatprep.subr.mxu0 0.0
        %v2682 = vand.u32 %v2142, 4294901760
        %2683 = vmatpush2.msra.mxu0 %v2682
        %2684 = vmatprep.subr.mxu0 0.0
        %v2685 = vand.u32 %v2141, 4294901760
        %2686 = vmatpush2.msra.mxu0 %v2685
        %2687 = vmatprep.subr.mxu0 0.0
        %v2688 = vand.u32 %v2140, 4294901760
        %2689 = vmatpush2.msra.mxu0 %v2688
        %2690 = vmatprep.subr.mxu0 0.0
        %v2691 = vand.u32 %v2139, 4294901760
        %2692 = vmatpush2.msra.mxu0 %v2691
        %2693 = vmatprep.subr.mxu0 0.0
        %v2694 = vand.u32 %v2138, 4294901760
        %2695 = vmatpush2.msra.mxu0 %v2694
        %2696 = vmatprep.subr.mxu0 0.0
        %v2697 = vand.u32 %v2137, 4294901760
        %2698 = vmatpush2.msra.mxu0 %v2697
        %2699 = vmatprep.subr.mxu0 0.0
        %v2700 = vand.u32 %v2136, 4294901760
        %2701 = vmatpush2.msra.mxu0 %v2700
        %2702 = vmatprep.subr.mxu0 0.0
        %v2703 = vand.u32 %v2135, 4294901760
        %2704 = vmatpush2.msra.mxu0 %v2703
        %2705 = vmatprep.subr.mxu0 0.0
        %v2706 = vand.u32 %v2134, 4294901760
        %2707 = vmatpush2.msra.mxu0 %v2706
        %2708 = vmatprep.subr.mxu0 0.0
        %v2709 = vand.u32 %v2133, 4294901760
        %2710 = vmatpush2.msra.mxu0 %v2709
        %2711 = vmatprep.subr.mxu0 0.0
        %v2712 = vand.u32 %v2132, 4294901760
        %2713 = vmatpush2.msra.mxu0 %v2712
        %2714 = vmatprep.subr.mxu0 0.0
        %v2715 = vand.u32 %v2131, 4294901760
        %2716 = vmatpush2.msra.mxu0 %v2715
        %2717 = vmatprep.subr.mxu0 0.0
        %v2718 = vand.u32 %v2130, 4294901760
        %2719 = vmatpush2.msra.mxu0 %v2718
        %2720 = vmatprep.subr.mxu0 0.0
        %v2721 = vand.u32 %v2129, 4294901760
        %2722 = vmatpush2.msra.mxu0 %v2721
        %v2723 = vand.u32 %v269, 4294901760
        %v2724 = vsub.f32 %v269, %v2723
        %v2725 = vand.u32 %v2724, 4294901760
        %2726 = vmatprep.mubr.f32.mxu0 %v2725
        %v2727 = vand.u32 %v195, 4294901760
        %v2728 = vsub.f32 %v195, %v2727
        %v2729 = vand.u32 %v2728, 4294901760
        %2730 = vmatmul.mubr.f32.gmra.mxu0 %v2729
        %v2731 = vpop.f32.mrf.mxu0
        %v2732 = vadd.f32 %v2624, %v2731
        %v2733 = vpop.f32.mrf.mxu0
        %2734 = vdwg.mxu0
        %2735 = vmatprep.subr.mxu0 0.0
        %v2736 = vand.u32 %v2128, 4294901760
        %v2737 = vsub.f32 %v2128, %v2736
        %v2738 = vand.u32 %v2737, 4294901760
        %2739 = vmatpush1.msra.mxu0 %v2738
        %2740 = vmatprep.subr.mxu0 0.0
        %v2741 = vand.u32 %v2127, 4294901760
        %v2742 = vsub.f32 %v2127, %v2741
        %v2743 = vand.u32 %v2742, 4294901760
        %2744 = vmatpush1.msra.mxu0 %v2743
        %2745 = vmatprep.subr.mxu0 0.0
        %v2746 = vand.u32 %v2126, 4294901760
        %v2747 = vsub.f32 %v2126, %v2746
        %v2748 = vand.u32 %v2747, 4294901760
        %2749 = vmatpush1.msra.mxu0 %v2748
        %2750 = vmatprep.subr.mxu0 0.0
        %v2751 = vand.u32 %v2125, 4294901760
        %v2752 = vsub.f32 %v2125, %v2751
        %v2753 = vand.u32 %v2752, 4294901760
        %2754 = vmatpush1.msra.mxu0 %v2753
        %2755 = vmatprep.subr.mxu0 0.0
        %v2756 = vand.u32 %v2124, 4294901760
        %v2757 = vsub.f32 %v2124, %v2756
        %v2758 = vand.u32 %v2757, 4294901760
        %2759 = vmatpush1.msra.mxu0 %v2758
        %2760 = vmatprep.subr.mxu0 0.0
        %v2761 = vand.u32 %v2123, 4294901760
        %v2762 = vsub.f32 %v2123, %v2761
        %v2763 = vand.u32 %v2762, 4294901760
        %2764 = vmatpush1.msra.mxu0 %v2763
        %2765 = vmatprep.subr.mxu0 0.0
        %v2766 = vand.u32 %v2122, 4294901760
        %v2767 = vsub.f32 %v2122, %v2766
        %v2768 = vand.u32 %v2767, 4294901760
        %2769 = vmatpush1.msra.mxu0 %v2768
        %2770 = vmatprep.subr.mxu0 0.0
        %v2771 = vand.u32 %v2121, 4294901760
        %v2772 = vsub.f32 %v2121, %v2771
        %v2773 = vand.u32 %v2772, 4294901760
        %2774 = vmatpush1.msra.mxu0 %v2773
        %2775 = vmatprep.subr.mxu0 0.0
        %v2776 = vand.u32 %v2120, 4294901760
        %v2777 = vsub.f32 %v2120, %v2776
        %v2778 = vand.u32 %v2777, 4294901760
        %2779 = vmatpush1.msra.mxu0 %v2778
        %2780 = vmatprep.subr.mxu0 0.0
        %v2781 = vand.u32 %v2119, 4294901760
        %v2782 = vsub.f32 %v2119, %v2781
        %v2783 = vand.u32 %v2782, 4294901760
        %2784 = vmatpush1.msra.mxu0 %v2783
        %2785 = vmatprep.subr.mxu0 0.0
        %v2786 = vand.u32 %v2118, 4294901760
        %v2787 = vsub.f32 %v2118, %v2786
        %v2788 = vand.u32 %v2787, 4294901760
        %2789 = vmatpush1.msra.mxu0 %v2788
        %2790 = vmatprep.subr.mxu0 0.0
        %v2791 = vand.u32 %v2117, 4294901760
        %v2792 = vsub.f32 %v2117, %v2791
        %v2793 = vand.u32 %v2792, 4294901760
        %2794 = vmatpush1.msra.mxu0 %v2793
        %2795 = vmatprep.subr.mxu0 0.0
        %v2796 = vand.u32 %v2116, 4294901760
        %v2797 = vsub.f32 %v2116, %v2796
        %v2798 = vand.u32 %v2797, 4294901760
        %2799 = vmatpush1.msra.mxu0 %v2798
        %2800 = vmatprep.subr.mxu0 0.0
        %v2801 = vand.u32 %v2115, 4294901760
        %v2802 = vsub.f32 %v2115, %v2801
        %v2803 = vand.u32 %v2802, 4294901760
        %2804 = vmatpush1.msra.mxu0 %v2803
        %2805 = vmatprep.subr.mxu0 0.0
        %v2806 = vand.u32 %v2114, 4294901760
        %v2807 = vsub.f32 %v2114, %v2806
        %v2808 = vand.u32 %v2807, 4294901760
        %2809 = vmatpush1.msra.mxu0 %v2808
        %2810 = vmatprep.subr.mxu0 0.0
        %v2811 = vand.u32 %v2113, 4294901760
        %v2812 = vsub.f32 %v2113, %v2811
        %v2813 = vand.u32 %v2812, 4294901760
        %2814 = vmatpush1.msra.mxu0 %v2813
        %2815 = vmatprep.subr.mxu0 0.0
        %v2816 = vand.u32 %v2144, 4294901760
        %v2817 = vsub.f32 %v2144, %v2816
        %v2818 = vand.u32 %v2817, 4294901760
        %2819 = vmatpush2.msra.mxu0 %v2818
        %2820 = vmatprep.subr.mxu0 0.0
        %v2821 = vand.u32 %v2143, 4294901760
        %v2822 = vsub.f32 %v2143, %v2821
        %v2823 = vand.u32 %v2822, 4294901760
        %2824 = vmatpush2.msra.mxu0 %v2823
        %2825 = vmatprep.subr.mxu0 0.0
        %v2826 = vand.u32 %v2142, 4294901760
        %v2827 = vsub.f32 %v2142, %v2826
        %v2828 = vand.u32 %v2827, 4294901760
        %2829 = vmatpush2.msra.mxu0 %v2828
        %2830 = vmatprep.subr.mxu0 0.0
        %v2831 = vand.u32 %v2141, 4294901760
        %v2832 = vsub.f32 %v2141, %v2831
        %v2833 = vand.u32 %v2832, 4294901760
        %2834 = vmatpush2.msra.mxu0 %v2833
        %2835 = vmatprep.subr.mxu0 0.0
        %v2836 = vand.u32 %v2140, 4294901760
        %v2837 = vsub.f32 %v2140, %v2836
        %v2838 = vand.u32 %v2837, 4294901760
        %2839 = vmatpush2.msra.mxu0 %v2838
        %2840 = vmatprep.subr.mxu0 0.0
        %v2841 = vand.u32 %v2139, 4294901760
        %v2842 = vsub.f32 %v2139, %v2841
        %v2843 = vand.u32 %v2842, 4294901760
        %2844 = vmatpush2.msra.mxu0 %v2843
        %2845 = vmatprep.subr.mxu0 0.0
        %v2846 = vand.u32 %v2138, 4294901760
        %v2847 = vsub.f32 %v2138, %v2846
        %v2848 = vand.u32 %v2847, 4294901760
        %2849 = vmatpush2.msra.mxu0 %v2848
        %2850 = vmatprep.subr.mxu0 0.0
        %v2851 = vand.u32 %v2137, 4294901760
        %v2852 = vsub.f32 %v2137, %v2851
        %v2853 = vand.u32 %v2852, 4294901760
        %2854 = vmatpush2.msra.mxu0 %v2853
        %2855 = vmatprep.subr.mxu0 0.0
        %v2856 = vand.u32 %v2136, 4294901760
        %v2857 = vsub.f32 %v2136, %v2856
        %v2858 = vand.u32 %v2857, 4294901760
        %2859 = vmatpush2.msra.mxu0 %v2858
        %2860 = vmatprep.subr.mxu0 0.0
        %v2861 = vand.u32 %v2135, 4294901760
        %v2862 = vsub.f32 %v2135, %v2861
        %v2863 = vand.u32 %v2862, 4294901760
        %2864 = vmatpush2.msra.mxu0 %v2863
        %2865 = vmatprep.subr.mxu0 0.0
        %v2866 = vand.u32 %v2134, 4294901760
        %v2867 = vsub.f32 %v2134, %v2866
        %v2868 = vand.u32 %v2867, 4294901760
        %2869 = vmatpush2.msra.mxu0 %v2868
        %2870 = vmatprep.subr.mxu0 0.0
        %v2871 = vand.u32 %v2133, 4294901760
        %v2872 = vsub.f32 %v2133, %v2871
        %v2873 = vand.u32 %v2872, 4294901760
        %2874 = vmatpush2.msra.mxu0 %v2873
        %2875 = vmatprep.subr.mxu0 0.0
        %v2876 = vand.u32 %v2132, 4294901760
        %v2877 = vsub.f32 %v2132, %v2876
        %v2878 = vand.u32 %v2877, 4294901760
        %2879 = vmatpush2.msra.mxu0 %v2878
        %2880 = vmatprep.subr.mxu0 0.0
        %v2881 = vand.u32 %v2131, 4294901760
        %v2882 = vsub.f32 %v2131, %v2881
        %v2883 = vand.u32 %v2882, 4294901760
        %2884 = vmatpush2.msra.mxu0 %v2883
        %2885 = vmatprep.subr.mxu0 0.0
        %v2886 = vand.u32 %v2130, 4294901760
        %v2887 = vsub.f32 %v2130, %v2886
        %v2888 = vand.u32 %v2887, 4294901760
        %2889 = vmatpush2.msra.mxu0 %v2888
        %2890 = vmatprep.subr.mxu0 0.0
        %v2891 = vand.u32 %v2129, 4294901760
        %v2892 = vsub.f32 %v2129, %v2891
        %v2893 = vand.u32 %v2892, 4294901760
        %2894 = vmatpush2.msra.mxu0 %v2893
        %v2895 = vand.u32 %v269, 4294901760
        %2896 = vmatprep.mubr.f32.mxu0 %v2895
        %v2897 = vand.u32 %v195, 4294901760
        %2898 = vmatmul.mubr.f32.gmra.mxu0 %v2897
        %v2899 = vpop.f32.mrf.mxu0
        %v2900 = vadd.f32 %v2732, %v2899
        %v2901 = vpop.f32.mrf.mxu0
        %2902 = vdwg.mxu0
        %2903 = vmatprep.subr.mxu0 0.0
        %v2904 = vand.u32 %v2128, 4294901760
        %2905 = vmatpush1.msra.mxu0 %v2904
        %2906 = vmatprep.subr.mxu0 0.0
        %v2907 = vand.u32 %v2127, 4294901760
        %2908 = vmatpush1.msra.mxu0 %v2907
        %2909 = vmatprep.subr.mxu0 0.0
        %v2910 = vand.u32 %v2126, 4294901760
        %2911 = vmatpush1.msra.mxu0 %v2910
        %2912 = vmatprep.subr.mxu0 0.0
        %v2913 = vand.u32 %v2125, 4294901760
        %2914 = vmatpush1.msra.mxu0 %v2913
        %2915 = vmatprep.subr.mxu0 0.0
        %v2916 = vand.u32 %v2124, 4294901760
        %2917 = vmatpush1.msra.mxu0 %v2916
        %2918 = vmatprep.subr.mxu0 0.0
        %v2919 = vand.u32 %v2123, 4294901760
        %2920 = vmatpush1.msra.mxu0 %v2919
        %2921 = vmatprep.subr.mxu0 0.0
        %v2922 = vand.u32 %v2122, 4294901760
        %2923 = vmatpush1.msra.mxu0 %v2922
        %2924 = vmatprep.subr.mxu0 0.0
        %v2925 = vand.u32 %v2121, 4294901760
        %2926 = vmatpush1.msra.mxu0 %v2925
        %2927 = vmatprep.subr.mxu0 0.0
        %v2928 = vand.u32 %v2120, 4294901760
        %2929 = vmatpush1.msra.mxu0 %v2928
        %2930 = vmatprep.subr.mxu0 0.0
        %v2931 = vand.u32 %v2119, 4294901760
        %2932 = vmatpush1.msra.mxu0 %v2931
        %2933 = vmatprep.subr.mxu0 0.0
        %v2934 = vand.u32 %v2118, 4294901760
        %2935 = vmatpush1.msra.mxu0 %v2934
        %2936 = vmatprep.subr.mxu0 0.0
        %v2937 = vand.u32 %v2117, 4294901760
        %2938 = vmatpush1.msra.mxu0 %v2937
        %2939 = vmatprep.subr.mxu0 0.0
        %v2940 = vand.u32 %v2116, 4294901760
        %2941 = vmatpush1.msra.mxu0 %v2940
        %2942 = vmatprep.subr.mxu0 0.0
        %v2943 = vand.u32 %v2115, 4294901760
        %2944 = vmatpush1.msra.mxu0 %v2943
        %2945 = vmatprep.subr.mxu0 0.0
        %v2946 = vand.u32 %v2114, 4294901760
        %2947 = vmatpush1.msra.mxu0 %v2946
        %2948 = vmatprep.subr.mxu0 0.0
        %v2949 = vand.u32 %v2113, 4294901760
        %2950 = vmatpush1.msra.mxu0 %v2949
        %2951 = vmatprep.subr.mxu0 0.0
        %v2952 = vand.u32 %v2144, 4294901760
        %2953 = vmatpush2.msra.mxu0 %v2952
        %2954 = vmatprep.subr.mxu0 0.0
        %v2955 = vand.u32 %v2143, 4294901760
        %2956 = vmatpush2.msra.mxu0 %v2955
        %2957 = vmatprep.subr.mxu0 0.0
        %v2958 = vand.u32 %v2142, 4294901760
        %2959 = vmatpush2.msra.mxu0 %v2958
        %2960 = vmatprep.subr.mxu0 0.0
        %v2961 = vand.u32 %v2141, 4294901760
        %2962 = vmatpush2.msra.mxu0 %v2961
        %2963 = vmatprep.subr.mxu0 0.0
        %v2964 = vand.u32 %v2140, 4294901760
        %2965 = vmatpush2.msra.mxu0 %v2964
        %2966 = vmatprep.subr.mxu0 0.0
        %v2967 = vand.u32 %v2139, 4294901760
        %2968 = vmatpush2.msra.mxu0 %v2967
        %2969 = vmatprep.subr.mxu0 0.0
        %v2970 = vand.u32 %v2138, 4294901760
        %2971 = vmatpush2.msra.mxu0 %v2970
        %2972 = vmatprep.subr.mxu0 0.0
        %v2973 = vand.u32 %v2137, 4294901760
        %2974 = vmatpush2.msra.mxu0 %v2973
        %2975 = vmatprep.subr.mxu0 0.0
        %v2976 = vand.u32 %v2136, 4294901760
        %2977 = vmatpush2.msra.mxu0 %v2976
        %2978 = vmatprep.subr.mxu0 0.0
        %v2979 = vand.u32 %v2135, 4294901760
        %2980 = vmatpush2.msra.mxu0 %v2979
        %2981 = vmatprep.subr.mxu0 0.0
        %v2982 = vand.u32 %v2134, 4294901760
        %2983 = vmatpush2.msra.mxu0 %v2982
        %2984 = vmatprep.subr.mxu0 0.0
        %v2985 = vand.u32 %v2133, 4294901760
        %2986 = vmatpush2.msra.mxu0 %v2985
        %2987 = vmatprep.subr.mxu0 0.0
        %v2988 = vand.u32 %v2132, 4294901760
        %2989 = vmatpush2.msra.mxu0 %v2988
        %2990 = vmatprep.subr.mxu0 0.0
        %v2991 = vand.u32 %v2131, 4294901760
        %2992 = vmatpush2.msra.mxu0 %v2991
        %2993 = vmatprep.subr.mxu0 0.0
        %v2994 = vand.u32 %v2130, 4294901760
        %2995 = vmatpush2.msra.mxu0 %v2994
        %2996 = vmatprep.subr.mxu0 0.0
        %v2997 = vand.u32 %v2129, 4294901760
        %2998 = vmatpush2.msra.mxu0 %v2997
        %v2999 = vand.u32 %v269, 4294901760
        %3000 = vmatprep.mubr.f32.mxu0 %v2999
        %v3001 = vand.u32 %v195, 4294901760
        %3002 = vmatmul.mubr.f32.gmra.mxu0 %v3001
        %v3003 = vpop.f32.mrf.mxu0
        %v3004 = vadd.f32 %v2900, %v3003
        %v3005 = vpop.f32.mrf.mxu0
        %3006 = vdwg.mxu0
        %s3007 = scalar_lea.vmem %s180, 8 [#allocation2]
        %3008 = vst.msk [vmem:[%s3007] sm:$0xf] %vm1133, %v3004
        %s3009 = scalar_lea.vmem %s0, 192
        %v3010 = vld [vmem:[%s3009] sm:$0xff]
        %v3011 = vld [vmem:[%s3009 + $0x8] sm:$0xff]
        %v3012 = vld [vmem:[%s3009 + $0x10] sm:$0xff]
        %v3013 = vld [vmem:[%s3009 + $0x18] sm:$0xff]
        %v3014 = vld [vmem:[%s3009 + $0x20] sm:$0xff]
        %v3015 = vld [vmem:[%s3009 + $0x28] sm:$0xff]
        %v3016 = vld [vmem:[%s3009 + $0x30] sm:$0xff]
        %v3017 = vld [vmem:[%s3009 + $0x38] sm:$0xff]
        %v3018 = vunpack.c.0.s8 %v3010
        %v3019 = vunpack.c.1.s8 %v3010
        %v3020 = vunpack.c.2.s8 %v3010
        %v3021 = vunpack.c.3.s8 %v3010
        %v3022 = vunpack.c.0.s8 %v3011
        %v3023 = vunpack.c.1.s8 %v3011
        %v3024 = vunpack.c.2.s8 %v3011
        %v3025 = vunpack.c.3.s8 %v3011
        %v3026 = vunpack.c.0.s8 %v3012
        %v3027 = vunpack.c.1.s8 %v3012
        %v3028 = vunpack.c.2.s8 %v3012
        %v3029 = vunpack.c.3.s8 %v3012
        %v3030 = vunpack.c.0.s8 %v3013
        %v3031 = vunpack.c.1.s8 %v3013
        %v3032 = vunpack.c.2.s8 %v3013
        %v3033 = vunpack.c.3.s8 %v3013
        %v3034 = vunpack.c.0.s8 %v3014
        %v3035 = vunpack.c.1.s8 %v3014
        %v3036 = vunpack.c.2.s8 %v3014
        %v3037 = vunpack.c.3.s8 %v3014
        %v3038 = vunpack.c.0.s8 %v3015
        %v3039 = vunpack.c.1.s8 %v3015
        %v3040 = vunpack.c.2.s8 %v3015
        %v3041 = vunpack.c.3.s8 %v3015
        %v3042 = vunpack.c.0.s8 %v3016
        %v3043 = vunpack.c.1.s8 %v3016
        %v3044 = vunpack.c.2.s8 %v3016
        %v3045 = vunpack.c.3.s8 %v3016
        %v3046 = vunpack.c.0.s8 %v3017
        %v3047 = vunpack.c.1.s8 %v3017
        %v3048 = vunpack.c.2.s8 %v3017
        %v3049 = vunpack.c.3.s8 %v3017
        %v3050 = vcvt.s32.f32 %v3018
        %v3051 = vcvt.s32.f32 %v3019
        %v3052 = vcvt.s32.f32 %v3020
        %v3053 = vcvt.s32.f32 %v3021
        %v3054 = vcvt.s32.f32 %v3022
        %v3055 = vcvt.s32.f32 %v3023
        %v3056 = vcvt.s32.f32 %v3024
        %v3057 = vcvt.s32.f32 %v3025
        %v3058 = vcvt.s32.f32 %v3026
        %v3059 = vcvt.s32.f32 %v3027
        %v3060 = vcvt.s32.f32 %v3028
        %v3061 = vcvt.s32.f32 %v3029
        %v3062 = vcvt.s32.f32 %v3030
        %v3063 = vcvt.s32.f32 %v3031
        %v3064 = vcvt.s32.f32 %v3032
        %v3065 = vcvt.s32.f32 %v3033
        %v3066 = vcvt.s32.f32 %v3034
        %v3067 = vcvt.s32.f32 %v3035
        %v3068 = vcvt.s32.f32 %v3036
        %v3069 = vcvt.s32.f32 %v3037
        %v3070 = vcvt.s32.f32 %v3038
        %v3071 = vcvt.s32.f32 %v3039
        %v3072 = vcvt.s32.f32 %v3040
        %v3073 = vcvt.s32.f32 %v3041
        %v3074 = vcvt.s32.f32 %v3042
        %v3075 = vcvt.s32.f32 %v3043
        %v3076 = vcvt.s32.f32 %v3044
        %v3077 = vcvt.s32.f32 %v3045
        %v3078 = vcvt.s32.f32 %v3046
        %v3079 = vcvt.s32.f32 %v3047
        %v3080 = vcvt.s32.f32 %v3048
        %v3081 = vcvt.s32.f32 %v3049
        %3082 = vmatprep.subr.mxu0 0.0
        %v3083 = vand.u32 %v3065, 4294901760
        %3084 = vmatpush1.msra.mxu0 %v3083
        %3085 = vmatprep.subr.mxu0 0.0
        %v3086 = vand.u32 %v3064, 4294901760
        %3087 = vmatpush1.msra.mxu0 %v3086
        %3088 = vmatprep.subr.mxu0 0.0
        %v3089 = vand.u32 %v3063, 4294901760
        %3090 = vmatpush1.msra.mxu0 %v3089
        %3091 = vmatprep.subr.mxu0 0.0
        %v3092 = vand.u32 %v3062, 4294901760
        %3093 = vmatpush1.msra.mxu0 %v3092
        %3094 = vmatprep.subr.mxu0 0.0
        %v3095 = vand.u32 %v3061, 4294901760
        %3096 = vmatpush1.msra.mxu0 %v3095
        %3097 = vmatprep.subr.mxu0 0.0
        %v3098 = vand.u32 %v3060, 4294901760
        %3099 = vmatpush1.msra.mxu0 %v3098
        %3100 = vmatprep.subr.mxu0 0.0
        %v3101 = vand.u32 %v3059, 4294901760
        %3102 = vmatpush1.msra.mxu0 %v3101
        %3103 = vmatprep.subr.mxu0 0.0
        %v3104 = vand.u32 %v3058, 4294901760
        %3105 = vmatpush1.msra.mxu0 %v3104
        %3106 = vmatprep.subr.mxu0 0.0
        %v3107 = vand.u32 %v3057, 4294901760
        %3108 = vmatpush1.msra.mxu0 %v3107
        %3109 = vmatprep.subr.mxu0 0.0
        %v3110 = vand.u32 %v3056, 4294901760
        %3111 = vmatpush1.msra.mxu0 %v3110
        %3112 = vmatprep.subr.mxu0 0.0
        %v3113 = vand.u32 %v3055, 4294901760
        %3114 = vmatpush1.msra.mxu0 %v3113
        %3115 = vmatprep.subr.mxu0 0.0
        %v3116 = vand.u32 %v3054, 4294901760
        %3117 = vmatpush1.msra.mxu0 %v3116
        %3118 = vmatprep.subr.mxu0 0.0
        %v3119 = vand.u32 %v3053, 4294901760
        %3120 = vmatpush1.msra.mxu0 %v3119
        %3121 = vmatprep.subr.mxu0 0.0
        %v3122 = vand.u32 %v3052, 4294901760
        %3123 = vmatpush1.msra.mxu0 %v3122
        %3124 = vmatprep.subr.mxu0 0.0
        %v3125 = vand.u32 %v3051, 4294901760
        %3126 = vmatpush1.msra.mxu0 %v3125
        %3127 = vmatprep.subr.mxu0 0.0
        %v3128 = vand.u32 %v3050, 4294901760
        %3129 = vmatpush1.msra.mxu0 %v3128
        %3130 = vmatprep.subr.mxu0 0.0
        %v3131 = vand.u32 %v3081, 4294901760
        %3132 = vmatpush2.msra.mxu0 %v3131
        %3133 = vmatprep.subr.mxu0 0.0
        %v3134 = vand.u32 %v3080, 4294901760
        %3135 = vmatpush2.msra.mxu0 %v3134
        %3136 = vmatprep.subr.mxu0 0.0
        %v3137 = vand.u32 %v3079, 4294901760
        %3138 = vmatpush2.msra.mxu0 %v3137
        %3139 = vmatprep.subr.mxu0 0.0
        %v3140 = vand.u32 %v3078, 4294901760
        %3141 = vmatpush2.msra.mxu0 %v3140
        %3142 = vmatprep.subr.mxu0 0.0
        %v3143 = vand.u32 %v3077, 4294901760
        %3144 = vmatpush2.msra.mxu0 %v3143
        %3145 = vmatprep.subr.mxu0 0.0
        %v3146 = vand.u32 %v3076, 4294901760
        %3147 = vmatpush2.msra.mxu0 %v3146
        %3148 = vmatprep.subr.mxu0 0.0
        %v3149 = vand.u32 %v3075, 4294901760
        %3150 = vmatpush2.msra.mxu0 %v3149
        %3151 = vmatprep.subr.mxu0 0.0
        %v3152 = vand.u32 %v3074, 4294901760
        %3153 = vmatpush2.msra.mxu0 %v3152
        %3154 = vmatprep.subr.mxu0 0.0
        %v3155 = vand.u32 %v3073, 4294901760
        %3156 = vmatpush2.msra.mxu0 %v3155
        %3157 = vmatprep.subr.mxu0 0.0
        %v3158 = vand.u32 %v3072, 4294901760
        %3159 = vmatpush2.msra.mxu0 %v3158
        %3160 = vmatprep.subr.mxu0 0.0
        %v3161 = vand.u32 %v3071, 4294901760
        %3162 = vmatpush2.msra.mxu0 %v3161
        %3163 = vmatprep.subr.mxu0 0.0
        %v3164 = vand.u32 %v3070, 4294901760
        %3165 = vmatpush2.msra.mxu0 %v3164
        %3166 = vmatprep.subr.mxu0 0.0
        %v3167 = vand.u32 %v3069, 4294901760
        %3168 = vmatpush2.msra.mxu0 %v3167
        %3169 = vmatprep.subr.mxu0 0.0
        %v3170 = vand.u32 %v3068, 4294901760
        %3171 = vmatpush2.msra.mxu0 %v3170
        %3172 = vmatprep.subr.mxu0 0.0
        %v3173 = vand.u32 %v3067, 4294901760
        %3174 = vmatpush2.msra.mxu0 %v3173
        %3175 = vmatprep.subr.mxu0 0.0
        %v3176 = vand.u32 %v3066, 4294901760
        %3177 = vmatpush2.msra.mxu0 %v3176
        %v3178 = vand.u32 %v269, 4294901760
        %v3179 = vsub.f32 %v269, %v3178
        %v3180 = vand.u32 %v3179, 4294901760
        %v3181 = vsub.f32 %v3179, %v3180
        %v3182 = vand.u32 %v3181, 4294901760
        %3183 = vmatprep.mubr.f32.mxu0 %v3182
        %v3184 = vand.u32 %v195, 4294901760
        %v3185 = vsub.f32 %v195, %v3184
        %v3186 = vand.u32 %v3185, 4294901760
        %v3187 = vsub.f32 %v3185, %v3186
        %v3188 = vand.u32 %v3187, 4294901760
        %3189 = vmatmul.mubr.f32.gmra.mxu0 %v3188
        %v3190 = vpop.f32.mrf.mxu0
        %v3191 = vadd.f32 0.0, %v3190
        %v3192 = vpop.f32.mrf.mxu0
        %3193 = vdwg.mxu0
        %3194 = vmatprep.subr.mxu0 0.0
        %v3195 = vand.u32 %v3065, 4294901760
        %v3196 = vsub.f32 %v3065, %v3195
        %v3197 = vand.u32 %v3196, 4294901760
        %v3198 = vsub.f32 %v3196, %v3197
        %v3199 = vand.u32 %v3198, 4294901760
        %3200 = vmatpush1.msra.mxu0 %v3199
        %3201 = vmatprep.subr.mxu0 0.0
        %v3202 = vand.u32 %v3064, 4294901760
        %v3203 = vsub.f32 %v3064, %v3202
        %v3204 = vand.u32 %v3203, 4294901760
        %v3205 = vsub.f32 %v3203, %v3204
        %v3206 = vand.u32 %v3205, 4294901760
        %3207 = vmatpush1.msra.mxu0 %v3206
        %3208 = vmatprep.subr.mxu0 0.0
        %v3209 = vand.u32 %v3063, 4294901760
        %v3210 = vsub.f32 %v3063, %v3209
        %v3211 = vand.u32 %v3210, 4294901760
        %v3212 = vsub.f32 %v3210, %v3211
        %v3213 = vand.u32 %v3212, 4294901760
        %3214 = vmatpush1.msra.mxu0 %v3213
        %3215 = vmatprep.subr.mxu0 0.0
        %v3216 = vand.u32 %v3062, 4294901760
        %v3217 = vsub.f32 %v3062, %v3216
        %v3218 = vand.u32 %v3217, 4294901760
        %v3219 = vsub.f32 %v3217, %v3218
        %v3220 = vand.u32 %v3219, 4294901760
        %3221 = vmatpush1.msra.mxu0 %v3220
        %3222 = vmatprep.subr.mxu0 0.0
        %v3223 = vand.u32 %v3061, 4294901760
        %v3224 = vsub.f32 %v3061, %v3223
        %v3225 = vand.u32 %v3224, 4294901760
        %v3226 = vsub.f32 %v3224, %v3225
        %v3227 = vand.u32 %v3226, 4294901760
        %3228 = vmatpush1.msra.mxu0 %v3227
        %3229 = vmatprep.subr.mxu0 0.0
        %v3230 = vand.u32 %v3060, 4294901760
        %v3231 = vsub.f32 %v3060, %v3230
        %v3232 = vand.u32 %v3231, 4294901760
        %v3233 = vsub.f32 %v3231, %v3232
        %v3234 = vand.u32 %v3233, 4294901760
        %3235 = vmatpush1.msra.mxu0 %v3234
        %3236 = vmatprep.subr.mxu0 0.0
        %v3237 = vand.u32 %v3059, 4294901760
        %v3238 = vsub.f32 %v3059, %v3237
        %v3239 = vand.u32 %v3238, 4294901760
        %v3240 = vsub.f32 %v3238, %v3239
        %v3241 = vand.u32 %v3240, 4294901760
        %3242 = vmatpush1.msra.mxu0 %v3241
        %3243 = vmatprep.subr.mxu0 0.0
        %v3244 = vand.u32 %v3058, 4294901760
        %v3245 = vsub.f32 %v3058, %v3244
        %v3246 = vand.u32 %v3245, 4294901760
        %v3247 = vsub.f32 %v3245, %v3246
        %v3248 = vand.u32 %v3247, 4294901760
        %3249 = vmatpush1.msra.mxu0 %v3248
        %3250 = vmatprep.subr.mxu0 0.0
        %v3251 = vand.u32 %v3057, 4294901760
        %v3252 = vsub.f32 %v3057, %v3251
        %v3253 = vand.u32 %v3252, 4294901760
        %v3254 = vsub.f32 %v3252, %v3253
        %v3255 = vand.u32 %v3254, 4294901760
        %3256 = vmatpush1.msra.mxu0 %v3255
        %3257 = vmatprep.subr.mxu0 0.0
        %v3258 = vand.u32 %v3056, 4294901760
        %v3259 = vsub.f32 %v3056, %v3258
        %v3260 = vand.u32 %v3259, 4294901760
        %v3261 = vsub.f32 %v3259, %v3260
        %v3262 = vand.u32 %v3261, 4294901760
        %3263 = vmatpush1.msra.mxu0 %v3262
        %3264 = vmatprep.subr.mxu0 0.0
        %v3265 = vand.u32 %v3055, 4294901760
        %v3266 = vsub.f32 %v3055, %v3265
        %v3267 = vand.u32 %v3266, 4294901760
        %v3268 = vsub.f32 %v3266, %v3267
        %v3269 = vand.u32 %v3268, 4294901760
        %3270 = vmatpush1.msra.mxu0 %v3269
        %3271 = vmatprep.subr.mxu0 0.0
        %v3272 = vand.u32 %v3054, 4294901760
        %v3273 = vsub.f32 %v3054, %v3272
        %v3274 = vand.u32 %v3273, 4294901760
        %v3275 = vsub.f32 %v3273, %v3274
        %v3276 = vand.u32 %v3275, 4294901760
        %3277 = vmatpush1.msra.mxu0 %v3276
        %3278 = vmatprep.subr.mxu0 0.0
        %v3279 = vand.u32 %v3053, 4294901760
        %v3280 = vsub.f32 %v3053, %v3279
        %v3281 = vand.u32 %v3280, 4294901760
        %v3282 = vsub.f32 %v3280, %v3281
        %v3283 = vand.u32 %v3282, 4294901760
        %3284 = vmatpush1.msra.mxu0 %v3283
        %3285 = vmatprep.subr.mxu0 0.0
        %v3286 = vand.u32 %v3052, 4294901760
        %v3287 = vsub.f32 %v3052, %v3286
        %v3288 = vand.u32 %v3287, 4294901760
        %v3289 = vsub.f32 %v3287, %v3288
        %v3290 = vand.u32 %v3289, 4294901760
        %3291 = vmatpush1.msra.mxu0 %v3290
        %3292 = vmatprep.subr.mxu0 0.0
        %v3293 = vand.u32 %v3051, 4294901760
        %v3294 = vsub.f32 %v3051, %v3293
        %v3295 = vand.u32 %v3294, 4294901760
        %v3296 = vsub.f32 %v3294, %v3295
        %v3297 = vand.u32 %v3296, 4294901760
        %3298 = vmatpush1.msra.mxu0 %v3297
        %3299 = vmatprep.subr.mxu0 0.0
        %v3300 = vand.u32 %v3050, 4294901760
        %v3301 = vsub.f32 %v3050, %v3300
        %v3302 = vand.u32 %v3301, 4294901760
        %v3303 = vsub.f32 %v3301, %v3302
        %v3304 = vand.u32 %v3303, 4294901760
        %3305 = vmatpush1.msra.mxu0 %v3304
        %3306 = vmatprep.subr.mxu0 0.0
        %v3307 = vand.u32 %v3081, 4294901760
        %v3308 = vsub.f32 %v3081, %v3307
        %v3309 = vand.u32 %v3308, 4294901760
        %v3310 = vsub.f32 %v3308, %v3309
        %v3311 = vand.u32 %v3310, 4294901760
        %3312 = vmatpush2.msra.mxu0 %v3311
        %3313 = vmatprep.subr.mxu0 0.0
        %v3314 = vand.u32 %v3080, 4294901760
        %v3315 = vsub.f32 %v3080, %v3314
        %v3316 = vand.u32 %v3315, 4294901760
        %v3317 = vsub.f32 %v3315, %v3316
        %v3318 = vand.u32 %v3317, 4294901760
        %3319 = vmatpush2.msra.mxu0 %v3318
        %3320 = vmatprep.subr.mxu0 0.0
        %v3321 = vand.u32 %v3079, 4294901760
        %v3322 = vsub.f32 %v3079, %v3321
        %v3323 = vand.u32 %v3322, 4294901760
        %v3324 = vsub.f32 %v3322, %v3323
        %v3325 = vand.u32 %v3324, 4294901760
        %3326 = vmatpush2.msra.mxu0 %v3325
        %3327 = vmatprep.subr.mxu0 0.0
        %v3328 = vand.u32 %v3078, 4294901760
        %v3329 = vsub.f32 %v3078, %v3328
        %v3330 = vand.u32 %v3329, 4294901760
        %v3331 = vsub.f32 %v3329, %v3330
        %v3332 = vand.u32 %v3331, 4294901760
        %3333 = vmatpush2.msra.mxu0 %v3332
        %3334 = vmatprep.subr.mxu0 0.0
        %v3335 = vand.u32 %v3077, 4294901760
        %v3336 = vsub.f32 %v3077, %v3335
        %v3337 = vand.u32 %v3336, 4294901760
        %v3338 = vsub.f32 %v3336, %v3337
        %v3339 = vand.u32 %v3338, 4294901760
        %3340 = vmatpush2.msra.mxu0 %v3339
        %3341 = vmatprep.subr.mxu0 0.0
        %v3342 = vand.u32 %v3076, 4294901760
        %v3343 = vsub.f32 %v3076, %v3342
        %v3344 = vand.u32 %v3343, 4294901760
        %v3345 = vsub.f32 %v3343, %v3344
        %v3346 = vand.u32 %v3345, 4294901760
        %3347 = vmatpush2.msra.mxu0 %v3346
        %3348 = vmatprep.subr.mxu0 0.0
        %v3349 = vand.u32 %v3075, 4294901760
        %v3350 = vsub.f32 %v3075, %v3349
        %v3351 = vand.u32 %v3350, 4294901760
        %v3352 = vsub.f32 %v3350, %v3351
        %v3353 = vand.u32 %v3352, 4294901760
        %3354 = vmatpush2.msra.mxu0 %v3353
        %3355 = vmatprep.subr.mxu0 0.0
        %v3356 = vand.u32 %v3074, 4294901760
        %v3357 = vsub.f32 %v3074, %v3356
        %v3358 = vand.u32 %v3357, 4294901760
        %v3359 = vsub.f32 %v3357, %v3358
        %v3360 = vand.u32 %v3359, 4294901760
        %3361 = vmatpush2.msra.mxu0 %v3360
        %3362 = vmatprep.subr.mxu0 0.0
        %v3363 = vand.u32 %v3073, 4294901760
        %v3364 = vsub.f32 %v3073, %v3363
        %v3365 = vand.u32 %v3364, 4294901760
        %v3366 = vsub.f32 %v3364, %v3365
        %v3367 = vand.u32 %v3366, 4294901760
        %3368 = vmatpush2.msra.mxu0 %v3367
        %3369 = vmatprep.subr.mxu0 0.0
        %v3370 = vand.u32 %v3072, 4294901760
        %v3371 = vsub.f32 %v3072, %v3370
        %v3372 = vand.u32 %v3371, 4294901760
        %v3373 = vsub.f32 %v3371, %v3372
        %v3374 = vand.u32 %v3373, 4294901760
        %3375 = vmatpush2.msra.mxu0 %v3374
        %3376 = vmatprep.subr.mxu0 0.0
        %v3377 = vand.u32 %v3071, 4294901760
        %v3378 = vsub.f32 %v3071, %v3377
        %v3379 = vand.u32 %v3378, 4294901760
        %v3380 = vsub.f32 %v3378, %v3379
        %v3381 = vand.u32 %v3380, 4294901760
        %3382 = vmatpush2.msra.mxu0 %v3381
        %3383 = vmatprep.subr.mxu0 0.0
        %v3384 = vand.u32 %v3070, 4294901760
        %v3385 = vsub.f32 %v3070, %v3384
        %v3386 = vand.u32 %v3385, 4294901760
        %v3387 = vsub.f32 %v3385, %v3386
        %v3388 = vand.u32 %v3387, 4294901760
        %3389 = vmatpush2.msra.mxu0 %v3388
        %3390 = vmatprep.subr.mxu0 0.0
        %v3391 = vand.u32 %v3069, 4294901760
        %v3392 = vsub.f32 %v3069, %v3391
        %v3393 = vand.u32 %v3392, 4294901760
        %v3394 = vsub.f32 %v3392, %v3393
        %v3395 = vand.u32 %v3394, 4294901760
        %3396 = vmatpush2.msra.mxu0 %v3395
        %3397 = vmatprep.subr.mxu0 0.0
        %v3398 = vand.u32 %v3068, 4294901760
        %v3399 = vsub.f32 %v3068, %v3398
        %v3400 = vand.u32 %v3399, 4294901760
        %v3401 = vsub.f32 %v3399, %v3400
        %v3402 = vand.u32 %v3401, 4294901760
        %3403 = vmatpush2.msra.mxu0 %v3402
        %3404 = vmatprep.subr.mxu0 0.0
        %v3405 = vand.u32 %v3067, 4294901760
        %v3406 = vsub.f32 %v3067, %v3405
        %v3407 = vand.u32 %v3406, 4294901760
        %v3408 = vsub.f32 %v3406, %v3407
        %v3409 = vand.u32 %v3408, 4294901760
        %3410 = vmatpush2.msra.mxu0 %v3409
        %3411 = vmatprep.subr.mxu0 0.0
        %v3412 = vand.u32 %v3066, 4294901760
        %v3413 = vsub.f32 %v3066, %v3412
        %v3414 = vand.u32 %v3413, 4294901760
        %v3415 = vsub.f32 %v3413, %v3414
        %v3416 = vand.u32 %v3415, 4294901760
        %3417 = vmatpush2.msra.mxu0 %v3416
        %v3418 = vand.u32 %v269, 4294901760
        %3419 = vmatprep.mubr.f32.mxu0 %v3418
        %v3420 = vand.u32 %v195, 4294901760
        %3421 = vmatmul.mubr.f32.gmra.mxu0 %v3420
        %v3422 = vpop.f32.mrf.mxu0
        %v3423 = vadd.f32 %v3191, %v3422
        %v3424 = vpop.f32.mrf.mxu0
        %3425 = vdwg.mxu0
        %3426 = vmatprep.subr.mxu0 0.0
        %v3427 = vand.u32 %v3065, 4294901760
        %v3428 = vsub.f32 %v3065, %v3427
        %3429 = vmatpush1.msra.mxu0 %v3428
        %3430 = vmatprep.subr.mxu0 0.0
        %v3431 = vand.u32 %v3064, 4294901760
        %v3432 = vsub.f32 %v3064, %v3431
        %3433 = vmatpush1.msra.mxu0 %v3432
        %3434 = vmatprep.subr.mxu0 0.0
        %v3435 = vand.u32 %v3063, 4294901760
        %v3436 = vsub.f32 %v3063, %v3435
        %3437 = vmatpush1.msra.mxu0 %v3436
        %3438 = vmatprep.subr.mxu0 0.0
        %v3439 = vand.u32 %v3062, 4294901760
        %v3440 = vsub.f32 %v3062, %v3439
        %3441 = vmatpush1.msra.mxu0 %v3440
        %3442 = vmatprep.subr.mxu0 0.0
        %v3443 = vand.u32 %v3061, 4294901760
        %v3444 = vsub.f32 %v3061, %v3443
        %3445 = vmatpush1.msra.mxu0 %v3444
        %3446 = vmatprep.subr.mxu0 0.0
        %v3447 = vand.u32 %v3060, 4294901760
        %v3448 = vsub.f32 %v3060, %v3447
        %3449 = vmatpush1.msra.mxu0 %v3448
        %3450 = vmatprep.subr.mxu0 0.0
        %v3451 = vand.u32 %v3059, 4294901760
        %v3452 = vsub.f32 %v3059, %v3451
        %3453 = vmatpush1.msra.mxu0 %v3452
        %3454 = vmatprep.subr.mxu0 0.0
        %v3455 = vand.u32 %v3058, 4294901760
        %v3456 = vsub.f32 %v3058, %v3455
        %3457 = vmatpush1.msra.mxu0 %v3456
        %3458 = vmatprep.subr.mxu0 0.0
        %v3459 = vand.u32 %v3057, 4294901760
        %v3460 = vsub.f32 %v3057, %v3459
        %3461 = vmatpush1.msra.mxu0 %v3460
        %3462 = vmatprep.subr.mxu0 0.0
        %v3463 = vand.u32 %v3056, 4294901760
        %v3464 = vsub.f32 %v3056, %v3463
        %3465 = vmatpush1.msra.mxu0 %v3464
        %3466 = vmatprep.subr.mxu0 0.0
        %v3467 = vand.u32 %v3055, 4294901760
        %v3468 = vsub.f32 %v3055, %v3467
        %3469 = vmatpush1.msra.mxu0 %v3468
        %3470 = vmatprep.subr.mxu0 0.0
        %v3471 = vand.u32 %v3054, 4294901760
        %v3472 = vsub.f32 %v3054, %v3471
        %3473 = vmatpush1.msra.mxu0 %v3472
        %3474 = vmatprep.subr.mxu0 0.0
        %v3475 = vand.u32 %v3053, 4294901760
        %v3476 = vsub.f32 %v3053, %v3475
        %3477 = vmatpush1.msra.mxu0 %v3476
        %3478 = vmatprep.subr.mxu0 0.0
        %v3479 = vand.u32 %v3052, 4294901760
        %v3480 = vsub.f32 %v3052, %v3479
        %3481 = vmatpush1.msra.mxu0 %v3480
        %3482 = vmatprep.subr.mxu0 0.0
        %v3483 = vand.u32 %v3051, 4294901760
        %v3484 = vsub.f32 %v3051, %v3483
        %3485 = vmatpush1.msra.mxu0 %v3484
        %3486 = vmatprep.subr.mxu0 0.0
        %v3487 = vand.u32 %v3050, 4294901760
        %v3488 = vsub.f32 %v3050, %v3487
        %3489 = vmatpush1.msra.mxu0 %v3488
        %3490 = vmatprep.subr.mxu0 0.0
        %v3491 = vand.u32 %v3081, 4294901760
        %v3492 = vsub.f32 %v3081, %v3491
        %3493 = vmatpush2.msra.mxu0 %v3492
        %3494 = vmatprep.subr.mxu0 0.0
        %v3495 = vand.u32 %v3080, 4294901760
        %v3496 = vsub.f32 %v3080, %v3495
        %3497 = vmatpush2.msra.mxu0 %v3496
        %3498 = vmatprep.subr.mxu0 0.0
        %v3499 = vand.u32 %v3079, 4294901760
        %v3500 = vsub.f32 %v3079, %v3499
        %3501 = vmatpush2.msra.mxu0 %v3500
        %3502 = vmatprep.subr.mxu0 0.0
        %v3503 = vand.u32 %v3078, 4294901760
        %v3504 = vsub.f32 %v3078, %v3503
        %3505 = vmatpush2.msra.mxu0 %v3504
        %3506 = vmatprep.subr.mxu0 0.0
        %v3507 = vand.u32 %v3077, 4294901760
        %v3508 = vsub.f32 %v3077, %v3507
        %3509 = vmatpush2.msra.mxu0 %v3508
        %3510 = vmatprep.subr.mxu0 0.0
        %v3511 = vand.u32 %v3076, 4294901760
        %v3512 = vsub.f32 %v3076, %v3511
        %3513 = vmatpush2.msra.mxu0 %v3512
        %3514 = vmatprep.subr.mxu0 0.0
        %v3515 = vand.u32 %v3075, 4294901760
        %v3516 = vsub.f32 %v3075, %v3515
        %3517 = vmatpush2.msra.mxu0 %v3516
        %3518 = vmatprep.subr.mxu0 0.0
        %v3519 = vand.u32 %v3074, 4294901760
        %v3520 = vsub.f32 %v3074, %v3519
        %3521 = vmatpush2.msra.mxu0 %v3520
        %3522 = vmatprep.subr.mxu0 0.0
        %v3523 = vand.u32 %v3073, 4294901760
        %v3524 = vsub.f32 %v3073, %v3523
        %3525 = vmatpush2.msra.mxu0 %v3524
        %3526 = vmatprep.subr.mxu0 0.0
        %v3527 = vand.u32 %v3072, 4294901760
        %v3528 = vsub.f32 %v3072, %v3527
        %3529 = vmatpush2.msra.mxu0 %v3528
        %3530 = vmatprep.subr.mxu0 0.0
        %v3531 = vand.u32 %v3071, 4294901760
        %v3532 = vsub.f32 %v3071, %v3531
        %3533 = vmatpush2.msra.mxu0 %v3532
        %3534 = vmatprep.subr.mxu0 0.0
        %v3535 = vand.u32 %v3070, 4294901760
        %v3536 = vsub.f32 %v3070, %v3535
        %3537 = vmatpush2.msra.mxu0 %v3536
        %3538 = vmatprep.subr.mxu0 0.0
        %v3539 = vand.u32 %v3069, 4294901760
        %v3540 = vsub.f32 %v3069, %v3539
        %3541 = vmatpush2.msra.mxu0 %v3540
        %3542 = vmatprep.subr.mxu0 0.0
        %v3543 = vand.u32 %v3068, 4294901760
        %v3544 = vsub.f32 %v3068, %v3543
        %3545 = vmatpush2.msra.mxu0 %v3544
        %3546 = vmatprep.subr.mxu0 0.0
        %v3547 = vand.u32 %v3067, 4294901760
        %v3548 = vsub.f32 %v3067, %v3547
        %3549 = vmatpush2.msra.mxu0 %v3548
        %3550 = vmatprep.subr.mxu0 0.0
        %v3551 = vand.u32 %v3066, 4294901760
        %v3552 = vsub.f32 %v3066, %v3551
        %3553 = vmatpush2.msra.mxu0 %v3552
        %v3554 = vand.u32 %v269, 4294901760
        %v3555 = vsub.f32 %v269, %v3554
        %3556 = vmatprep.mubr.f32.mxu0 %v3555
        %v3557 = vand.u32 %v195, 4294901760
        %v3558 = vsub.f32 %v195, %v3557
        %3559 = vmatmul.mubr.f32.gmra.mxu0 %v3558
        %v3560 = vpop.f32.mrf.mxu0
        %v3561 = vadd.f32 %v3423, %v3560
        %v3562 = vpop.f32.mrf.mxu0
        %3563 = vdwg.mxu0
        %3564 = vmatprep.subr.mxu0 0.0
        %v3565 = vand.u32 %v3065, 4294901760
        %3566 = vmatpush1.msra.mxu0 %v3565
        %3567 = vmatprep.subr.mxu0 0.0
        %v3568 = vand.u32 %v3064, 4294901760
        %3569 = vmatpush1.msra.mxu0 %v3568
        %3570 = vmatprep.subr.mxu0 0.0
        %v3571 = vand.u32 %v3063, 4294901760
        %3572 = vmatpush1.msra.mxu0 %v3571
        %3573 = vmatprep.subr.mxu0 0.0
        %v3574 = vand.u32 %v3062, 4294901760
        %3575 = vmatpush1.msra.mxu0 %v3574
        %3576 = vmatprep.subr.mxu0 0.0
        %v3577 = vand.u32 %v3061, 4294901760
        %3578 = vmatpush1.msra.mxu0 %v3577
        %3579 = vmatprep.subr.mxu0 0.0
        %v3580 = vand.u32 %v3060, 4294901760
        %3581 = vmatpush1.msra.mxu0 %v3580
        %3582 = vmatprep.subr.mxu0 0.0
        %v3583 = vand.u32 %v3059, 4294901760
        %3584 = vmatpush1.msra.mxu0 %v3583
        %3585 = vmatprep.subr.mxu0 0.0
        %v3586 = vand.u32 %v3058, 4294901760
        %3587 = vmatpush1.msra.mxu0 %v3586
        %3588 = vmatprep.subr.mxu0 0.0
        %v3589 = vand.u32 %v3057, 4294901760
        %3590 = vmatpush1.msra.mxu0 %v3589
        %3591 = vmatprep.subr.mxu0 0.0
        %v3592 = vand.u32 %v3056, 4294901760
        %3593 = vmatpush1.msra.mxu0 %v3592
        %3594 = vmatprep.subr.mxu0 0.0
        %v3595 = vand.u32 %v3055, 4294901760
        %3596 = vmatpush1.msra.mxu0 %v3595
        %3597 = vmatprep.subr.mxu0 0.0
        %v3598 = vand.u32 %v3054, 4294901760
        %3599 = vmatpush1.msra.mxu0 %v3598
        %3600 = vmatprep.subr.mxu0 0.0
        %v3601 = vand.u32 %v3053, 4294901760
        %3602 = vmatpush1.msra.mxu0 %v3601
        %3603 = vmatprep.subr.mxu0 0.0
        %v3604 = vand.u32 %v3052, 4294901760
        %3605 = vmatpush1.msra.mxu0 %v3604
        %3606 = vmatprep.subr.mxu0 0.0
        %v3607 = vand.u32 %v3051, 4294901760
        %3608 = vmatpush1.msra.mxu0 %v3607
        %3609 = vmatprep.subr.mxu0 0.0
        %v3610 = vand.u32 %v3050, 4294901760
        %3611 = vmatpush1.msra.mxu0 %v3610
        %3612 = vmatprep.subr.mxu0 0.0
        %v3613 = vand.u32 %v3081, 4294901760
        %3614 = vmatpush2.msra.mxu0 %v3613
        %3615 = vmatprep.subr.mxu0 0.0
        %v3616 = vand.u32 %v3080, 4294901760
        %3617 = vmatpush2.msra.mxu0 %v3616
        %3618 = vmatprep.subr.mxu0 0.0
        %v3619 = vand.u32 %v3079, 4294901760
        %3620 = vmatpush2.msra.mxu0 %v3619
        %3621 = vmatprep.subr.mxu0 0.0
        %v3622 = vand.u32 %v3078, 4294901760
        %3623 = vmatpush2.msra.mxu0 %v3622
        %3624 = vmatprep.subr.mxu0 0.0
        %v3625 = vand.u32 %v3077, 4294901760
        %3626 = vmatpush2.msra.mxu0 %v3625
        %3627 = vmatprep.subr.mxu0 0.0
        %v3628 = vand.u32 %v3076, 4294901760
        %3629 = vmatpush2.msra.mxu0 %v3628
        %3630 = vmatprep.subr.mxu0 0.0
        %v3631 = vand.u32 %v3075, 4294901760
        %3632 = vmatpush2.msra.mxu0 %v3631
        %3633 = vmatprep.subr.mxu0 0.0
        %v3634 = vand.u32 %v3074, 4294901760
        %3635 = vmatpush2.msra.mxu0 %v3634
        %3636 = vmatprep.subr.mxu0 0.0
        %v3637 = vand.u32 %v3073, 4294901760
        %3638 = vmatpush2.msra.mxu0 %v3637
        %3639 = vmatprep.subr.mxu0 0.0
        %v3640 = vand.u32 %v3072, 4294901760
        %3641 = vmatpush2.msra.mxu0 %v3640
        %3642 = vmatprep.subr.mxu0 0.0
        %v3643 = vand.u32 %v3071, 4294901760
        %3644 = vmatpush2.msra.mxu0 %v3643
        %3645 = vmatprep.subr.mxu0 0.0
        %v3646 = vand.u32 %v3070, 4294901760
        %3647 = vmatpush2.msra.mxu0 %v3646
        %3648 = vmatprep.subr.mxu0 0.0
        %v3649 = vand.u32 %v3069, 4294901760
        %3650 = vmatpush2.msra.mxu0 %v3649
        %3651 = vmatprep.subr.mxu0 0.0
        %v3652 = vand.u32 %v3068, 4294901760
        %3653 = vmatpush2.msra.mxu0 %v3652
        %3654 = vmatprep.subr.mxu0 0.0
        %v3655 = vand.u32 %v3067, 4294901760
        %3656 = vmatpush2.msra.mxu0 %v3655
        %3657 = vmatprep.subr.mxu0 0.0
        %v3658 = vand.u32 %v3066, 4294901760
        %3659 = vmatpush2.msra.mxu0 %v3658
        %v3660 = vand.u32 %v269, 4294901760
        %v3661 = vsub.f32 %v269, %v3660
        %v3662 = vand.u32 %v3661, 4294901760
        %3663 = vmatprep.mubr.f32.mxu0 %v3662
        %v3664 = vand.u32 %v195, 4294901760
        %v3665 = vsub.f32 %v195, %v3664
        %v3666 = vand.u32 %v3665, 4294901760
        %3667 = vmatmul.mubr.f32.gmra.mxu0 %v3666
        %v3668 = vpop.f32.mrf.mxu0
        %v3669 = vadd.f32 %v3561, %v3668
        %v3670 = vpop.f32.mrf.mxu0
        %3671 = vdwg.mxu0
        %3672 = vmatprep.subr.mxu0 0.0
        %v3673 = vand.u32 %v3065, 4294901760
        %v3674 = vsub.f32 %v3065, %v3673
        %v3675 = vand.u32 %v3674, 4294901760
        %3676 = vmatpush1.msra.mxu0 %v3675
        %3677 = vmatprep.subr.mxu0 0.0
        %v3678 = vand.u32 %v3064, 4294901760
        %v3679 = vsub.f32 %v3064, %v3678
        %v3680 = vand.u32 %v3679, 4294901760
        %3681 = vmatpush1.msra.mxu0 %v3680
        %3682 = vmatprep.subr.mxu0 0.0
        %v3683 = vand.u32 %v3063, 4294901760
        %v3684 = vsub.f32 %v3063, %v3683
        %v3685 = vand.u32 %v3684, 4294901760
        %3686 = vmatpush1.msra.mxu0 %v3685
        %3687 = vmatprep.subr.mxu0 0.0
        %v3688 = vand.u32 %v3062, 4294901760
        %v3689 = vsub.f32 %v3062, %v3688
        %v3690 = vand.u32 %v3689, 4294901760
        %3691 = vmatpush1.msra.mxu0 %v3690
        %3692 = vmatprep.subr.mxu0 0.0
        %v3693 = vand.u32 %v3061, 4294901760
        %v3694 = vsub.f32 %v3061, %v3693
        %v3695 = vand.u32 %v3694, 4294901760
        %3696 = vmatpush1.msra.mxu0 %v3695
        %3697 = vmatprep.subr.mxu0 0.0
        %v3698 = vand.u32 %v3060, 4294901760
        %v3699 = vsub.f32 %v3060, %v3698
        %v3700 = vand.u32 %v3699, 4294901760
        %3701 = vmatpush1.msra.mxu0 %v3700
        %3702 = vmatprep.subr.mxu0 0.0
        %v3703 = vand.u32 %v3059, 4294901760
        %v3704 = vsub.f32 %v3059, %v3703
        %v3705 = vand.u32 %v3704, 4294901760
        %3706 = vmatpush1.msra.mxu0 %v3705
        %3707 = vmatprep.subr.mxu0 0.0
        %v3708 = vand.u32 %v3058, 4294901760
        %v3709 = vsub.f32 %v3058, %v3708
        %v3710 = vand.u32 %v3709, 4294901760
        %3711 = vmatpush1.msra.mxu0 %v3710
        %3712 = vmatprep.subr.mxu0 0.0
        %v3713 = vand.u32 %v3057, 4294901760
        %v3714 = vsub.f32 %v3057, %v3713
        %v3715 = vand.u32 %v3714, 4294901760
        %3716 = vmatpush1.msra.mxu0 %v3715
        %3717 = vmatprep.subr.mxu0 0.0
        %v3718 = vand.u32 %v3056, 4294901760
        %v3719 = vsub.f32 %v3056, %v3718
        %v3720 = vand.u32 %v3719, 4294901760
        %3721 = vmatpush1.msra.mxu0 %v3720
        %3722 = vmatprep.subr.mxu0 0.0
        %v3723 = vand.u32 %v3055, 4294901760
        %v3724 = vsub.f32 %v3055, %v3723
        %v3725 = vand.u32 %v3724, 4294901760
        %3726 = vmatpush1.msra.mxu0 %v3725
        %3727 = vmatprep.subr.mxu0 0.0
        %v3728 = vand.u32 %v3054, 4294901760
        %v3729 = vsub.f32 %v3054, %v3728
        %v3730 = vand.u32 %v3729, 4294901760
        %3731 = vmatpush1.msra.mxu0 %v3730
        %3732 = vmatprep.subr.mxu0 0.0
        %v3733 = vand.u32 %v3053, 4294901760
        %v3734 = vsub.f32 %v3053, %v3733
        %v3735 = vand.u32 %v3734, 4294901760
        %3736 = vmatpush1.msra.mxu0 %v3735
        %3737 = vmatprep.subr.mxu0 0.0
        %v3738 = vand.u32 %v3052, 4294901760
        %v3739 = vsub.f32 %v3052, %v3738
        %v3740 = vand.u32 %v3739, 4294901760
        %3741 = vmatpush1.msra.mxu0 %v3740
        %3742 = vmatprep.subr.mxu0 0.0
        %v3743 = vand.u32 %v3051, 4294901760
        %v3744 = vsub.f32 %v3051, %v3743
        %v3745 = vand.u32 %v3744, 4294901760
        %3746 = vmatpush1.msra.mxu0 %v3745
        %3747 = vmatprep.subr.mxu0 0.0
        %v3748 = vand.u32 %v3050, 4294901760
        %v3749 = vsub.f32 %v3050, %v3748
        %v3750 = vand.u32 %v3749, 4294901760
        %3751 = vmatpush1.msra.mxu0 %v3750
        %3752 = vmatprep.subr.mxu0 0.0
        %v3753 = vand.u32 %v3081, 4294901760
        %v3754 = vsub.f32 %v3081, %v3753
        %v3755 = vand.u32 %v3754, 4294901760
        %3756 = vmatpush2.msra.mxu0 %v3755
        %3757 = vmatprep.subr.mxu0 0.0
        %v3758 = vand.u32 %v3080, 4294901760
        %v3759 = vsub.f32 %v3080, %v3758
        %v3760 = vand.u32 %v3759, 4294901760
        %3761 = vmatpush2.msra.mxu0 %v3760
        %3762 = vmatprep.subr.mxu0 0.0
        %v3763 = vand.u32 %v3079, 4294901760
        %v3764 = vsub.f32 %v3079, %v3763
        %v3765 = vand.u32 %v3764, 4294901760
        %3766 = vmatpush2.msra.mxu0 %v3765
        %3767 = vmatprep.subr.mxu0 0.0
        %v3768 = vand.u32 %v3078, 4294901760
        %v3769 = vsub.f32 %v3078, %v3768
        %v3770 = vand.u32 %v3769, 4294901760
        %3771 = vmatpush2.msra.mxu0 %v3770
        %3772 = vmatprep.subr.mxu0 0.0
        %v3773 = vand.u32 %v3077, 4294901760
        %v3774 = vsub.f32 %v3077, %v3773
        %v3775 = vand.u32 %v3774, 4294901760
        %3776 = vmatpush2.msra.mxu0 %v3775
        %3777 = vmatprep.subr.mxu0 0.0
        %v3778 = vand.u32 %v3076, 4294901760
        %v3779 = vsub.f32 %v3076, %v3778
        %v3780 = vand.u32 %v3779, 4294901760
        %3781 = vmatpush2.msra.mxu0 %v3780
        %3782 = vmatprep.subr.mxu0 0.0
        %v3783 = vand.u32 %v3075, 4294901760
        %v3784 = vsub.f32 %v3075, %v3783
        %v3785 = vand.u32 %v3784, 4294901760
        %3786 = vmatpush2.msra.mxu0 %v3785
        %3787 = vmatprep.subr.mxu0 0.0
        %v3788 = vand.u32 %v3074, 4294901760
        %v3789 = vsub.f32 %v3074, %v3788
        %v3790 = vand.u32 %v3789, 4294901760
        %3791 = vmatpush2.msra.mxu0 %v3790
        %3792 = vmatprep.subr.mxu0 0.0
        %v3793 = vand.u32 %v3073, 4294901760
        %v3794 = vsub.f32 %v3073, %v3793
        %v3795 = vand.u32 %v3794, 4294901760
        %3796 = vmatpush2.msra.mxu0 %v3795
        %3797 = vmatprep.subr.mxu0 0.0
        %v3798 = vand.u32 %v3072, 4294901760
        %v3799 = vsub.f32 %v3072, %v3798
        %v3800 = vand.u32 %v3799, 4294901760
        %3801 = vmatpush2.msra.mxu0 %v3800
        %3802 = vmatprep.subr.mxu0 0.0
        %v3803 = vand.u32 %v3071, 4294901760
        %v3804 = vsub.f32 %v3071, %v3803
        %v3805 = vand.u32 %v3804, 4294901760
        %3806 = vmatpush2.msra.mxu0 %v3805
        %3807 = vmatprep.subr.mxu0 0.0
        %v3808 = vand.u32 %v3070, 4294901760
        %v3809 = vsub.f32 %v3070, %v3808
        %v3810 = vand.u32 %v3809, 4294901760
        %3811 = vmatpush2.msra.mxu0 %v3810
        %3812 = vmatprep.subr.mxu0 0.0
        %v3813 = vand.u32 %v3069, 4294901760
        %v3814 = vsub.f32 %v3069, %v3813
        %v3815 = vand.u32 %v3814, 4294901760
        %3816 = vmatpush2.msra.mxu0 %v3815
        %3817 = vmatprep.subr.mxu0 0.0
        %v3818 = vand.u32 %v3068, 4294901760
        %v3819 = vsub.f32 %v3068, %v3818
        %v3820 = vand.u32 %v3819, 4294901760
        %3821 = vmatpush2.msra.mxu0 %v3820
        %3822 = vmatprep.subr.mxu0 0.0
        %v3823 = vand.u32 %v3067, 4294901760
        %v3824 = vsub.f32 %v3067, %v3823
        %v3825 = vand.u32 %v3824, 4294901760
        %3826 = vmatpush2.msra.mxu0 %v3825
        %3827 = vmatprep.subr.mxu0 0.0
        %v3828 = vand.u32 %v3066, 4294901760
        %v3829 = vsub.f32 %v3066, %v3828
        %v3830 = vand.u32 %v3829, 4294901760
        %3831 = vmatpush2.msra.mxu0 %v3830
        %v3832 = vand.u32 %v269, 4294901760
        %3833 = vmatprep.mubr.f32.mxu0 %v3832
        %v3834 = vand.u32 %v195, 4294901760
        %3835 = vmatmul.mubr.f32.gmra.mxu0 %v3834
        %v3836 = vpop.f32.mrf.mxu0
        %v3837 = vadd.f32 %v3669, %v3836
        %v3838 = vpop.f32.mrf.mxu0
        %3839 = vdwg.mxu0
        %3840 = vmatprep.subr.mxu0 0.0
        %v3841 = vand.u32 %v3065, 4294901760
        %3842 = vmatpush1.msra.mxu0 %v3841
        %3843 = vmatprep.subr.mxu0 0.0
        %v3844 = vand.u32 %v3064, 4294901760
        %3845 = vmatpush1.msra.mxu0 %v3844
        %3846 = vmatprep.subr.mxu0 0.0
        %v3847 = vand.u32 %v3063, 4294901760
        %3848 = vmatpush1.msra.mxu0 %v3847
        %3849 = vmatprep.subr.mxu0 0.0
        %v3850 = vand.u32 %v3062, 4294901760
        %3851 = vmatpush1.msra.mxu0 %v3850
        %3852 = vmatprep.subr.mxu0 0.0
        %v3853 = vand.u32 %v3061, 4294901760
        %3854 = vmatpush1.msra.mxu0 %v3853
        %3855 = vmatprep.subr.mxu0 0.0
        %v3856 = vand.u32 %v3060, 4294901760
        %3857 = vmatpush1.msra.mxu0 %v3856
        %3858 = vmatprep.subr.mxu0 0.0
        %v3859 = vand.u32 %v3059, 4294901760
        %3860 = vmatpush1.msra.mxu0 %v3859
        %3861 = vmatprep.subr.mxu0 0.0
        %v3862 = vand.u32 %v3058, 4294901760
        %3863 = vmatpush1.msra.mxu0 %v3862
        %3864 = vmatprep.subr.mxu0 0.0
        %v3865 = vand.u32 %v3057, 4294901760
        %3866 = vmatpush1.msra.mxu0 %v3865
        %3867 = vmatprep.subr.mxu0 0.0
        %v3868 = vand.u32 %v3056, 4294901760
        %3869 = vmatpush1.msra.mxu0 %v3868
        %3870 = vmatprep.subr.mxu0 0.0
        %v3871 = vand.u32 %v3055, 4294901760
        %3872 = vmatpush1.msra.mxu0 %v3871
        %3873 = vmatprep.subr.mxu0 0.0
        %v3874 = vand.u32 %v3054, 4294901760
        %3875 = vmatpush1.msra.mxu0 %v3874
        %3876 = vmatprep.subr.mxu0 0.0
        %v3877 = vand.u32 %v3053, 4294901760
        %3878 = vmatpush1.msra.mxu0 %v3877
        %3879 = vmatprep.subr.mxu0 0.0
        %v3880 = vand.u32 %v3052, 4294901760
        %3881 = vmatpush1.msra.mxu0 %v3880
        %3882 = vmatprep.subr.mxu0 0.0
        %v3883 = vand.u32 %v3051, 4294901760
        %3884 = vmatpush1.msra.mxu0 %v3883
        %3885 = vmatprep.subr.mxu0 0.0
        %v3886 = vand.u32 %v3050, 4294901760
        %3887 = vmatpush1.msra.mxu0 %v3886
        %3888 = vmatprep.subr.mxu0 0.0
        %v3889 = vand.u32 %v3081, 4294901760
        %3890 = vmatpush2.msra.mxu0 %v3889
        %3891 = vmatprep.subr.mxu0 0.0
        %v3892 = vand.u32 %v3080, 4294901760
        %3893 = vmatpush2.msra.mxu0 %v3892
        %3894 = vmatprep.subr.mxu0 0.0
        %v3895 = vand.u32 %v3079, 4294901760
        %3896 = vmatpush2.msra.mxu0 %v3895
        %3897 = vmatprep.subr.mxu0 0.0
        %v3898 = vand.u32 %v3078, 4294901760
        %3899 = vmatpush2.msra.mxu0 %v3898
        %3900 = vmatprep.subr.mxu0 0.0
        %v3901 = vand.u32 %v3077, 4294901760
        %3902 = vmatpush2.msra.mxu0 %v3901
        %3903 = vmatprep.subr.mxu0 0.0
        %v3904 = vand.u32 %v3076, 4294901760
        %3905 = vmatpush2.msra.mxu0 %v3904
        %3906 = vmatprep.subr.mxu0 0.0
        %v3907 = vand.u32 %v3075, 4294901760
        %3908 = vmatpush2.msra.mxu0 %v3907
        %3909 = vmatprep.subr.mxu0 0.0
        %v3910 = vand.u32 %v3074, 4294901760
        %3911 = vmatpush2.msra.mxu0 %v3910
        %3912 = vmatprep.subr.mxu0 0.0
        %v3913 = vand.u32 %v3073, 4294901760
        %3914 = vmatpush2.msra.mxu0 %v3913
        %3915 = vmatprep.subr.mxu0 0.0
        %v3916 = vand.u32 %v3072, 4294901760
        %3917 = vmatpush2.msra.mxu0 %v3916
        %3918 = vmatprep.subr.mxu0 0.0
        %v3919 = vand.u32 %v3071, 4294901760
        %3920 = vmatpush2.msra.mxu0 %v3919
        %3921 = vmatprep.subr.mxu0 0.0
        %v3922 = vand.u32 %v3070, 4294901760
        %3923 = vmatpush2.msra.mxu0 %v3922
        %3924 = vmatprep.subr.mxu0 0.0
        %v3925 = vand.u32 %v3069, 4294901760
        %3926 = vmatpush2.msra.mxu0 %v3925
        %3927 = vmatprep.subr.mxu0 0.0
        %v3928 = vand.u32 %v3068, 4294901760
        %3929 = vmatpush2.msra.mxu0 %v3928
        %3930 = vmatprep.subr.mxu0 0.0
        %v3931 = vand.u32 %v3067, 4294901760
        %3932 = vmatpush2.msra.mxu0 %v3931
        %3933 = vmatprep.subr.mxu0 0.0
        %v3934 = vand.u32 %v3066, 4294901760
        %3935 = vmatpush2.msra.mxu0 %v3934
        %v3936 = vand.u32 %v269, 4294901760
        %3937 = vmatprep.mubr.f32.mxu0 %v3936
        %v3938 = vand.u32 %v195, 4294901760
        %3939 = vmatmul.mubr.f32.gmra.mxu0 %v3938
        %v3940 = vpop.f32.mrf.mxu0
        %v3941 = vadd.f32 %v3837, %v3940
        %v3942 = vpop.f32.mrf.mxu0
        %3943 = vdwg.mxu0
        %s3944 = scalar_lea.vmem %s180, 12 [#allocation2]
        %3945 = vst.msk [vmem:[%s3944] sm:$0xf] %vm1133, %v3941
        %s3946 = sand.u32 %s98, 1
        %s3947 = scalar_lea.sflag [#allocation3], %s3946
        %s3948 = sand.u32 %s98, 1
        %s3949 = smul.addr %s3948, 16
        %s3950 = scalar_lea.vmem [#allocation2], %s3949
        // Predicated region
        $region29: #{tpu_custom_call.1} parent=27 // pred_check
          %p3951 = pneg %p108
        $region30: #{tpu_custom_call.1} parent=27 // pred_check_branch
          %3953 = sbr.rel (%p3951) target = $region32
        $region31: #{tpu_custom_call.1} parent=27 // pred_region
          %s3955 = ssub.s32 256, 256
          %3956 = vsyncadd %s3947, %s3955
          %s3957 = sadd.s32 %s23, %s22
          %s3958 = smul.addr %s21, 4
          %s3959 = sadd.s32 %s3957, %s3958
          %s3960 = smul.addr %s3959, 64
          %s3961 = scalar_lea.hbm %s2, %s3960
          %s3962 = sshll.u32 %s3950, 4
          %s3963 = int_to_ptr.vmem [resolvable:$true] %s3962
          %3968 = dma.vmem_to_hbm [thread:$0]  %s3963, 256, %s3961, %s3947, 64, 64, 4
        $region32: #{tpu_custom_call.1} parent=27 // pred_fallthru
          _
      $region28: #{tpu_custom_call.1} parent=5 // pred_fallthru
        _
      %p3969 = scmp.le.s32.totalorder 2, %s11
      // Predicated region
      $region33: #{tpu_custom_call.1} parent=5 // pred_check
        %p3970 = pneg %p3969
      $region34: #{tpu_custom_call.1} parent=5 // pred_check_branch
        %3972 = sbr.rel (%p3970) target = $region36
      $region35: #{tpu_custom_call.1} parent=5 // pred_region
        %s3973 = ssub.s32 %s11, 2
        // Predicated region
        $region37: #{tpu_custom_call.1} parent=35 // pred_check
          %p3974 = pneg %p114
        $region38: #{tpu_custom_call.1} parent=35 // pred_check_branch
          %3976 = sbr.rel (%p3974) target = $region40
        $region39: #{tpu_custom_call.1} parent=35 // pred_region
          %s3977 = sand.u32 %s99, 1
          %s3978 = scalar_lea.sflag [#allocation3], %s3977
          %s3979 = sand.u32 %s99, 1
          %s3980 = smul.addr %s3979, 16
          %s3981 = scalar_lea.vmem [#allocation2], %s3980
          %3982 = dma.done %s3978, 256
        $region40: #{tpu_custom_call.1} parent=35 // pred_fallthru
          _
      $region36: #{tpu_custom_call.1} parent=5 // pred_fallthru
        _
    $region6: #{tpu_custom_call.1} parent=1 // loop_footer
      %s15 = sadd.s32 1, %s11
    $region7: #{tpu_custom_call.1} parent=1 // loop_footer_branch
      %10 = sbr.rel target = $region3
    $region8: #{tpu_custom_call.1} parent=1 // loop_exit
      _
    %3983 = vsyncpa [#allocation3], 1
    %s3984 = scalar_lea.sflag [#allocation3], 1
    %3985 = vsyncpa %s3984, 1

</llo_original>
